<compile_context>
chip_gen: v5e
topology: v5e:2x2
jax: 0.10.0
libtpu: 0.0.40
codegen_flags: <defaults>
</compile_context>

<pallas_src>
import jax
import jax.numpy as jnp
import numpy as np
from jax import lax
from jax.experimental import pallas as pl
from jax.experimental.pallas import tpu as pltpu


def bottleneck_kernel(x_ref, w1_ref, s1_ref, b1_ref,
                      w2_ref, s2_ref, b2_ref,
                      w3_ref, s3_ref, b3_ref, o_ref):
    H, W, Cp = x_ref.shape
    TH, _, Op = o_ref.shape
    Wp = w1_ref.shape[1]
    f32 = jnp.float32
    bf16 = jnp.bfloat16

    t = pl.program_id(1)
    nt = pl.num_programs(1)
    r0 = pl.multiple_of(t * TH, TH)

    # ---- conv1 (1x1) + bn1 + relu as three dots (halo top / body / halo bot);
    #      the only materialized concat is Wp-wide and the conv2 border-row
    #      zeroing is folded into it --------------------------------------------
    def conv1_bn_relu(xa, rows):
        h = jnp.dot(xa.reshape(rows * W, Cp), w1_ref[...],
                    preferred_element_type=f32)
        h = jnp.maximum(h * s1_ref[...] + b1_ref[...], 0.0)
        return h.reshape(rows, W, Wp)

    x_top = x_ref[pl.ds(jnp.maximum(r0 - 1, 0), 1), :, :]
    x_bot = x_ref[pl.ds(jnp.minimum(r0 + TH, H - 1), 1), :, :]
    top_keep = (t > 0).astype(f32)          # conv2 zero-pads its input: zero the
    bot_keep = (t < nt - 1).astype(f32)     # halo rows at the image border
    h1 = jnp.concatenate(
        [conv1_bn_relu(x_top, 1) * top_keep,
         conv1_bn_relu(x_ref[pl.ds(r0, TH), :, :], TH),
         conv1_bn_relu(x_bot, 1) * bot_keep], axis=0)        # (TH+2, W, Wp) f32

    # ---- conv2 (3x3, pad=1) + bn2 + relu : ONE matmul with K = 9*Wp -----------
    # kx shifts hoisted out of the ky loop (2 rolls + 2 selects total).
    col = lax.broadcasted_iota(jnp.int32, (1, W, 1), 1)
    left_full = jnp.where(col != 0, pltpu.roll(h1, 1, 1), 0.0)          # x-1 tap
    right_full = jnp.where(col != W - 1, pltpu.roll(h1, W - 1, 1), 0.0)  # x+1 tap
    # cast BEFORE the concat so the materialized taps buffer is bf16
    h1_b = h1.astype(bf16)
    left_b = left_full.astype(bf16)
    right_b = right_full.astype(bf16)
    # K-axis order: (ky, kx, i) with kx in [x-1, x, x+1] — matches the wrapper's
    # (KH, KW, I, O) -> (9*Wp, Wp) reshape of w2.
    taps = jnp.concatenate(
        [p[ky:ky + TH] for ky in range(3) for p in (left_b, h1_b, right_b)],
        axis=-1)                                             # (TH, W, 9*Wp) bf16
    h2 = jnp.dot(taps.reshape(TH * W, 9 * Wp), w2_ref[...],
                 preferred_element_type=f32)
    h2 = jnp.maximum(h2 * s2_ref[...] + b2_ref[...], 0.0).astype(bf16)

    # ---- conv3 (1x1) + bn3 + residual add + relu ------------------------------
    h3 = jnp.dot(h2, w3_ref[...], preferred_element_type=f32)
    h3 = h3 * s3_ref[...] + b3_ref[...]
    # re-read identity from the VMEM-resident x ref (short live range), Cp == Op
    identity = x_ref[pl.ds(r0, TH), :, :].astype(f32).reshape(TH * W, Cp)
    out = jnp.maximum(h3 + identity, 0.0)
    o_ref[...] = out.reshape(TH, W, Op).astype(o_ref.dtype)


def _round_up(v, m):
    return (v + m - 1) // m * m


def _fold_bn(g, b, m, v, c_pad, eps=1e-5):
    s = g / jnp.sqrt(v + eps)
    bias = b - m * s
    s = jnp.pad(s, (0, c_pad - s.shape[0]))
    bias = jnp.pad(bias, (0, c_pad - bias.shape[0]))
    return (s.reshape(1, c_pad).astype(jnp.float32),
            bias.reshape(1, c_pad).astype(jnp.float32))


def _vmem_budget(H, W, Cp, Wp, Op, TH):
    """Rough per-grid-step VMEM bytes (double-buffered blocks + intermediates)."""
    bf, f = 2, 4
    blocks = 2 * H * W * Cp * bf + 2 * TH * W * Op * bf
    weights = 2 * (Cp * Wp + 9 * Wp * Wp + Wp * Op) * bf + 2 * (4 * Wp + 2 * Op) * f
    inter = ((TH + 2) * W * Wp * (3 * f + 3 * bf)    # h1/left/right f32 + bf16
             + TH * W * 9 * Wp * bf                  # taps
             + TH * W * (Wp + Op + Cp) * f)          # h2 acc, h3/out, identity
    est = blocks + weights + inter
    # Cap at 64 MiB so a tile that fits v5e/v6e (128 MiB) doesn't OOM v7x; for
    # very large H / channels reduce row_tile instead of raising this cap.
    return int(min(max(2 * est, 32 * 2 ** 20), 64 * 2 ** 20))


def bottleneck_forward(x_nchw, cw1, bn1, cw2, bn2, cw3, bn3, *, row_tile=32):
    """Bottleneck forward (inference BN).  Conv weights in PyTorch OIHW layout."""
    N, Cin, H, W = x_nchw.shape
    width = cw1.shape[0]
    Cout = cw3.shape[0]
    assert Cin == Cout, "downsample=None requires inplanes == planes*expansion"
    assert W % 8 == 0, "TODO(synk): generic W would need sublane padding"
    # NOTE: when H % row_tile != 0 we fall back to TH = H (single row tile per
    # image) — correct but disables row tiling; shrink row_tile for huge H.
    TH = row_tile if (row_tile <= H and H % row_tile == 0) else H
    LANE = 128
    Cp = _round_up(Cin, LANE)
    Wp = _round_up(width, LANE)
    Op = _round_up(Cout, LANE)

    # ---- parameter / layout prep (hoist to model init in a real network) ----
    x = jnp.transpose(x_nchw, (0, 2, 3, 1))                     # NCHW -> NHWC
    x = jnp.pad(x, ((0, 0), (0, 0), (0, 0), (0, Cp - Cin))).astype(jnp.bfloat16)

    w1 = jnp.transpose(cw1[:, :, 0, 0], (1, 0))                 # (Cin, width)
    w1 = jnp.pad(w1, ((0, Cp - Cin), (0, Wp - width))).astype(jnp.bfloat16)
    w2 = jnp.transpose(cw2, (2, 3, 1, 0))                       # (KH, KW, I, O)
    w2 = jnp.pad(w2, ((0, 0), (0, 0), (0, Wp - width), (0, Wp - width)))
    w2 = w2.reshape(9 * Wp, Wp).astype(jnp.bfloat16)            # (ky,kx,i)-major K
    w3 = jnp.transpose(cw3[:, :, 0, 0], (1, 0))                 # (width, Cout)
    w3 = jnp.pad(w3, ((0, Wp - width), (0, Op - Cout))).astype(jnp.bfloat16)

    s1, b1 = _fold_bn(*bn1, Wp)
    s2, b2 = _fold_bn(*bn2, Wp)
    s3, b3 = _fold_bn(*bn3, Op)

    out = pl.pallas_call(
        bottleneck_kernel,
        out_shape=jax.ShapeDtypeStruct((N, H, W, Op), jnp.bfloat16),
        grid=(N, H // TH),
        in_specs=[
            pl.BlockSpec((None, H, W, Cp), lambda n, t: (n, 0, 0, 0)),
            pl.BlockSpec((Cp, Wp), lambda n, t: (0, 0)),
            pl.BlockSpec((1, Wp), lambda n, t: (0, 0)),
            pl.BlockSpec((1, Wp), lambda n, t: (0, 0)),
            pl.BlockSpec((9 * Wp, Wp), lambda n, t: (0, 0)),
            pl.BlockSpec((1, Wp), lambda n, t: (0, 0)),
            pl.BlockSpec((1, Wp), lambda n, t: (0, 0)),
            pl.BlockSpec((Wp, Op), lambda n, t: (0, 0)),
            pl.BlockSpec((1, Op), lambda n, t: (0, 0)),
            pl.BlockSpec((1, Op), lambda n, t: (0, 0)),
        ],
        out_specs=pl.BlockSpec((None, TH, W, Op), lambda n, t: (n, t, 0, 0)),
        compiler_params=pltpu.CompilerParams(
            dimension_semantics=("parallel", "parallel"),
            vmem_limit_bytes=_vmem_budget(H, W, Cp, Wp, Op, TH)),
    )(x, w1, s1, b1, w2, s2, b2, w3, s3, b3)

    # TODO(synk): return NHWC bf16 directly in a real network (no slice/transpose).
    out = out[..., :Cout].astype(jnp.float32)
    return jnp.transpose(out, (0, 3, 1, 2))                     # NHWC -> NCHW


# -------- reference (PyTorch semantics, same bf16-storage/fp32-accum policy) ----
def _bn_infer(x, g, b, m, v, eps=1e-5):
    sh = (1, -1, 1, 1)
    return ((x - m.reshape(sh)) / jnp.sqrt(v.reshape(sh) + eps)
            * g.reshape(sh) + b.reshape(sh))


def _conv_bf16(x, w, pad=0):
    return lax.conv_general_dilated(
        x.astype(jnp.bfloat16), w.astype(jnp.bfloat16),
        window_strides=(1, 1), padding=[(pad, pad), (pad, pad)],
        dimension_numbers=("NCHW", "OIHW", "NCHW"),
        preferred_element_type=jnp.float32)


def ref_forward(x, cw1, bn1, cw2, bn2, cw3, bn3):
    out = jax.nn.relu(_bn_infer(_conv_bf16(x, cw1), *bn1))
    out = jax.nn.relu(_bn_infer(_conv_bf16(out, cw2, pad=1), *bn2))
    out = _bn_infer(_conv_bf16(out, cw3), *bn3)
    identity = x.astype(jnp.bfloat16).astype(jnp.float32)
    return jax.nn.relu(out + identity)


if __name__ == "__main__":
    # Bottleneck(inplanes=64, planes=16): width=16, out=planes*4=64 (== inplanes)
    inplanes, planes = 64, 16
    width = int(planes * (64 / 64.0)) * 1
    cout = planes * 4
    N, H, W = 2, 16, 16

    key = jax.random.PRNGKey(0)
    ks = jax.random.split(key, 7)

    x = jax.random.normal(ks[0], (N, inplanes, H, W), jnp.float32)

    cw1 = jax.random.normal(ks[1], (width, inplanes, 1, 1), jnp.float32) / np.sqrt(inplanes)
    cw2 = jax.random.normal(ks[2], (width, width, 3, 3), jnp.float32) / np.sqrt(9 * width)
    cw3 = jax.random.normal(ks[3], (cout, width, 1, 1), jnp.float32) / np.sqrt(width)

    def bn_params(k, c):
        k1, k2, k3, k4 = jax.random.split(k, 4)
        g = 1.0 + 0.1 * jax.random.normal(k1, (c,), jnp.float32)
        b = 0.1 * jax.random.normal(k2, (c,), jnp.float32)
        m = 0.1 * jax.random.normal(k3, (c,), jnp.float32)
        v = jax.random.uniform(k4, (c,), jnp.float32, 0.5, 1.5)
        return g, b, m, v

    bn1 = bn_params(ks[4], width)
    bn2 = bn_params(ks[5], width)
    bn3 = bn_params(ks[6], cout)

    out = jax.block_until_ready(
        bottleneck_forward(x, cw1, bn1, cw2, bn2, cw3, bn3))
    ref = jax.block_until_ready(ref_forward(x, cw1, bn1, cw2, bn2, cw3, bn3))

    np.testing.assert_allclose(np.asarray(out), np.asarray(ref),
                               rtol=2e-2, atol=2e-2)
    print("KERNEL_OK")
</pallas_src>

<mosaic_0001>
module attributes {stable_mosaic.version = 11 : i64} {
  func.func @bottleneck_kernel(%arg0: i32, %arg1: i32, %arg2: memref<1x16x16x128xbf16, #tpu.memory_space<vmem>>, %arg3: memref<128x128xbf16, #tpu.memory_space<vmem>>, %arg4: memref<1x128xf32, #tpu.memory_space<vmem>>, %arg5: memref<1x128xf32, #tpu.memory_space<vmem>>, %arg6: memref<1152x128xbf16, #tpu.memory_space<vmem>>, %arg7: memref<1x128xf32, #tpu.memory_space<vmem>>, %arg8: memref<1x128xf32, #tpu.memory_space<vmem>>, %arg9: memref<128x128xbf16, #tpu.memory_space<vmem>>, %arg10: memref<1x128xf32, #tpu.memory_space<vmem>>, %arg11: memref<1x128xf32, #tpu.memory_space<vmem>>, %arg12: memref<1x16x16x128xbf16, #tpu.memory_space<vmem>>) attributes {dimension_semantics = [#tpu.dimension_semantics<parallel>, #tpu.dimension_semantics<parallel>], iteration_bounds = array<i64: 2, 1>, scalar_prefetch = 0 : i64, scratch_operands = 0 : i64, tpu.core_type = #tpu.core_type<tc>, window_params = [{transform_indices = @transform_0, window_bounds = array<i64: 1, 16, 16, 128>}, {pipeline_mode = #tpu.pipeline_mode<synchronous>, transform_indices = @transform_1, window_bounds = array<i64: 128, 128>}, {pipeline_mode = #tpu.pipeline_mode<synchronous>, transform_indices = @transform_2, window_bounds = array<i64: 1, 128>}, {pipeline_mode = #tpu.pipeline_mode<synchronous>, transform_indices = @transform_3, window_bounds = array<i64: 1, 128>}, {pipeline_mode = #tpu.pipeline_mode<synchronous>, transform_indices = @transform_4, window_bounds = array<i64: 1152, 128>}, {pipeline_mode = #tpu.pipeline_mode<synchronous>, transform_indices = @transform_5, window_bounds = array<i64: 1, 128>}, {pipeline_mode = #tpu.pipeline_mode<synchronous>, transform_indices = @transform_6, window_bounds = array<i64: 1, 128>}, {pipeline_mode = #tpu.pipeline_mode<synchronous>, transform_indices = @transform_7, window_bounds = array<i64: 128, 128>}, {pipeline_mode = #tpu.pipeline_mode<synchronous>, transform_indices = @transform_8, window_bounds = array<i64: 1, 128>}, {pipeline_mode = #tpu.pipeline_mode<synchronous>, transform_indices = @transform_9, window_bounds = array<i64: 1, 128>}, {transform_indices = @transform_10, window_bounds = array<i64: 1, 16, 16, 128>}]} {
    %c16_i32 = arith.constant 16 : i32
    %0 = arith.muli %arg1, %c16_i32 : i32
    %1 = tpu.assume_multiple %0, 16 : i32
    %c1_i32 = arith.constant 1 : i32
    %2 = arith.subi %1, %c1_i32 : i32
    %c0_i32 = arith.constant 0 : i32
    %3 = arith.maxsi %2, %c0_i32 : i32
    %c0 = arith.constant 0 : index
    %4 = arith.index_cast %3 : i32 to index
    %c0_0 = arith.constant 0 : index
    %c0_1 = arith.constant 0 : index
    %5 = vector.load %arg2[%c0, %4, %c0_0, %c0_1] : memref<1x16x16x128xbf16, #tpu.memory_space<vmem>>, vector<1x1x16x128xbf16>
    %6 = vector.shape_cast %5 : vector<1x1x16x128xbf16> to vector<1x16x128xbf16>
    %c16_i32_2 = arith.constant 16 : i32
    %7 = arith.addi %1, %c16_i32_2 : i32
    %c15_i32 = arith.constant 15 : i32
    %8 = arith.minsi %7, %c15_i32 : i32
    %c0_3 = arith.constant 0 : index
    %9 = arith.index_cast %8 : i32 to index
    %c0_4 = arith.constant 0 : index
    %c0_5 = arith.constant 0 : index
    %10 = vector.load %arg2[%c0_3, %9, %c0_4, %c0_5] : memref<1x16x16x128xbf16, #tpu.memory_space<vmem>>, vector<1x1x16x128xbf16>
    %11 = vector.shape_cast %10 : vector<1x1x16x128xbf16> to vector<1x16x128xbf16>
    %c0_i32_6 = arith.constant 0 : i32
    %12 = arith.cmpi sgt, %arg1, %c0_i32_6 : i32
    %13 = arith.extui %12 : i1 to i32
    %14 = arith.sitofp %13 : i32 to f32
    %c0_i32_7 = arith.constant 0 : i32
    %15 = arith.cmpi slt, %arg1, %c0_i32_7 : i32
    %16 = arith.extui %15 : i1 to i32
    %17 = arith.sitofp %16 : i32 to f32
    %18 = vector.shape_cast %6 : vector<1x16x128xbf16> to vector<16x128xbf16>
    %c0_8 = arith.constant 0 : index
    %c0_9 = arith.constant 0 : index
    %19 = vector.load %arg3[%c0_8, %c0_9] : memref<128x128xbf16, #tpu.memory_space<vmem>>, vector<128x128xbf16>
    %cst = arith.constant dense<0.000000e+00> : vector<16x128xf32>
    %20 = tpu.matmul %18, %19, %cst {dimension_numbers = #tpu.dot_dimension_numbers<[1], [0], [0], [1], [0, 0, 1, 1], [], []>} : vector<16x128xbf16>, vector<128x128xbf16>, vector<16x128xf32> -> vector<16x128xf32>
    %c0_10 = arith.constant 0 : index
    %c0_11 = arith.constant 0 : index
    %21 = vector.load %arg4[%c0_10, %c0_11] : memref<1x128xf32, #tpu.memory_space<vmem>>, vector<1x128xf32>
    %22 = vector.broadcast %21 : vector<1x128xf32> to vector<16x128xf32>
    %23 = arith.mulf %20, %22 : vector<16x128xf32>
    %c0_12 = arith.constant 0 : index
    %c0_13 = arith.constant 0 : index
    %24 = vector.load %arg5[%c0_12, %c0_13] : memref<1x128xf32, #tpu.memory_space<vmem>>, vector<1x128xf32>
    %25 = vector.broadcast %24 : vector<1x128xf32> to vector<16x128xf32>
    %26 = arith.addf %23, %25 : vector<16x128xf32>
    %cst_14 = arith.constant 0.000000e+00 : f32
    %27 = vector.broadcast %cst_14 : f32 to vector<16x128xf32>
    %28 = arith.maximumf %26, %27 : vector<16x128xf32>
    %29 = vector.shape_cast %28 : vector<16x128xf32> to vector<1x16x128xf32>
    %30 = vector.broadcast %14 : f32 to vector<1x16x128xf32>
    %31 = arith.mulf %29, %30 : vector<1x16x128xf32>
    %c0_15 = arith.constant 0 : index
    %32 = arith.index_cast %1 : i32 to index
    %c0_16 = arith.constant 0 : index
    %c0_17 = arith.constant 0 : index
    %33 = vector.load %arg2[%c0_15, %32, %c0_16, %c0_17] : memref<1x16x16x128xbf16, #tpu.memory_space<vmem>>, vector<1x16x16x128xbf16>
    %34 = vector.shape_cast %33 : vector<1x16x16x128xbf16> to vector<16x16x128xbf16>
    %35 = vector.shape_cast %34 : vector<16x16x128xbf16> to vector<256x128xbf16>
    %c0_18 = arith.constant 0 : index
    %c0_19 = arith.constant 0 : index
    %36 = vector.load %arg3[%c0_18, %c0_19] : memref<128x128xbf16, #tpu.memory_space<vmem>>, vector<128x128xbf16>
    %cst_20 = arith.constant dense<0.000000e+00> : vector<256x128xf32>
    %37 = tpu.matmul %35, %36, %cst_20 {dimension_numbers = #tpu.dot_dimension_numbers<[1], [0], [0], [1], [0, 0, 1, 1], [], []>} : vector<256x128xbf16>, vector<128x128xbf16>, vector<256x128xf32> -> vector<256x128xf32>
    %c0_21 = arith.constant 0 : index
    %c0_22 = arith.constant 0 : index
    %38 = vector.load %arg4[%c0_21, %c0_22] : memref<1x128xf32, #tpu.memory_space<vmem>>, vector<1x128xf32>
    %39 = vector.broadcast %38 : vector<1x128xf32> to vector<256x128xf32>
    %40 = arith.mulf %37, %39 : vector<256x128xf32>
    %c0_23 = arith.constant 0 : index
    %c0_24 = arith.constant 0 : index
    %41 = vector.load %arg5[%c0_23, %c0_24] : memref<1x128xf32, #tpu.memory_space<vmem>>, vector<1x128xf32>
    %42 = vector.broadcast %41 : vector<1x128xf32> to vector<256x128xf32>
    %43 = arith.addf %40, %42 : vector<256x128xf32>
    %cst_25 = arith.constant 0.000000e+00 : f32
    %44 = vector.broadcast %cst_25 : f32 to vector<256x128xf32>
    %45 = arith.maximumf %43, %44 : vector<256x128xf32>
    %46 = vector.shape_cast %45 : vector<256x128xf32> to vector<16x16x128xf32>
    %47 = vector.shape_cast %11 : vector<1x16x128xbf16> to vector<16x128xbf16>
    %c0_26 = arith.constant 0 : index
    %c0_27 = arith.constant 0 : index
    %48 = vector.load %arg3[%c0_26, %c0_27] : memref<128x128xbf16, #tpu.memory_space<vmem>>, vector<128x128xbf16>
    %cst_28 = arith.constant dense<0.000000e+00> : vector<16x128xf32>
    %49 = tpu.matmul %47, %48, %cst_28 {dimension_numbers = #tpu.dot_dimension_numbers<[1], [0], [0], [1], [0, 0, 1, 1], [], []>} : vector<16x128xbf16>, vector<128x128xbf16>, vector<16x128xf32> -> vector<16x128xf32>
    %c0_29 = arith.constant 0 : index
    %c0_30 = arith.constant 0 : index
    %50 = vector.load %arg4[%c0_29, %c0_30] : memref<1x128xf32, #tpu.memory_space<vmem>>, vector<1x128xf32>
    %51 = vector.broadcast %50 : vector<1x128xf32> to vector<16x128xf32>
    %52 = arith.mulf %49, %51 : vector<16x128xf32>
    %c0_31 = arith.constant 0 : index
    %c0_32 = arith.constant 0 : index
    %53 = vector.load %arg5[%c0_31, %c0_32] : memref<1x128xf32, #tpu.memory_space<vmem>>, vector<1x128xf32>
    %54 = vector.broadcast %53 : vector<1x128xf32> to vector<16x128xf32>
    %55 = arith.addf %52, %54 : vector<16x128xf32>
    %cst_33 = arith.constant 0.000000e+00 : f32
    %56 = vector.broadcast %cst_33 : f32 to vector<16x128xf32>
    %57 = arith.maximumf %55, %56 : vector<16x128xf32>
    %58 = vector.shape_cast %57 : vector<16x128xf32> to vector<1x16x128xf32>
    %59 = vector.broadcast %17 : f32 to vector<1x16x128xf32>
    %60 = arith.mulf %58, %59 : vector<1x16x128xf32>
    %61 = tpu.concatenate %31, %46, %60 in 0 : vector<1x16x128xf32>, vector<16x16x128xf32>, vector<1x16x128xf32> -> vector<18x16x128xf32>
    %62 = tpu.iota {dimensions = array<i32: 1>} : vector<1x16x1xi32>
    %c0_i32_34 = arith.constant 0 : i32
    %63 = vector.broadcast %c0_i32_34 : i32 to vector<1x16x1xi32>
    %64 = arith.cmpi ne, %62, %63 : vector<1x16x1xi32>
    %c1_i32_35 = arith.constant 1 : i32
    %65 = tpu.dynamic_rotate %61 by %c1_i32_35 dim 1 : vector<18x16x128xf32>, i32 -> vector<18x16x128xf32>
    %cst_36 = arith.constant 0.000000e+00 : f32
    %66 = vector.shape_cast %64 : vector<1x16x1xi1> to vector<1x16x1xi1>
    %67 = vector.broadcast %66 : vector<1x16x1xi1> to vector<18x16x128xi1>
    %68 = vector.broadcast %cst_36 : f32 to vector<18x16x128xf32>
    %69 = arith.select %67, %65, %68 : vector<18x16x128xi1>, vector<18x16x128xf32>
    %c15_i32_37 = arith.constant 15 : i32
    %70 = vector.broadcast %c15_i32_37 : i32 to vector<1x16x1xi32>
    %71 = arith.cmpi ne, %62, %70 : vector<1x16x1xi32>
    %c15_i32_38 = arith.constant 15 : i32
    %72 = tpu.dynamic_rotate %61 by %c15_i32_38 dim 1 : vector<18x16x128xf32>, i32 -> vector<18x16x128xf32>
    %cst_39 = arith.constant 0.000000e+00 : f32
    %73 = vector.shape_cast %71 : vector<1x16x1xi1> to vector<1x16x1xi1>
    %74 = vector.broadcast %73 : vector<1x16x1xi1> to vector<18x16x128xi1>
    %75 = vector.broadcast %cst_39 : f32 to vector<18x16x128xf32>
    %76 = arith.select %74, %72, %75 : vector<18x16x128xi1>, vector<18x16x128xf32>
    %77 = arith.truncf %61 : vector<18x16x128xf32> to vector<18x16x128xbf16>
    %78 = arith.truncf %69 : vector<18x16x128xf32> to vector<18x16x128xbf16>
    %79 = arith.truncf %76 : vector<18x16x128xf32> to vector<18x16x128xbf16>
    %80 = vector.extract_strided_slice %78 {offsets = [0, 0, 0], sizes = [16, 16, 128], strides = [1, 1, 1]} : vector<18x16x128xbf16> to vector<16x16x128xbf16>
    %81 = vector.extract_strided_slice %77 {offsets = [0, 0, 0], sizes = [16, 16, 128], strides = [1, 1, 1]} : vector<18x16x128xbf16> to vector<16x16x128xbf16>
    %82 = vector.extract_strided_slice %79 {offsets = [0, 0, 0], sizes = [16, 16, 128], strides = [1, 1, 1]} : vector<18x16x128xbf16> to vector<16x16x128xbf16>
    %83 = vector.extract_strided_slice %78 {offsets = [1, 0, 0], sizes = [16, 16, 128], strides = [1, 1, 1]} : vector<18x16x128xbf16> to vector<16x16x128xbf16>
    %84 = vector.extract_strided_slice %77 {offsets = [1, 0, 0], sizes = [16, 16, 128], strides = [1, 1, 1]} : vector<18x16x128xbf16> to vector<16x16x128xbf16>
    %85 = vector.extract_strided_slice %79 {offsets = [1, 0, 0], sizes = [16, 16, 128], strides = [1, 1, 1]} : vector<18x16x128xbf16> to vector<16x16x128xbf16>
    %86 = vector.extract_strided_slice %78 {offsets = [2, 0, 0], sizes = [16, 16, 128], strides = [1, 1, 1]} : vector<18x16x128xbf16> to vector<16x16x128xbf16>
    %87 = vector.extract_strided_slice %77 {offsets = [2, 0, 0], sizes = [16, 16, 128], strides = [1, 1, 1]} : vector<18x16x128xbf16> to vector<16x16x128xbf16>
    %88 = vector.extract_strided_slice %79 {offsets = [2, 0, 0], sizes = [16, 16, 128], strides = [1, 1, 1]} : vector<18x16x128xbf16> to vector<16x16x128xbf16>
    %89 = tpu.concatenate %80, %81, %82, %83, %84, %85, %86, %87, %88 in 2 : vector<16x16x128xbf16>, vector<16x16x128xbf16>, vector<16x16x128xbf16>, vector<16x16x128xbf16>, vector<16x16x128xbf16>, vector<16x16x128xbf16>, vector<16x16x128xbf16>, vector<16x16x128xbf16>, vector<16x16x128xbf16> -> vector<16x16x1152xbf16>
    %90 = vector.shape_cast %89 : vector<16x16x1152xbf16> to vector<256x1152xbf16>
    %c0_40 = arith.constant 0 : index
    %c0_41 = arith.constant 0 : index
    %91 = vector.load %arg6[%c0_40, %c0_41] : memref<1152x128xbf16, #tpu.memory_space<vmem>>, vector<1152x128xbf16>
    %cst_42 = arith.constant dense<0.000000e+00> : vector<256x128xf32>
    %92 = tpu.matmul %90, %91, %cst_42 {dimension_numbers = #tpu.dot_dimension_numbers<[1], [0], [0], [1], [0, 0, 1, 1], [], []>} : vector<256x1152xbf16>, vector<1152x128xbf16>, vector<256x128xf32> -> vector<256x128xf32>
    %c0_43 = arith.constant 0 : index
    %c0_44 = arith.constant 0 : index
    %93 = vector.load %arg7[%c0_43, %c0_44] : memref<1x128xf32, #tpu.memory_space<vmem>>, vector<1x128xf32>
    %94 = vector.broadcast %93 : vector<1x128xf32> to vector<256x128xf32>
    %95 = arith.mulf %92, %94 : vector<256x128xf32>
    %c0_45 = arith.constant 0 : index
    %c0_46 = arith.constant 0 : index
    %96 = vector.load %arg8[%c0_45, %c0_46] : memref<1x128xf32, #tpu.memory_space<vmem>>, vector<1x128xf32>
    %97 = vector.broadcast %96 : vector<1x128xf32> to vector<256x128xf32>
    %98 = arith.addf %95, %97 : vector<256x128xf32>
    %cst_47 = arith.constant 0.000000e+00 : f32
    %99 = vector.broadcast %cst_47 : f32 to vector<256x128xf32>
    %100 = arith.maximumf %98, %99 : vector<256x128xf32>
    %101 = arith.truncf %100 : vector<256x128xf32> to vector<256x128xbf16>
    %c0_48 = arith.constant 0 : index
    %c0_49 = arith.constant 0 : index
    %102 = vector.load %arg9[%c0_48, %c0_49] : memref<128x128xbf16, #tpu.memory_space<vmem>>, vector<128x128xbf16>
    %cst_50 = arith.constant dense<0.000000e+00> : vector<256x128xf32>
    %103 = tpu.matmul %101, %102, %cst_50 {dimension_numbers = #tpu.dot_dimension_numbers<[1], [0], [0], [1], [0, 0, 1, 1], [], []>} : vector<256x128xbf16>, vector<128x128xbf16>, vector<256x128xf32> -> vector<256x128xf32>
    %c0_51 = arith.constant 0 : index
    %c0_52 = arith.constant 0 : index
    %104 = vector.load %arg10[%c0_51, %c0_52] : memref<1x128xf32, #tpu.memory_space<vmem>>, vector<1x128xf32>
    %105 = vector.broadcast %104 : vector<1x128xf32> to vector<256x128xf32>
    %106 = arith.mulf %103, %105 : vector<256x128xf32>
    %c0_53 = arith.constant 0 : index
    %c0_54 = arith.constant 0 : index
    %107 = vector.load %arg11[%c0_53, %c0_54] : memref<1x128xf32, #tpu.memory_space<vmem>>, vector<1x128xf32>
    %108 = vector.broadcast %107 : vector<1x128xf32> to vector<256x128xf32>
    %109 = arith.addf %106, %108 : vector<256x128xf32>
    %c0_55 = arith.constant 0 : index
    %110 = arith.index_cast %1 : i32 to index
    %c0_56 = arith.constant 0 : index
    %c0_57 = arith.constant 0 : index
    %111 = vector.load %arg2[%c0_55, %110, %c0_56, %c0_57] : memref<1x16x16x128xbf16, #tpu.memory_space<vmem>>, vector<1x16x16x128xbf16>
    %112 = vector.shape_cast %111 : vector<1x16x16x128xbf16> to vector<16x16x128xbf16>
    %113 = arith.extf %112 : vector<16x16x128xbf16> to vector<16x16x128xf32>
    %114 = vector.shape_cast %113 : vector<16x16x128xf32> to vector<256x128xf32>
    %115 = arith.addf %109, %114 : vector<256x128xf32>
    %cst_58 = arith.constant 0.000000e+00 : f32
    %116 = vector.broadcast %cst_58 : f32 to vector<256x128xf32>
    %117 = arith.maximumf %115, %116 : vector<256x128xf32>
    %118 = vector.shape_cast %117 : vector<256x128xf32> to vector<16x16x128xf32>
    %119 = arith.truncf %118 : vector<16x16x128xf32> to vector<16x16x128xbf16>
    %c0_59 = arith.constant 0 : index
    %c0_60 = arith.constant 0 : index
    %c0_61 = arith.constant 0 : index
    %c0_62 = arith.constant 0 : index
    %120 = vector.load %arg12[%c0_59, %c0_60, %c0_61, %c0_62] : memref<1x16x16x128xbf16, #tpu.memory_space<vmem>>, vector<1x16x16x128xbf16>
    %121 = vector.shape_cast %120 : vector<1x16x16x128xbf16> to vector<16x16x128xbf16>
    %122 = vector.shape_cast %119 : vector<16x16x128xbf16> to vector<1x16x16x128xbf16>
    tpu.vector_store %arg12[%c0_59, %c0_60, %c0_61, %c0_62], %122 {strides = array<i32>} : memref<1x16x16x128xbf16, #tpu.memory_space<vmem>>, vector<1x16x16x128xbf16>,
    return
  }
  func.func @transform_0(%arg0: i32, %arg1: i32) -> (i32, i32, i32, i32) {
    %c0_i32 = arith.constant 0 : i32
    %c0_i32_0 = arith.constant 0 : i32
    %c0_i32_1 = arith.constant 0 : i32
    %c0_i32_2 = arith.constant 0 : i32
    return %arg0, %c0_i32, %c0_i32_0, %c0_i32_1 : i32, i32, i32, i32
  }
  func.func @transform_1(%arg0: i32, %arg1: i32) -> (i32, i32) {
    %c0_i32 = arith.constant 0 : i32
    %c0_i32_0 = arith.constant 0 : i32
    %c0_i32_1 = arith.constant 0 : i32
    return %c0_i32, %c0_i32_0 : i32, i32
  }
  func.func @transform_2(%arg0: i32, %arg1: i32) -> (i32, i32) {
    %c0_i32 = arith.constant 0 : i32
    %c0_i32_0 = arith.constant 0 : i32
    %c0_i32_1 = arith.constant 0 : i32
    return %c0_i32, %c0_i32_0 : i32, i32
  }
  func.func @transform_3(%arg0: i32, %arg1: i32) -> (i32, i32) {
    %c0_i32 = arith.constant 0 : i32
    %c0_i32_0 = arith.constant 0 : i32
    %c0_i32_1 = arith.constant 0 : i32
    return %c0_i32, %c0_i32_0 : i32, i32
  }
  func.func @transform_4(%arg0: i32, %arg1: i32) -> (i32, i32) {
    %c0_i32 = arith.constant 0 : i32
    %c0_i32_0 = arith.constant 0 : i32
    %c0_i32_1 = arith.constant 0 : i32
    return %c0_i32, %c0_i32_0 : i32, i32
  }
  func.func @transform_5(%arg0: i32, %arg1: i32) -> (i32, i32) {
    %c0_i32 = arith.constant 0 : i32
    %c0_i32_0 = arith.constant 0 : i32
    %c0_i32_1 = arith.constant 0 : i32
    return %c0_i32, %c0_i32_0 : i32, i32
  }
  func.func @transform_6(%arg0: i32, %arg1: i32) -> (i32, i32) {
    %c0_i32 = arith.constant 0 : i32
    %c0_i32_0 = arith.constant 0 : i32
    %c0_i32_1 = arith.constant 0 : i32
    return %c0_i32, %c0_i32_0 : i32, i32
  }
  func.func @transform_7(%arg0: i32, %arg1: i32) -> (i32, i32) {
    %c0_i32 = arith.constant 0 : i32
    %c0_i32_0 = arith.constant 0 : i32
    %c0_i32_1 = arith.constant 0 : i32
    return %c0_i32, %c0_i32_0 : i32, i32
  }
  func.func @transform_8(%arg0: i32, %arg1: i32) -> (i32, i32) {
    %c0_i32 = arith.constant 0 : i32
    %c0_i32_0 = arith.constant 0 : i32
    %c0_i32_1 = arith.constant 0 : i32
    return %c0_i32, %c0_i32_0 : i32, i32
  }
  func.func @transform_9(%arg0: i32, %arg1: i32) -> (i32, i32) {
    %c0_i32 = arith.constant 0 : i32
    %c0_i32_0 = arith.constant 0 : i32
    %c0_i32_1 = arith.constant 0 : i32
    return %c0_i32, %c0_i32_0 : i32, i32
  }
  func.func @transform_10(%arg0: i32, %arg1: i32) -> (i32, i32, i32, i32) {
    %c0_i32 = arith.constant 0 : i32
    %c0_i32_0 = arith.constant 0 : i32
    %c0_i32_1 = arith.constant 0 : i32
    return %arg0, %arg1, %c0_i32, %c0_i32_0 : i32, i32, i32, i32
  }
}

</mosaic_0001>

<llo_original>
// kernel: tpu_custom_call.1
$region0: #{tpu_custom_call.1}
  #allocation0 [shape = 'u32[]', space=smem, size = 0x4, offset = 0x4, fixed_abs, tag = 'smem constant byte address 0x4 - core index']
  #allocation1 [shape = 'u32[72,128]{1,0:T(1,128)}', space=vmem, size = 0x9000, scoped, tag = 'internal scratch']
  %s0 = inlined_call_operand.hbm [shape: bf16[2,16,16,128], index: 0, kind: input, shape index: {}]
  %s1 = inlined_call_operand.hbm [shape: bf16[128,128], index: 1, kind: input, shape index: {}]
  %s2 = inlined_call_operand.vmem [shape: f32[1,128], index: 2, kind: input, shape index: {}]
  %s3 = inlined_call_operand.vmem [shape: f32[1,128], index: 3, kind: input, shape index: {}]
  %s4 = inlined_call_operand.hbm [shape: bf16[1152,128], index: 4, kind: input, shape index: {}]
  %s5 = inlined_call_operand.vmem [shape: f32[1,128], index: 5, kind: input, shape index: {}]
  %s6 = inlined_call_operand.vmem [shape: f32[1,128], index: 6, kind: input, shape index: {}]
  %s7 = inlined_call_operand.hbm [shape: bf16[128,128], index: 7, kind: input, shape index: {}]
  %s8 = inlined_call_operand.vmem [shape: f32[1,128], index: 8, kind: input, shape index: {}]
  %s9 = inlined_call_operand.vmem [shape: f32[1,128], index: 9, kind: input, shape index: {}]
  %s10 = inlined_call_operand.hbm [shape: bf16[2,16,16,128], index: 10, kind: output, shape index: {}]
  %s11 = sld [smem:[#allocation0]]
  $region89: #{tpu_custom_call.1} parent=0
    _
  %s13 = ssub.s32 1, %s11
  %s14 = scalar_select 0, %s13, %s11
  $region1: #{tpu_custom_call.1} parent=0
    #allocation2 [shape = 'u8[131072]{0}', space=vmem, size = 0x20000, scoped, tag = 'input window, operand 0']
    #allocation3 [shape = 's32[2]{0}', space=sflag, size = 0x8, scoped, tag = 'scoped memory for tpu_custom_call.1']
    #allocation4 [shape = 's32[2]{0}', space=sflag, size = 0x8, scoped, tag = 'scoped memory for tpu_custom_call.1']
    #allocation5 [shape = 'u8[32768]{0}', space=vmem, size = 0x8000, scoped, tag = 'input window, operand 1, single buffered']
    #allocation6 [shape = 's32[1]{0}', space=sflag, size = 0x4, scoped, tag = 'scoped memory for tpu_custom_call.1']
    #allocation7 [shape = 'u8[294912]{0}', space=vmem, size = 0x48000, scoped, tag = 'input window, operand 4, single buffered']
    #allocation8 [shape = 'u8[32768]{0}', space=vmem, size = 0x8000, scoped, tag = 'input window, operand 7, single buffered']
    #allocation9 [shape = 's32[1]{0}', space=sflag, size = 0x4, scoped, tag = 'scoped memory for tpu_custom_call.1']
    #allocation10 [shape = 'u8[131072]{0}', space=vmem, size = 0x20000, scoped, tag = 'output window, operand 0']
    %15 = vsyncpa [#allocation3], 0
    %s16 = scalar_lea.sflag [#allocation3], 1
    %17 = vsyncpa %s16, 0
    %18 = vsyncpa [#allocation6], 0
    %19 = vsyncpa [#allocation9], 0
    %20 = vsyncpa [#allocation4], 0
    %s21 = scalar_lea.sflag [#allocation4], 1
    %22 = vsyncpa %s21, 0
    loop: start=0, step=1, limit=4
    $region2: #{tpu_custom_call.1} parent=1 // loop_pre_header
      _
    $region3: #{tpu_custom_call.1} parent=1 // loop_header
      %s24 = sphi 0, %s28
      %p25 = scmp.ge.s32.totalorder %s24, 4
      %s31 = sphi 0, %s43
      %s32 = sphi 0, %s39
      %s33 = sphi 0, %s31
      %s34 = sphi 0, %s32
      %s35 = sphi 0, %s33
      %s36 = sphi 0, %s34
      %s46 = sphi 0, %s48
      %s49 = sphi 0, %s46
      %s50 = sphi 0, %s49
      %s66 = sphi 0, %s50
      %s70 = sphi 0, %s70
      %s72 = sphi 0, %s70
      %s73 = sphi 0, %s72
      %s87 = sphi 0, %s73
      %s91 = sphi 0, %s91
      %s93 = sphi 0, %s91
      %s94 = sphi 0, %s93
      %s108 = sphi 0, %s94
      %s112 = sphi 0, %s112
      %s114 = sphi 0, %s112
      %s115 = sphi 0, %s114
      %s129 = sphi 0, %s115
      %s133 = sphi 0, %s133
      %s135 = sphi 0, %s133
      %s136 = sphi 0, %s135
      %s150 = sphi 0, %s136
      %s154 = sphi 0, %s154
      %s156 = sphi 0, %s154
      %s157 = sphi 0, %s156
      %s171 = sphi 0, %s157
      %s175 = sphi 0, %s175
      %s177 = sphi 0, %s175
      %s178 = sphi 0, %s177
      %s192 = sphi 0, %s178
      %s196 = sphi 0, %s196
      %s198 = sphi 0, %s196
      %s199 = sphi 0, %s198
      %s213 = sphi 0, %s199
      %s217 = sphi 0, %s217
      %s219 = sphi 0, %s217
      %s220 = sphi 0, %s219
      %s234 = sphi 0, %s220
      %s238 = sphi 0, %s238
      %s240 = sphi 0, %s238
      %s241 = sphi 0, %s240
      %s255 = sphi 0, %s241
      %s263 = sphi 0, %s265
      %s266 = sphi 0, %s263
      %s267 = sphi 0, %s266
      %s283 = sphi 0, %s267
    $region4: #{tpu_custom_call.1} parent=1 // loop_header_branch
      %27 = sbr.rel (%p25) target = $region8
    $region5: #{tpu_custom_call.1} parent=1 // loop_body
      %s29 = ssub.s32 %s24, 1
      %s30 = ssub.s32 %s24, 2
      %s37 = sadd.s32 1, %s32
      %p38 = scmp.ge.s32.totalorder %s37, 1
      %s39 = scalar_select %p38, 0, %s37
      %s40 = sadd.s32 1, %s31
      %s41 = scalar_select %p38, %s40, %s31
      %p42 = scmp.ge.s32.totalorder %s41, 2
      %s43 = scalar_select %p42, 0, %s41
      %s44 = ssub.s32 %s31, %s43
      %p45 = scmp.eq.s32.totalorder %s44, 0
      %s47 = sadd.s32 %s46, 1
      %s48 = scalar_select %p45, %s46, %s47
      %p51 = pneg %p45
      %p52 = scmp.eq.s32.totalorder %s24, 1
      %p53 = por %p51, %p52
      %p54 = scmp.ne.s32.totalorder %s46, %s49
      %p55 = scmp.eq.s32.totalorder %s24, 0
      %p56 = por %p54, %p55
      %p57 = scmp.ne.s32.totalorder %s46, %s49
      %p58 = scmp.eq.s32.totalorder %s29, 1
      %p59 = por %p57, %p58
      %p60 = scmp.ne.s32.totalorder %s49, %s50
      %p61 = scmp.eq.s32.totalorder %s29, 0
      %p62 = por %p60, %p61
      %p63 = scmp.ne.s32.totalorder %s49, %s50
      %p64 = scmp.eq.s32.totalorder %s30, 1
      %p65 = por %p63, %p64
      %p67 = scmp.ne.s32.totalorder %s50, %s66
      %p68 = scmp.eq.s32.totalorder %s30, 0
      %p69 = por %p67, %p68
      %s71 = sadd.s32 %s70, 1
      %p74 = scmp.eq.s32.totalorder %s24, 1
      %p75 = scmp.ne.s32.totalorder %s70, %s72
      %p76 = scmp.eq.s32.totalorder %s24, 0
      %p77 = por %p75, %p76
      %p78 = scmp.ne.s32.totalorder %s70, %s72
      %p79 = scmp.eq.s32.totalorder %s29, 1
      %p80 = por %p78, %p79
      %p81 = scmp.ne.s32.totalorder %s72, %s73
      %p82 = scmp.eq.s32.totalorder %s29, 0
      %p83 = por %p81, %p82
      %p84 = scmp.ne.s32.totalorder %s72, %s73
      %p85 = scmp.eq.s32.totalorder %s30, 1
      %p86 = por %p84, %p85
      %p88 = scmp.ne.s32.totalorder %s73, %s87
      %p89 = scmp.eq.s32.totalorder %s30, 0
      %p90 = por %p88, %p89
      %s92 = sadd.s32 %s91, 1
      %p95 = scmp.eq.s32.totalorder %s24, 1
      %p96 = scmp.ne.s32.totalorder %s91, %s93
      %p97 = scmp.eq.s32.totalorder %s24, 0
      %p98 = por %p96, %p97
      %p99 = scmp.ne.s32.totalorder %s91, %s93
      %p100 = scmp.eq.s32.totalorder %s29, 1
      %p101 = por %p99, %p100
      %p102 = scmp.ne.s32.totalorder %s93, %s94
      %p103 = scmp.eq.s32.totalorder %s29, 0
      %p104 = por %p102, %p103
      %p105 = scmp.ne.s32.totalorder %s93, %s94
      %p106 = scmp.eq.s32.totalorder %s30, 1
      %p107 = por %p105, %p106
      %p109 = scmp.ne.s32.totalorder %s94, %s108
      %p110 = scmp.eq.s32.totalorder %s30, 0
      %p111 = por %p109, %p110
      %s113 = sadd.s32 %s112, 1
      %p116 = scmp.eq.s32.totalorder %s24, 1
      %p117 = scmp.ne.s32.totalorder %s112, %s114
      %p118 = scmp.eq.s32.totalorder %s24, 0
      %p119 = por %p117, %p118
      %p120 = scmp.ne.s32.totalorder %s112, %s114
      %p121 = scmp.eq.s32.totalorder %s29, 1
      %p122 = por %p120, %p121
      %p123 = scmp.ne.s32.totalorder %s114, %s115
      %p124 = scmp.eq.s32.totalorder %s29, 0
      %p125 = por %p123, %p124
      %p126 = scmp.ne.s32.totalorder %s114, %s115
      %p127 = scmp.eq.s32.totalorder %s30, 1
      %p128 = por %p126, %p127
      %p130 = scmp.ne.s32.totalorder %s115, %s129
      %p131 = scmp.eq.s32.totalorder %s30, 0
      %p132 = por %p130, %p131
      %s134 = sadd.s32 %s133, 1
      %p137 = scmp.eq.s32.totalorder %s24, 1
      %p138 = scmp.ne.s32.totalorder %s133, %s135
      %p139 = scmp.eq.s32.totalorder %s24, 0
      %p140 = por %p138, %p139
      %p141 = scmp.ne.s32.totalorder %s133, %s135
      %p142 = scmp.eq.s32.totalorder %s29, 1
      %p143 = por %p141, %p142
      %p144 = scmp.ne.s32.totalorder %s135, %s136
      %p145 = scmp.eq.s32.totalorder %s29, 0
      %p146 = por %p144, %p145
      %p147 = scmp.ne.s32.totalorder %s135, %s136
      %p148 = scmp.eq.s32.totalorder %s30, 1
      %p149 = por %p147, %p148
      %p151 = scmp.ne.s32.totalorder %s136, %s150
      %p152 = scmp.eq.s32.totalorder %s30, 0
      %p153 = por %p151, %p152
      %s155 = sadd.s32 %s154, 1
      %p158 = scmp.eq.s32.totalorder %s24, 1
      %p159 = scmp.ne.s32.totalorder %s154, %s156
      %p160 = scmp.eq.s32.totalorder %s24, 0
      %p161 = por %p159, %p160
      %p162 = scmp.ne.s32.totalorder %s154, %s156
      %p163 = scmp.eq.s32.totalorder %s29, 1
      %p164 = por %p162, %p163
      %p165 = scmp.ne.s32.totalorder %s156, %s157
      %p166 = scmp.eq.s32.totalorder %s29, 0
      %p167 = por %p165, %p166
      %p168 = scmp.ne.s32.totalorder %s156, %s157
      %p169 = scmp.eq.s32.totalorder %s30, 1
      %p170 = por %p168, %p169
      %p172 = scmp.ne.s32.totalorder %s157, %s171
      %p173 = scmp.eq.s32.totalorder %s30, 0
      %p174 = por %p172, %p173
      %s176 = sadd.s32 %s175, 1
      %p179 = scmp.eq.s32.totalorder %s24, 1
      %p180 = scmp.ne.s32.totalorder %s175, %s177
      %p181 = scmp.eq.s32.totalorder %s24, 0
      %p182 = por %p180, %p181
      %p183 = scmp.ne.s32.totalorder %s175, %s177
      %p184 = scmp.eq.s32.totalorder %s29, 1
      %p185 = por %p183, %p184
      %p186 = scmp.ne.s32.totalorder %s177, %s178
      %p187 = scmp.eq.s32.totalorder %s29, 0
      %p188 = por %p186, %p187
      %p189 = scmp.ne.s32.totalorder %s177, %s178
      %p190 = scmp.eq.s32.totalorder %s30, 1
      %p191 = por %p189, %p190
      %p193 = scmp.ne.s32.totalorder %s178, %s192
      %p194 = scmp.eq.s32.totalorder %s30, 0
      %p195 = por %p193, %p194
      %s197 = sadd.s32 %s196, 1
      %p200 = scmp.eq.s32.totalorder %s24, 1
      %p201 = scmp.ne.s32.totalorder %s196, %s198
      %p202 = scmp.eq.s32.totalorder %s24, 0
      %p203 = por %p201, %p202
      %p204 = scmp.ne.s32.totalorder %s196, %s198
      %p205 = scmp.eq.s32.totalorder %s29, 1
      %p206 = por %p204, %p205
      %p207 = scmp.ne.s32.totalorder %s198, %s199
      %p208 = scmp.eq.s32.totalorder %s29, 0
      %p209 = por %p207, %p208
      %p210 = scmp.ne.s32.totalorder %s198, %s199
      %p211 = scmp.eq.s32.totalorder %s30, 1
      %p212 = por %p210, %p211
      %p214 = scmp.ne.s32.totalorder %s199, %s213
      %p215 = scmp.eq.s32.totalorder %s30, 0
      %p216 = por %p214, %p215
      %s218 = sadd.s32 %s217, 1
      %p221 = scmp.eq.s32.totalorder %s24, 1
      %p222 = scmp.ne.s32.totalorder %s217, %s219
      %p223 = scmp.eq.s32.totalorder %s24, 0
      %p224 = por %p222, %p223
      %p225 = scmp.ne.s32.totalorder %s217, %s219
      %p226 = scmp.eq.s32.totalorder %s29, 1
      %p227 = por %p225, %p226
      %p228 = scmp.ne.s32.totalorder %s219, %s220
      %p229 = scmp.eq.s32.totalorder %s29, 0
      %p230 = por %p228, %p229
      %p231 = scmp.ne.s32.totalorder %s219, %s220
      %p232 = scmp.eq.s32.totalorder %s30, 1
      %p233 = por %p231, %p232
      %p235 = scmp.ne.s32.totalorder %s220, %s234
      %p236 = scmp.eq.s32.totalorder %s30, 0
      %p237 = por %p235, %p236
      %s239 = sadd.s32 %s238, 1
      %p242 = scmp.eq.s32.totalorder %s24, 1
      %p243 = scmp.ne.s32.totalorder %s238, %s240
      %p244 = scmp.eq.s32.totalorder %s24, 0
      %p245 = por %p243, %p244
      %p246 = scmp.ne.s32.totalorder %s238, %s240
      %p247 = scmp.eq.s32.totalorder %s29, 1
      %p248 = por %p246, %p247
      %p249 = scmp.ne.s32.totalorder %s240, %s241
      %p250 = scmp.eq.s32.totalorder %s29, 0
      %p251 = por %p249, %p250
      %p252 = scmp.ne.s32.totalorder %s240, %s241
      %p253 = scmp.eq.s32.totalorder %s30, 1
      %p254 = por %p252, %p253
      %p256 = scmp.ne.s32.totalorder %s241, %s255
      %p257 = scmp.eq.s32.totalorder %s30, 0
      %p258 = por %p256, %p257
      %s259 = ssub.s32 %s31, %s43
      %s260 = ssub.s32 %s32, %s39
      %s261 = sor.u32 %s259, %s260
      %p262 = scmp.eq.s32.totalorder %s261, 0
      %s264 = sadd.s32 %s263, 1
      %s265 = scalar_select %p262, %s263, %s264
      %p268 = pneg %p262
      %p269 = scmp.eq.s32.totalorder %s24, 1
      %p270 = por %p268, %p269
      %p271 = scmp.ne.s32.totalorder %s263, %s266
      %p272 = scmp.eq.s32.totalorder %s24, 0
      %p273 = por %p271, %p272
      %p274 = scmp.ne.s32.totalorder %s263, %s266
      %p275 = scmp.eq.s32.totalorder %s29, 1
      %p276 = por %p274, %p275
      %p277 = scmp.ne.s32.totalorder %s266, %s267
      %p278 = scmp.eq.s32.totalorder %s29, 0
      %p279 = por %p277, %p278
      %p280 = scmp.ne.s32.totalorder %s266, %s267
      %p281 = scmp.eq.s32.totalorder %s30, 1
      %p282 = por %p280, %p281
      %p284 = scmp.ne.s32.totalorder %s267, %s283
      %p285 = scmp.eq.s32.totalorder %s30, 0
      %p286 = por %p284, %p285
      %p287 = scmp.le.s32.totalorder 1, %s24
      %p288 = scmp.lt.s32.totalorder %s24, 3
      %p289 = pnand %p287, %p288
      %p290 = pneg %p289
      // Predicated region
      $region9: #{tpu_custom_call.1} parent=5 // pred_check
        _
      $region10: #{tpu_custom_call.1} parent=5 // pred_check_branch
        %292 = sbr.rel (%p289) target = $region12
      $region11: #{tpu_custom_call.1} parent=5 // pred_region
        %s293 = ssub.s32 %s24, 1
        // Predicated region
        $region13: #{tpu_custom_call.1} parent=11 // pred_check
          %p294 = pneg %p83
        $region14: #{tpu_custom_call.1} parent=11 // pred_check_branch
          %296 = sbr.rel (%p294) target = $region16
        $region15: #{tpu_custom_call.1} parent=11 // pred_region
          %298 = vsyncadd [#allocation6], 0
          %s299 = sshll.u32 %s1, 4
          %s300 = int_to_ptr.hbm [resolvable:$true] %s299
          %s301 = sshll.u32 [#allocation5], 4
          %s302 = int_to_ptr.vmem [resolvable:$true] %s301
          %307 = dma.hbm_to_vmem [thread:$0]  %s300, 1024, %s302, [#allocation6], 64, 64, 4
        $region16: #{tpu_custom_call.1} parent=11 // pred_fallthru
          _
        // Predicated region
        $region17: #{tpu_custom_call.1} parent=11 // pred_check
          %p308 = pneg %p104
        $region18: #{tpu_custom_call.1} parent=11 // pred_check_branch
          %310 = sbr.rel (%p308) target = $region20
        $region19: #{tpu_custom_call.1} parent=11 // pred_region
          _
        $region20: #{tpu_custom_call.1} parent=11 // pred_fallthru
          _
        // Predicated region
        $region21: #{tpu_custom_call.1} parent=11 // pred_check
          %p311 = pneg %p125
        $region22: #{tpu_custom_call.1} parent=11 // pred_check_branch
          %313 = sbr.rel (%p311) target = $region24
        $region23: #{tpu_custom_call.1} parent=11 // pred_region
          _
        $region24: #{tpu_custom_call.1} parent=11 // pred_fallthru
          _
        // Predicated region
        $region25: #{tpu_custom_call.1} parent=11 // pred_check
          %p314 = pneg %p146
        $region26: #{tpu_custom_call.1} parent=11 // pred_check_branch
          %316 = sbr.rel (%p314) target = $region28
        $region27: #{tpu_custom_call.1} parent=11 // pred_region
          %318 = vsyncadd [#allocation6], 0
          %s319 = sshll.u32 %s4, 4
          %s320 = int_to_ptr.hbm [resolvable:$true] %s319
          %s321 = sshll.u32 [#allocation7], 4
          %s322 = int_to_ptr.vmem [resolvable:$true] %s321
          %327 = dma.hbm_to_vmem [thread:$0]  %s320, 9216, %s322, [#allocation6], 64, 64, 4
        $region28: #{tpu_custom_call.1} parent=11 // pred_fallthru
          _
        // Predicated region
        $region29: #{tpu_custom_call.1} parent=11 // pred_check
          %p328 = pneg %p167
        $region30: #{tpu_custom_call.1} parent=11 // pred_check_branch
          %330 = sbr.rel (%p328) target = $region32
        $region31: #{tpu_custom_call.1} parent=11 // pred_region
          _
        $region32: #{tpu_custom_call.1} parent=11 // pred_fallthru
          _
        // Predicated region
        $region33: #{tpu_custom_call.1} parent=11 // pred_check
          %p331 = pneg %p188
        $region34: #{tpu_custom_call.1} parent=11 // pred_check_branch
          %333 = sbr.rel (%p331) target = $region36
        $region35: #{tpu_custom_call.1} parent=11 // pred_region
          _
        $region36: #{tpu_custom_call.1} parent=11 // pred_fallthru
          _
        // Predicated region
        $region37: #{tpu_custom_call.1} parent=11 // pred_check
          %p334 = pneg %p209
        $region38: #{tpu_custom_call.1} parent=11 // pred_check_branch
          %336 = sbr.rel (%p334) target = $region40
        $region39: #{tpu_custom_call.1} parent=11 // pred_region
          %338 = vsyncadd [#allocation9], 0
          %s339 = sshll.u32 %s7, 4
          %s340 = int_to_ptr.hbm [resolvable:$true] %s339
          %s341 = sshll.u32 [#allocation8], 4
          %s342 = int_to_ptr.vmem [resolvable:$true] %s341
          %347 = dma.hbm_to_vmem [thread:$0]  %s340, 1024, %s342, [#allocation9], 64, 64, 4
        $region40: #{tpu_custom_call.1} parent=11 // pred_fallthru
          _
        // Predicated region
        $region41: #{tpu_custom_call.1} parent=11 // pred_check
          %p348 = pneg %p230
        $region42: #{tpu_custom_call.1} parent=11 // pred_check_branch
          %350 = sbr.rel (%p348) target = $region44
        $region43: #{tpu_custom_call.1} parent=11 // pred_region
          _
        $region44: #{tpu_custom_call.1} parent=11 // pred_fallthru
          _
        // Predicated region
        $region45: #{tpu_custom_call.1} parent=11 // pred_check
          %p351 = pneg %p251
        $region46: #{tpu_custom_call.1} parent=11 // pred_check_branch
          %353 = sbr.rel (%p351) target = $region48
        $region47: #{tpu_custom_call.1} parent=11 // pred_region
          _
        $region48: #{tpu_custom_call.1} parent=11 // pred_fallthru
          _
      $region12: #{tpu_custom_call.1} parent=5 // pred_fallthru
        _
      %p354 = scmp.lt.s32.totalorder %s24, 2
      // Predicated region
      $region49: #{tpu_custom_call.1} parent=5 // pred_check
        %p355 = pneg %p354
      $region50: #{tpu_custom_call.1} parent=5 // pred_check_branch
        %357 = sbr.rel (%p355) target = $region52
      $region51: #{tpu_custom_call.1} parent=5 // pred_region
        // Predicated region
        $region53: #{tpu_custom_call.1} parent=51 // pred_check
          %p358 = pneg %p56
        $region54: #{tpu_custom_call.1} parent=51 // pred_check_branch
          %360 = sbr.rel (%p358) target = $region56
        $region55: #{tpu_custom_call.1} parent=51 // pred_region
          %s361 = sand.u32 %s46, 1
          %s362 = scalar_lea.sflag [#allocation3], %s361
          %s363 = sand.u32 %s46, 1
          %s364 = smul.addr %s363, 128
          %s365 = scalar_lea.vmem [#allocation2], %s364
          %367 = vsyncadd %s362, 0
          %s368 = smul.addr %s31, 32
          %s369 = smul.addr %s368, 4
          %s370 = scalar_lea.hbm %s0, %s369
          %s371 = sshll.u32 %s370, 4
          %s372 = int_to_ptr.hbm [resolvable:$true] %s371
          %s373 = sshll.u32 %s365, 4
          %s374 = int_to_ptr.vmem [resolvable:$true] %s373
          %379 = dma.hbm_to_vmem [thread:$0]  %s372, 2048, %s374, %s362, 64, 64, 4
        $region56: #{tpu_custom_call.1} parent=51 // pred_fallthru
          _
      $region52: #{tpu_custom_call.1} parent=5 // pred_fallthru
        _
      %p380 = scmp.le.s32.totalorder 1, %s24
      %p381 = scmp.lt.s32.totalorder %s24, 3
      %p382 = pnand %p380, %p381
      %p383 = pneg %p382
      // Predicated region
      $region57: #{tpu_custom_call.1} parent=5 // pred_check
        _
      $region58: #{tpu_custom_call.1} parent=5 // pred_check_branch
        %385 = sbr.rel (%p382) target = $region60
      $region59: #{tpu_custom_call.1} parent=5 // pred_region
        %s386 = ssub.s32 %s24, 1
        %s387 = sand.u32 %s49, 1
        %s388 = scalar_lea.sflag [#allocation3], %s387
        %s389 = sand.u32 %s49, 1
        %s390 = smul.addr %s389, 128
        %s391 = scalar_lea.vmem [#allocation2], %s390
        // Predicated region
        $region61: #{tpu_custom_call.1} parent=59 // pred_check
          %p392 = pneg %p62
        $region62: #{tpu_custom_call.1} parent=59 // pred_check_branch
          %394 = sbr.rel (%p392) target = $region64
        $region63: #{tpu_custom_call.1} parent=59 // pred_region
          %396 = dma.done %s388, 2048
        $region64: #{tpu_custom_call.1} parent=59 // pred_fallthru
          _
        // Predicated region
        $region65: #{tpu_custom_call.1} parent=59 // pred_check
          %p397 = pneg %p83
        $region66: #{tpu_custom_call.1} parent=59 // pred_check_branch
          %399 = sbr.rel (%p397) target = $region68
        $region67: #{tpu_custom_call.1} parent=59 // pred_region
          %401 = dma.done [#allocation6], 1024
        $region68: #{tpu_custom_call.1} parent=59 // pred_fallthru
          _
        // Predicated region
        $region69: #{tpu_custom_call.1} parent=59 // pred_check
          %p402 = pneg %p146
        $region70: #{tpu_custom_call.1} parent=59 // pred_check_branch
          %404 = sbr.rel (%p402) target = $region72
        $region71: #{tpu_custom_call.1} parent=59 // pred_region
          %406 = dma.done [#allocation6], 9216
        $region72: #{tpu_custom_call.1} parent=59 // pred_fallthru
          _
        // Predicated region
        $region73: #{tpu_custom_call.1} parent=59 // pred_check
          %p407 = pneg %p209
        $region74: #{tpu_custom_call.1} parent=59 // pred_check_branch
          %409 = sbr.rel (%p407) target = $region76
        $region75: #{tpu_custom_call.1} parent=59 // pred_region
          %411 = dma.done [#allocation9], 1024
        $region76: #{tpu_custom_call.1} parent=59 // pred_fallthru
          _
        %s412 = sand.u32 %s49, 1
        %s413 = scalar_lea.sflag [#allocation3], %s412
        %s414 = sand.u32 %s49, 1
        %s415 = smul.addr %s414, 128
        %s416 = scalar_lea.vmem [#allocation2], %s415
        %p417 = pneg %p62
        %p418 = pneg %p59
        %p419 = pneg %p83
        %p420 = pneg %p80
        %p421 = pneg %p104
        %p422 = pneg %p101
        %p423 = pneg %p125
        %p424 = pneg %p122
        %p425 = pneg %p146
        %p426 = pneg %p143
        %p427 = pneg %p167
        %p428 = pneg %p164
        %p429 = pneg %p188
        %p430 = pneg %p185
        %p431 = pneg %p209
        %p432 = pneg %p206
        %p433 = pneg %p230
        %p434 = pneg %p227
        %p435 = pneg %p251
        %p436 = pneg %p248
        %p437 = pneg %p279
        %p438 = pneg %p276
        %s439 = sand.u32 %s266, 1
        %s440 = scalar_lea.sflag [#allocation4], %s439
        %s441 = sand.u32 %s266, 1
        %s442 = smul.addr %s441, 128
        %s443 = scalar_lea.vmem [#allocation10], %s442
        %s444 = smul.u32 16, %s34
        %s445 = smul.u32 %s34, 16
        %s446 = ssub.s32 %s445, 1
        %p447 = scmp.gt.s32.totalorder %s446, 0
        %s448 = scalar_select %p447, %s446, 0
        %s449 = smul.u32 %s448, 2
        %s450 = smul.addr %s449, 4
        %s451 = scalar_lea.vmem %s391, %s450 [#allocation2]
        %v452 = vld [vmem:[%s451] sm:$0xf]
        %v453 = vld [vmem:[%s451 + $0x4] sm:$0xf]
        %s454 = sadd.s32 %s445, 16
        %p455 = scmp.lt.s32.totalorder %s454, 15
        %s456 = scalar_select %p455, %s454, 15
        %s457 = smul.u32 %s456, 2
        %s458 = smul.addr %s457, 4
        %s459 = scalar_lea.vmem %s391, %s458 [#allocation2]
        %v460 = vld [vmem:[%s459] sm:$0xf]
        %v461 = vld [vmem:[%s459 + $0x4] sm:$0xf]
        %p462 = scmp.gt.s32.totalorder %s34, 0
        %s463 = scalar_select %p462, 1, 0
        %s464 = scvt.s32.f32 %s463
        %p465 = scmp.lt.s32.totalorder %s34, 0
        %s466 = scalar_select %p465, 1, 0
        %s467 = scvt.s32.f32 %s466
        %v468 = vld [vmem:[#allocation5] sm:$0xf]
        %v469 = vld [vmem:[#allocation5 + $0x4] sm:$0xf]
        %v470 = vld [vmem:[#allocation5 + $0x8] sm:$0xf]
        %v471 = vld [vmem:[#allocation5 + $0xc] sm:$0xf]
        %v472 = vld [vmem:[#allocation5 + $0x10] sm:$0xf]
        %v473 = vld [vmem:[#allocation5 + $0x14] sm:$0xf]
        %v474 = vld [vmem:[#allocation5 + $0x18] sm:$0xf]
        %v475 = vld [vmem:[#allocation5 + $0x1c] sm:$0xf]
        %v476 = vld [vmem:[#allocation5 + $0x20] sm:$0xf]
        %v477 = vld [vmem:[#allocation5 + $0x24] sm:$0xf]
        %v478 = vld [vmem:[#allocation5 + $0x28] sm:$0xf]
        %v479 = vld [vmem:[#allocation5 + $0x2c] sm:$0xf]
        %v480 = vld [vmem:[#allocation5 + $0x30] sm:$0xf]
        %v481 = vld [vmem:[#allocation5 + $0x34] sm:$0xf]
        %v482 = vld [vmem:[#allocation5 + $0x38] sm:$0xf]
        %v483 = vld [vmem:[#allocation5 + $0x3c] sm:$0xf]
        %v486 = vunpack.c.l.b16 %v452
        %v487 = vunpack.c.l.b16 %v453
        %v488 = vpack.c.b16 %v487, %v486
        %v506 = vunpack.c.l.b16 %v468
        %v507 = vunpack.c.l.b16 %v469
        %v508 = vunpack.c.l.b16 %v470
        %v509 = vunpack.c.l.b16 %v471
        %v510 = vunpack.c.l.b16 %v472
        %v511 = vunpack.c.l.b16 %v473
        %v512 = vunpack.c.l.b16 %v474
        %v513 = vunpack.c.l.b16 %v475
        %v514 = vunpack.c.l.b16 %v476
        %v515 = vunpack.c.l.b16 %v477
        %v516 = vunpack.c.l.b16 %v478
        %v517 = vunpack.c.l.b16 %v479
        %v518 = vunpack.c.l.b16 %v480
        %v519 = vunpack.c.l.b16 %v481
        %v520 = vunpack.c.l.b16 %v482
        %v521 = vunpack.c.l.b16 %v483
        %v522 = vpack.c.b16 %v507, %v506
        %v523 = vpack.c.b16 %v509, %v508
        %v524 = vpack.c.b16 %v511, %v510
        %v525 = vpack.c.b16 %v513, %v512
        %v526 = vpack.c.b16 %v515, %v514
        %v527 = vpack.c.b16 %v517, %v516
        %v528 = vpack.c.b16 %v519, %v518
        %v529 = vpack.c.b16 %v521, %v520
        %538 = vmatpush.bf16.msra.mxu0 %v529
        %539 = vmatpush.bf16.msra.mxu0 %v528
        %540 = vmatpush.bf16.msra.mxu0 %v527
        %541 = vmatpush.bf16.msra.mxu0 %v526
        %542 = vmatpush.bf16.msra.mxu0 %v525
        %543 = vmatpush.bf16.msra.mxu0 %v524
        %544 = vmatpush.bf16.msra.mxu0 %v523
        %545 = vmatpush.bf16.msra.mxu0 %v522
        %546 = vmatmul.bf16.gmra.mxu0 %v488
        %v547 = vpop.f32.mrf.mxu0
        %v548 = vadd.f32 0.0, %v547
        %v549 = vpop.f32.mrf.mxu0
        %v550 = vadd.f32 0.0, %v549
        %551 = vdwg.mxu0
        %v552 = vld [vmem:[%s2] sm:$0x1]
        %v554 = vperm.slane %v552, 0
        %v556 = vmul.f32 %v548, %v554
        %v557 = vmul.f32 %v550, %v554
        %v558 = vld [vmem:[%s3] sm:$0x1]
        %v560 = vperm.slane %v558, 0
        %v562 = vadd.f32 %v556, %v560
        %v563 = vadd.f32 %v557, %v560
        %v564 = vmax.f32 %v562, 0.0
        %v565 = vmax.f32 %v563, 0.0
        %v566 = vstv %s464
        %v567 = vmul.f32 %v564, %v566
        %v568 = vmul.f32 %v565, %v566
        %s569 = smul.u32 %s445, 2
        %s570 = smul.addr %s569, 4
        %s571 = scalar_lea.vmem %s391, %s570 [#allocation2]
        %v572 = vld [vmem:[%s571] sm:$0xf]
        %v573 = vld [vmem:[%s571 + $0x4] sm:$0xf]
        %v574 = vld [vmem:[%s571 + $0x8] sm:$0xf]
        %v575 = vld [vmem:[%s571 + $0xc] sm:$0xf]
        %v576 = vld [vmem:[%s571 + $0x10] sm:$0xf]
        %v577 = vld [vmem:[%s571 + $0x14] sm:$0xf]
        %v578 = vld [vmem:[%s571 + $0x18] sm:$0xf]
        %v579 = vld [vmem:[%s571 + $0x1c] sm:$0xf]
        %v580 = vld [vmem:[%s571 + $0x20] sm:$0xf]
        %v581 = vld [vmem:[%s571 + $0x24] sm:$0xf]
        %v582 = vld [vmem:[%s571 + $0x28] sm:$0xf]
        %v583 = vld [vmem:[%s571 + $0x2c] sm:$0xf]
        %v584 = vld [vmem:[%s571 + $0x30] sm:$0xf]
        %v585 = vld [vmem:[%s571 + $0x34] sm:$0xf]
        %v586 = vld [vmem:[%s571 + $0x38] sm:$0xf]
        %v587 = vld [vmem:[%s571 + $0x3c] sm:$0xf]
        %v588 = vld [vmem:[%s571 + $0x40] sm:$0xf]
        %v589 = vld [vmem:[%s571 + $0x44] sm:$0xf]
        %v590 = vld [vmem:[%s571 + $0x48] sm:$0xf]
        %v591 = vld [vmem:[%s571 + $0x4c] sm:$0xf]
        %v592 = vld [vmem:[%s571 + $0x50] sm:$0xf]
        %v593 = vld [vmem:[%s571 + $0x54] sm:$0xf]
        %v594 = vld [vmem:[%s571 + $0x58] sm:$0xf]
        %v595 = vld [vmem:[%s571 + $0x5c] sm:$0xf]
        %v596 = vld [vmem:[%s571 + $0x60] sm:$0xf]
        %v597 = vld [vmem:[%s571 + $0x64] sm:$0xf]
        %v598 = vld [vmem:[%s571 + $0x68] sm:$0xf]
        %v599 = vld [vmem:[%s571 + $0x6c] sm:$0xf]
        %v600 = vld [vmem:[%s571 + $0x70] sm:$0xf]
        %v601 = vld [vmem:[%s571 + $0x74] sm:$0xf]
        %v602 = vld [vmem:[%s571 + $0x78] sm:$0xf]
        %v603 = vld [vmem:[%s571 + $0x7c] sm:$0xf]
        %v636 = vunpack.c.l.b16 %v572
        %v637 = vunpack.c.l.b16 %v573
        %v638 = vunpack.c.l.b16 %v574
        %v639 = vunpack.c.l.b16 %v575
        %v640 = vunpack.c.l.b16 %v576
        %v641 = vunpack.c.l.b16 %v577
        %v642 = vunpack.c.l.b16 %v578
        %v643 = vunpack.c.l.b16 %v579
        %v644 = vunpack.c.l.b16 %v580
        %v645 = vunpack.c.l.b16 %v581
        %v646 = vunpack.c.l.b16 %v582
        %v647 = vunpack.c.l.b16 %v583
        %v648 = vunpack.c.l.b16 %v584
        %v649 = vunpack.c.l.b16 %v585
        %v650 = vunpack.c.l.b16 %v586
        %v651 = vunpack.c.l.b16 %v587
        %v652 = vunpack.c.l.b16 %v588
        %v653 = vunpack.c.l.b16 %v589
        %v654 = vunpack.c.l.b16 %v590
        %v655 = vunpack.c.l.b16 %v591
        %v656 = vunpack.c.l.b16 %v592
        %v657 = vunpack.c.l.b16 %v593
        %v658 = vunpack.c.l.b16 %v594
        %v659 = vunpack.c.l.b16 %v595
        %v660 = vunpack.c.l.b16 %v596
        %v661 = vunpack.c.l.b16 %v597
        %v662 = vunpack.c.l.b16 %v598
        %v663 = vunpack.c.l.b16 %v599
        %v664 = vunpack.c.l.b16 %v600
        %v665 = vunpack.c.l.b16 %v601
        %v666 = vunpack.c.l.b16 %v602
        %v667 = vunpack.c.l.b16 %v603
        %v668 = vpack.c.b16 %v637, %v636
        %v669 = vpack.c.b16 %v639, %v638
        %v670 = vpack.c.b16 %v641, %v640
        %v671 = vpack.c.b16 %v643, %v642
        %v672 = vpack.c.b16 %v645, %v644
        %v673 = vpack.c.b16 %v647, %v646
        %v674 = vpack.c.b16 %v649, %v648
        %v675 = vpack.c.b16 %v651, %v650
        %v676 = vpack.c.b16 %v653, %v652
        %v677 = vpack.c.b16 %v655, %v654
        %v678 = vpack.c.b16 %v657, %v656
        %v679 = vpack.c.b16 %v659, %v658
        %v680 = vpack.c.b16 %v661, %v660
        %v681 = vpack.c.b16 %v663, %v662
        %v682 = vpack.c.b16 %v665, %v664
        %v683 = vpack.c.b16 %v667, %v666
        %700 = vmatpush.bf16.msra.mxu0 %v529
        %701 = vmatpush.bf16.msra.mxu0 %v528
        %702 = vmatpush.bf16.msra.mxu0 %v527
        %703 = vmatpush.bf16.msra.mxu0 %v526
        %704 = vmatpush.bf16.msra.mxu0 %v525
        %705 = vmatpush.bf16.msra.mxu0 %v524
        %706 = vmatpush.bf16.msra.mxu0 %v523
        %707 = vmatpush.bf16.msra.mxu0 %v522
        %708 = vmatmul.bf16.gmra.mxu0 %v668
        %v709 = vpop.f32.mrf.mxu0
        %v710 = vadd.f32 0.0, %v709
        %v711 = vpop.f32.mrf.mxu0
        %v712 = vadd.f32 0.0, %v711
        %713 = vmatmul.bf16.gmra.mxu0 %v669
        %v714 = vpop.f32.mrf.mxu0
        %v715 = vadd.f32 0.0, %v714
        %v716 = vpop.f32.mrf.mxu0
        %v717 = vadd.f32 0.0, %v716
        %718 = vmatmul.bf16.gmra.mxu0 %v670
        %v719 = vpop.f32.mrf.mxu0
        %v720 = vadd.f32 0.0, %v719
        %v721 = vpop.f32.mrf.mxu0
        %v722 = vadd.f32 0.0, %v721
        %723 = vmatmul.bf16.gmra.mxu0 %v671
        %v724 = vpop.f32.mrf.mxu0
        %v725 = vadd.f32 0.0, %v724
        %v726 = vpop.f32.mrf.mxu0
        %v727 = vadd.f32 0.0, %v726
        %728 = vmatmul.bf16.gmra.mxu0 %v672
        %v729 = vpop.f32.mrf.mxu0
        %v730 = vadd.f32 0.0, %v729
        %v731 = vpop.f32.mrf.mxu0
        %v732 = vadd.f32 0.0, %v731
        %733 = vmatmul.bf16.gmra.mxu0 %v673
        %v734 = vpop.f32.mrf.mxu0
        %v735 = vadd.f32 0.0, %v734
        %v736 = vpop.f32.mrf.mxu0
        %v737 = vadd.f32 0.0, %v736
        %738 = vmatmul.bf16.gmra.mxu0 %v674
        %v739 = vpop.f32.mrf.mxu0
        %v740 = vadd.f32 0.0, %v739
        %v741 = vpop.f32.mrf.mxu0
        %v742 = vadd.f32 0.0, %v741
        %743 = vmatmul.bf16.gmra.mxu0 %v675
        %v744 = vpop.f32.mrf.mxu0
        %v745 = vadd.f32 0.0, %v744
        %v746 = vpop.f32.mrf.mxu0
        %v747 = vadd.f32 0.0, %v746
        %748 = vmatmul.bf16.gmra.mxu0 %v676
        %v749 = vpop.f32.mrf.mxu0
        %v750 = vadd.f32 0.0, %v749
        %v751 = vpop.f32.mrf.mxu0
        %v752 = vadd.f32 0.0, %v751
        %753 = vmatmul.bf16.gmra.mxu0 %v677
        %v754 = vpop.f32.mrf.mxu0
        %v755 = vadd.f32 0.0, %v754
        %v756 = vpop.f32.mrf.mxu0
        %v757 = vadd.f32 0.0, %v756
        %758 = vmatmul.bf16.gmra.mxu0 %v678
        %v759 = vpop.f32.mrf.mxu0
        %v760 = vadd.f32 0.0, %v759
        %v761 = vpop.f32.mrf.mxu0
        %v762 = vadd.f32 0.0, %v761
        %763 = vmatmul.bf16.gmra.mxu0 %v679
        %v764 = vpop.f32.mrf.mxu0
        %v765 = vadd.f32 0.0, %v764
        %v766 = vpop.f32.mrf.mxu0
        %v767 = vadd.f32 0.0, %v766
        %768 = vmatmul.bf16.gmra.mxu0 %v680
        %v769 = vpop.f32.mrf.mxu0
        %v770 = vadd.f32 0.0, %v769
        %v771 = vpop.f32.mrf.mxu0
        %v772 = vadd.f32 0.0, %v771
        %773 = vmatmul.bf16.gmra.mxu0 %v681
        %v774 = vpop.f32.mrf.mxu0
        %v775 = vadd.f32 0.0, %v774
        %v776 = vpop.f32.mrf.mxu0
        %v777 = vadd.f32 0.0, %v776
        %778 = vmatmul.bf16.gmra.mxu0 %v682
        %v779 = vpop.f32.mrf.mxu0
        %v780 = vadd.f32 0.0, %v779
        %v781 = vpop.f32.mrf.mxu0
        %v782 = vadd.f32 0.0, %v781
        %783 = vmatmul.bf16.gmra.mxu0 %v683
        %v784 = vpop.f32.mrf.mxu0
        %v785 = vadd.f32 0.0, %v784
        %v786 = vpop.f32.mrf.mxu0
        %v787 = vadd.f32 0.0, %v786
        %788 = vdwg.mxu0
        %v789 = vmul.f32 %v710, %v554
        %v790 = vmul.f32 %v712, %v554
        %v791 = vmul.f32 %v715, %v554
        %v792 = vmul.f32 %v717, %v554
        %v793 = vmul.f32 %v720, %v554
        %v794 = vmul.f32 %v722, %v554
        %v795 = vmul.f32 %v725, %v554
        %v796 = vmul.f32 %v727, %v554
        %v797 = vmul.f32 %v730, %v554
        %v798 = vmul.f32 %v732, %v554
        %v799 = vmul.f32 %v735, %v554
        %v800 = vmul.f32 %v737, %v554
        %v801 = vmul.f32 %v740, %v554
        %v802 = vmul.f32 %v742, %v554
        %v803 = vmul.f32 %v745, %v554
        %v804 = vmul.f32 %v747, %v554
        %v805 = vmul.f32 %v750, %v554
        %v806 = vmul.f32 %v752, %v554
        %v807 = vmul.f32 %v755, %v554
        %v808 = vmul.f32 %v757, %v554
        %v809 = vmul.f32 %v760, %v554
        %v810 = vmul.f32 %v762, %v554
        %v811 = vmul.f32 %v765, %v554
        %v812 = vmul.f32 %v767, %v554
        %v813 = vmul.f32 %v770, %v554
        %v814 = vmul.f32 %v772, %v554
        %v815 = vmul.f32 %v775, %v554
        %v816 = vmul.f32 %v777, %v554
        %v817 = vmul.f32 %v780, %v554
        %v818 = vmul.f32 %v782, %v554
        %v819 = vmul.f32 %v785, %v554
        %v820 = vmul.f32 %v787, %v554
        %v821 = vadd.f32 %v789, %v560
        %v822 = vadd.f32 %v790, %v560
        %v823 = vadd.f32 %v791, %v560
        %v824 = vadd.f32 %v792, %v560
        %v825 = vadd.f32 %v793, %v560
        %v826 = vadd.f32 %v794, %v560
        %v827 = vadd.f32 %v795, %v560
        %v828 = vadd.f32 %v796, %v560
        %v829 = vadd.f32 %v797, %v560
        %v830 = vadd.f32 %v798, %v560
        %v831 = vadd.f32 %v799, %v560
        %v832 = vadd.f32 %v800, %v560
        %v833 = vadd.f32 %v801, %v560
        %v834 = vadd.f32 %v802, %v560
        %v835 = vadd.f32 %v803, %v560
        %v836 = vadd.f32 %v804, %v560
        %v837 = vadd.f32 %v805, %v560
        %v838 = vadd.f32 %v806, %v560
        %v839 = vadd.f32 %v807, %v560
        %v840 = vadd.f32 %v808, %v560
        %v841 = vadd.f32 %v809, %v560
        %v842 = vadd.f32 %v810, %v560
        %v843 = vadd.f32 %v811, %v560
        %v844 = vadd.f32 %v812, %v560
        %v845 = vadd.f32 %v813, %v560
        %v846 = vadd.f32 %v814, %v560
        %v847 = vadd.f32 %v815, %v560
        %v848 = vadd.f32 %v816, %v560
        %v849 = vadd.f32 %v817, %v560
        %v850 = vadd.f32 %v818, %v560
        %v851 = vadd.f32 %v819, %v560
        %v852 = vadd.f32 %v820, %v560
        %v853 = vmax.f32 %v821, 0.0
        %v854 = vmax.f32 %v822, 0.0
        %v855 = vmax.f32 %v823, 0.0
        %v856 = vmax.f32 %v824, 0.0
        %v857 = vmax.f32 %v825, 0.0
        %v858 = vmax.f32 %v826, 0.0
        %v859 = vmax.f32 %v827, 0.0
        %v860 = vmax.f32 %v828, 0.0
        %v861 = vmax.f32 %v829, 0.0
        %v862 = vmax.f32 %v830, 0.0
        %v863 = vmax.f32 %v831, 0.0
        %v864 = vmax.f32 %v832, 0.0
        %v865 = vmax.f32 %v833, 0.0
        %v866 = vmax.f32 %v834, 0.0
        %v867 = vmax.f32 %v835, 0.0
        %v868 = vmax.f32 %v836, 0.0
        %v869 = vmax.f32 %v837, 0.0
        %v870 = vmax.f32 %v838, 0.0
        %v871 = vmax.f32 %v839, 0.0
        %v872 = vmax.f32 %v840, 0.0
        %v873 = vmax.f32 %v841, 0.0
        %v874 = vmax.f32 %v842, 0.0
        %v875 = vmax.f32 %v843, 0.0
        %v876 = vmax.f32 %v844, 0.0
        %v877 = vmax.f32 %v845, 0.0
        %v878 = vmax.f32 %v846, 0.0
        %v879 = vmax.f32 %v847, 0.0
        %v880 = vmax.f32 %v848, 0.0
        %v881 = vmax.f32 %v849, 0.0
        %v882 = vmax.f32 %v850, 0.0
        %v883 = vmax.f32 %v851, 0.0
        %v884 = vmax.f32 %v852, 0.0
        %v887 = vunpack.c.l.b16 %v460
        %v888 = vunpack.c.l.b16 %v461
        %v889 = vpack.c.b16 %v888, %v887
        %891 = vmatpush.bf16.msra.mxu0 %v529
        %892 = vmatpush.bf16.msra.mxu0 %v528
        %893 = vmatpush.bf16.msra.mxu0 %v527
        %894 = vmatpush.bf16.msra.mxu0 %v526
        %895 = vmatpush.bf16.msra.mxu0 %v525
        %896 = vmatpush.bf16.msra.mxu0 %v524
        %897 = vmatpush.bf16.msra.mxu0 %v523
        %898 = vmatpush.bf16.msra.mxu0 %v522
        %899 = vmatmul.bf16.gmra.mxu0 %v889
        %v900 = vpop.f32.mrf.mxu0
        %v901 = vadd.f32 0.0, %v900
        %v902 = vpop.f32.mrf.mxu0
        %v903 = vadd.f32 0.0, %v902
        %904 = vdwg.mxu0
        %v905 = vmul.f32 %v901, %v554
        %v906 = vmul.f32 %v903, %v554
        %v907 = vadd.f32 %v905, %v560
        %v908 = vadd.f32 %v906, %v560
        %v909 = vmax.f32 %v907, 0.0
        %v910 = vmax.f32 %v908, 0.0
        %v911 = vstv %s467
        %v912 = vmul.f32 %v909, %v911
        %v913 = vmul.f32 %v910, %v911
        %v914 = vlaneseq
        %v915 = vshrl.u32 %v914, 7
        %v916 = vadd.s32 %v915, 8
        %vm917 = vcmp.ne.s32.totalorder %v915, 0
        %vm918 = vcmp.ne.s32.totalorder %v916, 0
        %v919 = vrot.slane %v567, 7
        %v920 = vrot.slane %v853, 7
        %v921 = vrot.slane %v855, 7
        %v922 = vrot.slane %v857, 7
        %v923 = vrot.slane %v859, 7
        %v924 = vrot.slane %v861, 7
        %v925 = vrot.slane %v863, 7
        %v926 = vrot.slane %v865, 7
        %v927 = vrot.slane %v867, 7
        %v928 = vrot.slane %v869, 7
        %v929 = vrot.slane %v871, 7
        %v930 = vrot.slane %v873, 7
        %v931 = vrot.slane %v875, 7
        %v932 = vrot.slane %v877, 7
        %v933 = vrot.slane %v879, 7
        %v934 = vrot.slane %v881, 7
        %v935 = vrot.slane %v883, 7
        %v936 = vrot.slane %v912, 7
        %v937 = vrot.slane %v568, 7
        %v938 = vrot.slane %v854, 7
        %v939 = vrot.slane %v856, 7
        %v940 = vrot.slane %v858, 7
        %v941 = vrot.slane %v860, 7
        %v942 = vrot.slane %v862, 7
        %v943 = vrot.slane %v864, 7
        %v944 = vrot.slane %v866, 7
        %v945 = vrot.slane %v868, 7
        %v946 = vrot.slane %v870, 7
        %v947 = vrot.slane %v872, 7
        %v948 = vrot.slane %v874, 7
        %v949 = vrot.slane %v876, 7
        %v950 = vrot.slane %v878, 7
        %v951 = vrot.slane %v880, 7
        %v952 = vrot.slane %v882, 7
        %v953 = vrot.slane %v884, 7
        %v954 = vrot.slane %v913, 7
        %vm955 = vcmp.lt.s32.totalorder %v915, 1
        %v956 = vsel %vm955, %v919, %v937
        %v957 = vsel %vm955, %v920, %v938
        %v958 = vsel %vm955, %v921, %v939
        %v959 = vsel %vm955, %v922, %v940
        %v960 = vsel %vm955, %v923, %v941
        %v961 = vsel %vm955, %v924, %v942
        %v962 = vsel %vm955, %v925, %v943
        %v963 = vsel %vm955, %v926, %v944
        %v964 = vsel %vm955, %v927, %v945
        %v965 = vsel %vm955, %v928, %v946
        %v966 = vsel %vm955, %v929, %v947
        %v967 = vsel %vm955, %v930, %v948
        %v968 = vsel %vm955, %v931, %v949
        %v969 = vsel %vm955, %v932, %v950
        %v970 = vsel %vm955, %v933, %v951
        %v971 = vsel %vm955, %v934, %v952
        %v972 = vsel %vm955, %v935, %v953
        %v973 = vsel %vm955, %v936, %v954
        %v974 = vsel %vm955, %v937, %v919
        %v975 = vsel %vm955, %v938, %v920
        %v976 = vsel %vm955, %v939, %v921
        %v977 = vsel %vm955, %v940, %v922
        %v978 = vsel %vm955, %v941, %v923
        %v979 = vsel %vm955, %v942, %v924
        %v980 = vsel %vm955, %v943, %v925
        %v981 = vsel %vm955, %v944, %v926
        %v982 = vsel %vm955, %v945, %v927
        %v983 = vsel %vm955, %v946, %v928
        %v984 = vsel %vm955, %v947, %v929
        %v985 = vsel %vm955, %v948, %v930
        %v986 = vsel %vm955, %v949, %v931
        %v987 = vsel %vm955, %v950, %v932
        %v988 = vsel %vm955, %v951, %v933
        %v989 = vsel %vm955, %v952, %v934
        %v990 = vsel %vm955, %v953, %v935
        %v991 = vsel %vm955, %v954, %v936
        %v992 = vsel %vm917, 1, 0
        %v993 = vsel %vm918, 1, 0
        %vm994 = vcmp.eq.s32.totalorder %v992, 1
        %vm995 = vcmp.eq.s32.totalorder %v993, 1
        %v996 = vsel %vm994, %v974, 0.0
        %v997 = vsel %vm995, %v956, 0.0
        %v998 = vsel %vm994, %v975, 0.0
        %v999 = vsel %vm995, %v957, 0.0
        %v1000 = vsel %vm994, %v976, 0.0
        %v1001 = vsel %vm995, %v958, 0.0
        %v1002 = vsel %vm994, %v977, 0.0
        %v1003 = vsel %vm995, %v959, 0.0
        %v1004 = vsel %vm994, %v978, 0.0
        %v1005 = vsel %vm995, %v960, 0.0
        %v1006 = vsel %vm994, %v979, 0.0
        %v1007 = vsel %vm995, %v961, 0.0
        %v1008 = vsel %vm994, %v980, 0.0
        %v1009 = vsel %vm995, %v962, 0.0
        %v1010 = vsel %vm994, %v981, 0.0
        %v1011 = vsel %vm995, %v963, 0.0
        %v1012 = vsel %vm994, %v982, 0.0
        %v1013 = vsel %vm995, %v964, 0.0
        %v1014 = vsel %vm994, %v983, 0.0
        %v1015 = vsel %vm995, %v965, 0.0
        %v1016 = vsel %vm994, %v984, 0.0
        %v1017 = vsel %vm995, %v966, 0.0
        %v1018 = vsel %vm994, %v985, 0.0
        %v1019 = vsel %vm995, %v967, 0.0
        %v1020 = vsel %vm994, %v986, 0.0
        %v1021 = vsel %vm995, %v968, 0.0
        %v1022 = vsel %vm994, %v987, 0.0
        %v1023 = vsel %vm995, %v969, 0.0
        %v1024 = vsel %vm994, %v988, 0.0
        %v1025 = vsel %vm995, %v970, 0.0
        %v1026 = vsel %vm994, %v989, 0.0
        %v1027 = vsel %vm995, %v971, 0.0
        %v1028 = vsel %vm994, %v990, 0.0
        %v1029 = vsel %vm995, %v972, 0.0
        %v1030 = vsel %vm994, %v991, 0.0
        %v1031 = vsel %vm995, %v973, 0.0
        %vm1032 = vcmp.ne.s32.totalorder %v915, 15
        %vm1033 = vcmp.ne.s32.totalorder %v916, 15
        %v1034 = vrot.slane %v567, 1
        %v1035 = vrot.slane %v853, 1
        %v1036 = vrot.slane %v855, 1
        %v1037 = vrot.slane %v857, 1
        %v1038 = vrot.slane %v859, 1
        %v1039 = vrot.slane %v861, 1
        %v1040 = vrot.slane %v863, 1
        %v1041 = vrot.slane %v865, 1
        %v1042 = vrot.slane %v867, 1
        %v1043 = vrot.slane %v869, 1
        %v1044 = vrot.slane %v871, 1
        %v1045 = vrot.slane %v873, 1
        %v1046 = vrot.slane %v875, 1
        %v1047 = vrot.slane %v877, 1
        %v1048 = vrot.slane %v879, 1
        %v1049 = vrot.slane %v881, 1
        %v1050 = vrot.slane %v883, 1
        %v1051 = vrot.slane %v912, 1
        %v1052 = vrot.slane %v568, 1
        %v1053 = vrot.slane %v854, 1
        %v1054 = vrot.slane %v856, 1
        %v1055 = vrot.slane %v858, 1
        %v1056 = vrot.slane %v860, 1
        %v1057 = vrot.slane %v862, 1
        %v1058 = vrot.slane %v864, 1
        %v1059 = vrot.slane %v866, 1
        %v1060 = vrot.slane %v868, 1
        %v1061 = vrot.slane %v870, 1
        %v1062 = vrot.slane %v872, 1
        %v1063 = vrot.slane %v874, 1
        %v1064 = vrot.slane %v876, 1
        %v1065 = vrot.slane %v878, 1
        %v1066 = vrot.slane %v880, 1
        %v1067 = vrot.slane %v882, 1
        %v1068 = vrot.slane %v884, 1
        %v1069 = vrot.slane %v913, 1
        %vm1070 = vcmp.lt.s32.totalorder %v915, 7
        %v1071 = vsel %vm1070, %v1034, %v1052
        %v1072 = vsel %vm1070, %v1035, %v1053
        %v1073 = vsel %vm1070, %v1036, %v1054
        %v1074 = vsel %vm1070, %v1037, %v1055
        %v1075 = vsel %vm1070, %v1038, %v1056
        %v1076 = vsel %vm1070, %v1039, %v1057
        %v1077 = vsel %vm1070, %v1040, %v1058
        %v1078 = vsel %vm1070, %v1041, %v1059
        %v1079 = vsel %vm1070, %v1042, %v1060
        %v1080 = vsel %vm1070, %v1043, %v1061
        %v1081 = vsel %vm1070, %v1044, %v1062
        %v1082 = vsel %vm1070, %v1045, %v1063
        %v1083 = vsel %vm1070, %v1046, %v1064
        %v1084 = vsel %vm1070, %v1047, %v1065
        %v1085 = vsel %vm1070, %v1048, %v1066
        %v1086 = vsel %vm1070, %v1049, %v1067
        %v1087 = vsel %vm1070, %v1050, %v1068
        %v1088 = vsel %vm1070, %v1051, %v1069
        %v1089 = vsel %vm1070, %v1052, %v1034
        %v1090 = vsel %vm1070, %v1053, %v1035
        %v1091 = vsel %vm1070, %v1054, %v1036
        %v1092 = vsel %vm1070, %v1055, %v1037
        %v1093 = vsel %vm1070, %v1056, %v1038
        %v1094 = vsel %vm1070, %v1057, %v1039
        %v1095 = vsel %vm1070, %v1058, %v1040
        %v1096 = vsel %vm1070, %v1059, %v1041
        %v1097 = vsel %vm1070, %v1060, %v1042
        %v1098 = vsel %vm1070, %v1061, %v1043
        %v1099 = vsel %vm1070, %v1062, %v1044
        %v1100 = vsel %vm1070, %v1063, %v1045
        %v1101 = vsel %vm1070, %v1064, %v1046
        %v1102 = vsel %vm1070, %v1065, %v1047
        %v1103 = vsel %vm1070, %v1066, %v1048
        %v1104 = vsel %vm1070, %v1067, %v1049
        %v1105 = vsel %vm1070, %v1068, %v1050
        %v1106 = vsel %vm1070, %v1069, %v1051
        %v1107 = vsel %vm1032, 1, 0
        %v1108 = vsel %vm1033, 1, 0
        %vm1109 = vcmp.eq.s32.totalorder %v1107, 1
        %vm1110 = vcmp.eq.s32.totalorder %v1108, 1
        %v1111 = vsel %vm1109, %v1071, 0.0
        %v1112 = vsel %vm1110, %v1089, 0.0
        %v1113 = vsel %vm1109, %v1072, 0.0
        %v1114 = vsel %vm1110, %v1090, 0.0
        %v1115 = vsel %vm1109, %v1073, 0.0
        %v1116 = vsel %vm1110, %v1091, 0.0
        %v1117 = vsel %vm1109, %v1074, 0.0
        %v1118 = vsel %vm1110, %v1092, 0.0
        %v1119 = vsel %vm1109, %v1075, 0.0
        %v1120 = vsel %vm1110, %v1093, 0.0
        %v1121 = vsel %vm1109, %v1076, 0.0
        %v1122 = vsel %vm1110, %v1094, 0.0
        %v1123 = vsel %vm1109, %v1077, 0.0
        %v1124 = vsel %vm1110, %v1095, 0.0
        %v1125 = vsel %vm1109, %v1078, 0.0
        %v1126 = vsel %vm1110, %v1096, 0.0
        %v1127 = vsel %vm1109, %v1079, 0.0
        %v1128 = vsel %vm1110, %v1097, 0.0
        %v1129 = vsel %vm1109, %v1080, 0.0
        %v1130 = vsel %vm1110, %v1098, 0.0
        %v1131 = vsel %vm1109, %v1081, 0.0
        %v1132 = vsel %vm1110, %v1099, 0.0
        %v1133 = vsel %vm1109, %v1082, 0.0
        %v1134 = vsel %vm1110, %v1100, 0.0
        %v1135 = vsel %vm1109, %v1083, 0.0
        %v1136 = vsel %vm1110, %v1101, 0.0
        %v1137 = vsel %vm1109, %v1084, 0.0
        %v1138 = vsel %vm1110, %v1102, 0.0
        %v1139 = vsel %vm1109, %v1085, 0.0
        %v1140 = vsel %vm1110, %v1103, 0.0
        %v1141 = vsel %vm1109, %v1086, 0.0
        %v1142 = vsel %vm1110, %v1104, 0.0
        %v1143 = vsel %vm1109, %v1087, 0.0
        %v1144 = vsel %vm1110, %v1105, 0.0
        %v1145 = vsel %vm1109, %v1088, 0.0
        %v1146 = vsel %vm1110, %v1106, 0.0
        %v1147 = vpack.c.bf16 %v567, %v567
        %v1148 = vpack.c.bf16 %v568, %v568
        %v1149 = vpack.c.bf16 %v853, %v853
        %v1150 = vpack.c.bf16 %v854, %v854
        %v1151 = vpack.c.bf16 %v855, %v855
        %v1152 = vpack.c.bf16 %v856, %v856
        %v1153 = vpack.c.bf16 %v857, %v857
        %v1154 = vpack.c.bf16 %v858, %v858
        %v1155 = vpack.c.bf16 %v859, %v859
        %v1156 = vpack.c.bf16 %v860, %v860
        %v1157 = vpack.c.bf16 %v861, %v861
        %v1158 = vpack.c.bf16 %v862, %v862
        %v1159 = vpack.c.bf16 %v863, %v863
        %v1160 = vpack.c.bf16 %v864, %v864
        %v1161 = vpack.c.bf16 %v865, %v865
        %v1162 = vpack.c.bf16 %v866, %v866
        %v1163 = vpack.c.bf16 %v867, %v867
        %v1164 = vpack.c.bf16 %v868, %v868
        %v1165 = vpack.c.bf16 %v869, %v869
        %v1166 = vpack.c.bf16 %v870, %v870
        %v1167 = vpack.c.bf16 %v871, %v871
        %v1168 = vpack.c.bf16 %v872, %v872
        %v1169 = vpack.c.bf16 %v873, %v873
        %v1170 = vpack.c.bf16 %v874, %v874
        %v1171 = vpack.c.bf16 %v875, %v875
        %v1172 = vpack.c.bf16 %v876, %v876
        %v1173 = vpack.c.bf16 %v877, %v877
        %v1174 = vpack.c.bf16 %v878, %v878
        %v1175 = vpack.c.bf16 %v879, %v879
        %v1176 = vpack.c.bf16 %v880, %v880
        %v1177 = vpack.c.bf16 %v881, %v881
        %v1178 = vpack.c.bf16 %v882, %v882
        %v1179 = vpack.c.bf16 %v883, %v883
        %v1180 = vpack.c.bf16 %v884, %v884
        %v1181 = vpack.c.bf16 %v912, %v912
        %v1182 = vpack.c.bf16 %v913, %v913
        %v1183 = vpack.c.bf16 %v996, %v996
        %v1184 = vpack.c.bf16 %v997, %v997
        %v1185 = vpack.c.bf16 %v998, %v998
        %v1186 = vpack.c.bf16 %v999, %v999
        %v1187 = vpack.c.bf16 %v1000, %v1000
        %v1188 = vpack.c.bf16 %v1001, %v1001
        %v1189 = vpack.c.bf16 %v1002, %v1002
        %v1190 = vpack.c.bf16 %v1003, %v1003
        %v1191 = vpack.c.bf16 %v1004, %v1004
        %v1192 = vpack.c.bf16 %v1005, %v1005
        %v1193 = vpack.c.bf16 %v1006, %v1006
        %v1194 = vpack.c.bf16 %v1007, %v1007
        %v1195 = vpack.c.bf16 %v1008, %v1008
        %v1196 = vpack.c.bf16 %v1009, %v1009
        %v1197 = vpack.c.bf16 %v1010, %v1010
        %v1198 = vpack.c.bf16 %v1011, %v1011
        %v1199 = vpack.c.bf16 %v1012, %v1012
        %v1200 = vpack.c.bf16 %v1013, %v1013
        %v1201 = vpack.c.bf16 %v1014, %v1014
        %v1202 = vpack.c.bf16 %v1015, %v1015
        %v1203 = vpack.c.bf16 %v1016, %v1016
        %v1204 = vpack.c.bf16 %v1017, %v1017
        %v1205 = vpack.c.bf16 %v1018, %v1018
        %v1206 = vpack.c.bf16 %v1019, %v1019
        %v1207 = vpack.c.bf16 %v1020, %v1020
        %v1208 = vpack.c.bf16 %v1021, %v1021
        %v1209 = vpack.c.bf16 %v1022, %v1022
        %v1210 = vpack.c.bf16 %v1023, %v1023
        %v1211 = vpack.c.bf16 %v1024, %v1024
        %v1212 = vpack.c.bf16 %v1025, %v1025
        %v1213 = vpack.c.bf16 %v1026, %v1026
        %v1214 = vpack.c.bf16 %v1027, %v1027
        %v1215 = vpack.c.bf16 %v1028, %v1028
        %v1216 = vpack.c.bf16 %v1029, %v1029
        %v1217 = vpack.c.bf16 %v1030, %v1030
        %v1218 = vpack.c.bf16 %v1031, %v1031
        %v1219 = vpack.c.bf16 %v1111, %v1111
        %v1220 = vpack.c.bf16 %v1112, %v1112
        %v1221 = vpack.c.bf16 %v1113, %v1113
        %v1222 = vpack.c.bf16 %v1114, %v1114
        %v1223 = vpack.c.bf16 %v1115, %v1115
        %v1224 = vpack.c.bf16 %v1116, %v1116
        %v1225 = vpack.c.bf16 %v1117, %v1117
        %v1226 = vpack.c.bf16 %v1118, %v1118
        %v1227 = vpack.c.bf16 %v1119, %v1119
        %v1228 = vpack.c.bf16 %v1120, %v1120
        %v1229 = vpack.c.bf16 %v1121, %v1121
        %v1230 = vpack.c.bf16 %v1122, %v1122
        %v1231 = vpack.c.bf16 %v1123, %v1123
        %v1232 = vpack.c.bf16 %v1124, %v1124
        %v1233 = vpack.c.bf16 %v1125, %v1125
        %v1234 = vpack.c.bf16 %v1126, %v1126
        %v1235 = vpack.c.bf16 %v1127, %v1127
        %v1236 = vpack.c.bf16 %v1128, %v1128
        %v1237 = vpack.c.bf16 %v1129, %v1129
        %v1238 = vpack.c.bf16 %v1130, %v1130
        %v1239 = vpack.c.bf16 %v1131, %v1131
        %v1240 = vpack.c.bf16 %v1132, %v1132
        %v1241 = vpack.c.bf16 %v1133, %v1133
        %v1242 = vpack.c.bf16 %v1134, %v1134
        %v1243 = vpack.c.bf16 %v1135, %v1135
        %v1244 = vpack.c.bf16 %v1136, %v1136
        %v1245 = vpack.c.bf16 %v1137, %v1137
        %v1246 = vpack.c.bf16 %v1138, %v1138
        %v1247 = vpack.c.bf16 %v1139, %v1139
        %v1248 = vpack.c.bf16 %v1140, %v1140
        %v1249 = vpack.c.bf16 %v1141, %v1141
        %v1250 = vpack.c.bf16 %v1142, %v1142
        %v1251 = vpack.c.bf16 %v1143, %v1143
        %v1252 = vpack.c.bf16 %v1144, %v1144
        %v1253 = vpack.c.bf16 %v1145, %v1145
        %v1254 = vpack.c.bf16 %v1146, %v1146
        %v1287 = vunpack.c.l.b16 %v1183
        %v1288 = vunpack.c.l.b16 %v1184
        %v1289 = vunpack.c.l.b16 %v1185
        %v1290 = vunpack.c.l.b16 %v1186
        %v1291 = vunpack.c.l.b16 %v1187
        %v1292 = vunpack.c.l.b16 %v1188
        %v1293 = vunpack.c.l.b16 %v1189
        %v1294 = vunpack.c.l.b16 %v1190
        %v1295 = vunpack.c.l.b16 %v1191
        %v1296 = vunpack.c.l.b16 %v1192
        %v1297 = vunpack.c.l.b16 %v1193
        %v1298 = vunpack.c.l.b16 %v1194
        %v1299 = vunpack.c.l.b16 %v1195
        %v1300 = vunpack.c.l.b16 %v1196
        %v1301 = vunpack.c.l.b16 %v1197
        %v1302 = vunpack.c.l.b16 %v1198
        %v1303 = vunpack.c.l.b16 %v1199
        %v1304 = vunpack.c.l.b16 %v1200
        %v1305 = vunpack.c.l.b16 %v1201
        %v1306 = vunpack.c.l.b16 %v1202
        %v1307 = vunpack.c.l.b16 %v1203
        %v1308 = vunpack.c.l.b16 %v1204
        %v1309 = vunpack.c.l.b16 %v1205
        %v1310 = vunpack.c.l.b16 %v1206
        %v1311 = vunpack.c.l.b16 %v1207
        %v1312 = vunpack.c.l.b16 %v1208
        %v1313 = vunpack.c.l.b16 %v1209
        %v1314 = vunpack.c.l.b16 %v1210
        %v1315 = vunpack.c.l.b16 %v1211
        %v1316 = vunpack.c.l.b16 %v1212
        %v1317 = vunpack.c.l.b16 %v1213
        %v1318 = vunpack.c.l.b16 %v1214
        %v1319 = vpack.c.b16 %v1288, %v1287
        %v1320 = vpack.c.b16 %v1290, %v1289
        %v1321 = vpack.c.b16 %v1292, %v1291
        %v1322 = vpack.c.b16 %v1294, %v1293
        %v1323 = vpack.c.b16 %v1296, %v1295
        %v1324 = vpack.c.b16 %v1298, %v1297
        %v1325 = vpack.c.b16 %v1300, %v1299
        %v1326 = vpack.c.b16 %v1302, %v1301
        %v1327 = vpack.c.b16 %v1304, %v1303
        %v1328 = vpack.c.b16 %v1306, %v1305
        %v1329 = vpack.c.b16 %v1308, %v1307
        %v1330 = vpack.c.b16 %v1310, %v1309
        %v1331 = vpack.c.b16 %v1312, %v1311
        %v1332 = vpack.c.b16 %v1314, %v1313
        %v1333 = vpack.c.b16 %v1316, %v1315
        %v1334 = vpack.c.b16 %v1318, %v1317
        %v1383 = vunpack.c.l.b16 %v1147
        %v1384 = vunpack.c.l.b16 %v1148
        %v1385 = vunpack.c.l.b16 %v1149
        %v1386 = vunpack.c.l.b16 %v1150
        %v1387 = vunpack.c.l.b16 %v1151
        %v1388 = vunpack.c.l.b16 %v1152
        %v1389 = vunpack.c.l.b16 %v1153
        %v1390 = vunpack.c.l.b16 %v1154
        %v1391 = vunpack.c.l.b16 %v1155
        %v1392 = vunpack.c.l.b16 %v1156
        %v1393 = vunpack.c.l.b16 %v1157
        %v1394 = vunpack.c.l.b16 %v1158
        %v1395 = vunpack.c.l.b16 %v1159
        %v1396 = vunpack.c.l.b16 %v1160
        %v1397 = vunpack.c.l.b16 %v1161
        %v1398 = vunpack.c.l.b16 %v1162
        %v1399 = vunpack.c.l.b16 %v1163
        %v1400 = vunpack.c.l.b16 %v1164
        %v1401 = vunpack.c.l.b16 %v1165
        %v1402 = vunpack.c.l.b16 %v1166
        %v1403 = vunpack.c.l.b16 %v1167
        %v1404 = vunpack.c.l.b16 %v1168
        %v1405 = vunpack.c.l.b16 %v1169
        %v1406 = vunpack.c.l.b16 %v1170
        %v1407 = vunpack.c.l.b16 %v1171
        %v1408 = vunpack.c.l.b16 %v1172
        %v1409 = vunpack.c.l.b16 %v1173
        %v1410 = vunpack.c.l.b16 %v1174
        %v1411 = vunpack.c.l.b16 %v1175
        %v1412 = vunpack.c.l.b16 %v1176
        %v1413 = vunpack.c.l.b16 %v1177
        %v1414 = vunpack.c.l.b16 %v1178
        %v1415 = vpack.c.b16 %v1384, %v1383
        %v1416 = vpack.c.b16 %v1386, %v1385
        %v1417 = vpack.c.b16 %v1388, %v1387
        %v1418 = vpack.c.b16 %v1390, %v1389
        %v1419 = vpack.c.b16 %v1392, %v1391
        %v1420 = vpack.c.b16 %v1394, %v1393
        %v1421 = vpack.c.b16 %v1396, %v1395
        %v1422 = vpack.c.b16 %v1398, %v1397
        %v1423 = vpack.c.b16 %v1400, %v1399
        %v1424 = vpack.c.b16 %v1402, %v1401
        %v1425 = vpack.c.b16 %v1404, %v1403
        %v1426 = vpack.c.b16 %v1406, %v1405
        %v1427 = vpack.c.b16 %v1408, %v1407
        %v1428 = vpack.c.b16 %v1410, %v1409
        %v1429 = vpack.c.b16 %v1412, %v1411
        %v1430 = vpack.c.b16 %v1414, %v1413
        %v1479 = vunpack.c.l.b16 %v1219
        %v1480 = vunpack.c.l.b16 %v1220
        %v1481 = vunpack.c.l.b16 %v1221
        %v1482 = vunpack.c.l.b16 %v1222
        %v1483 = vunpack.c.l.b16 %v1223
        %v1484 = vunpack.c.l.b16 %v1224
        %v1485 = vunpack.c.l.b16 %v1225
        %v1486 = vunpack.c.l.b16 %v1226
        %v1487 = vunpack.c.l.b16 %v1227
        %v1488 = vunpack.c.l.b16 %v1228
        %v1489 = vunpack.c.l.b16 %v1229
        %v1490 = vunpack.c.l.b16 %v1230
        %v1491 = vunpack.c.l.b16 %v1231
        %v1492 = vunpack.c.l.b16 %v1232
        %v1493 = vunpack.c.l.b16 %v1233
        %v1494 = vunpack.c.l.b16 %v1234
        %v1495 = vunpack.c.l.b16 %v1235
        %v1496 = vunpack.c.l.b16 %v1236
        %v1497 = vunpack.c.l.b16 %v1237
        %v1498 = vunpack.c.l.b16 %v1238
        %v1499 = vunpack.c.l.b16 %v1239
        %v1500 = vunpack.c.l.b16 %v1240
        %v1501 = vunpack.c.l.b16 %v1241
        %v1502 = vunpack.c.l.b16 %v1242
        %v1503 = vunpack.c.l.b16 %v1243
        %v1504 = vunpack.c.l.b16 %v1244
        %v1505 = vunpack.c.l.b16 %v1245
        %v1506 = vunpack.c.l.b16 %v1246
        %v1507 = vunpack.c.l.b16 %v1247
        %v1508 = vunpack.c.l.b16 %v1248
        %v1509 = vunpack.c.l.b16 %v1249
        %v1510 = vunpack.c.l.b16 %v1250
        %v1511 = vpack.c.b16 %v1480, %v1479
        %v1512 = vpack.c.b16 %v1482, %v1481
        %v1513 = vpack.c.b16 %v1484, %v1483
        %v1514 = vpack.c.b16 %v1486, %v1485
        %v1515 = vpack.c.b16 %v1488, %v1487
        %v1516 = vpack.c.b16 %v1490, %v1489
        %v1517 = vpack.c.b16 %v1492, %v1491
        %v1518 = vpack.c.b16 %v1494, %v1493
        %v1519 = vpack.c.b16 %v1496, %v1495
        %v1520 = vpack.c.b16 %v1498, %v1497
        %v1521 = vpack.c.b16 %v1500, %v1499
        %v1522 = vpack.c.b16 %v1502, %v1501
        %v1523 = vpack.c.b16 %v1504, %v1503
        %v1524 = vpack.c.b16 %v1506, %v1505
        %v1525 = vpack.c.b16 %v1508, %v1507
        %v1526 = vpack.c.b16 %v1510, %v1509
        %v1545 = vunpack.c.l.b16 %v1215
        %v1546 = vunpack.c.l.b16 %v1216
        %v1547 = vpack.c.b16 %v1546, %v1545
        %v1551 = vunpack.c.l.b16 %v1179
        %v1552 = vunpack.c.l.b16 %v1180
        %v1553 = vpack.c.b16 %v1552, %v1551
        %v1557 = vunpack.c.l.b16 %v1251
        %v1558 = vunpack.c.l.b16 %v1252
        %v1559 = vpack.c.b16 %v1558, %v1557
        %v1563 = vunpack.c.l.b16 %v1217
        %v1564 = vunpack.c.l.b16 %v1218
        %v1565 = vpack.c.b16 %v1564, %v1563
        %v1569 = vunpack.c.l.b16 %v1181
        %v1570 = vunpack.c.l.b16 %v1182
        %v1571 = vpack.c.b16 %v1570, %v1569
        %v1575 = vunpack.c.l.b16 %v1253
        %v1576 = vunpack.c.l.b16 %v1254
        %v1577 = vpack.c.b16 %v1576, %v1575
        %v1579 = vld [vmem:[#allocation7] sm:$0xf]
        %v1580 = vld [vmem:[#allocation7 + $0x4] sm:$0xf]
        %v1581 = vld [vmem:[#allocation7 + $0x8] sm:$0xf]
        %v1582 = vld [vmem:[#allocation7 + $0xc] sm:$0xf]
        %v1583 = vld [vmem:[#allocation7 + $0x10] sm:$0xf]
        %v1584 = vld [vmem:[#allocation7 + $0x14] sm:$0xf]
        %v1585 = vld [vmem:[#allocation7 + $0x18] sm:$0xf]
        %v1586 = vld [vmem:[#allocation7 + $0x1c] sm:$0xf]
        %v1587 = vld [vmem:[#allocation7 + $0x20] sm:$0xf]
        %v1588 = vld [vmem:[#allocation7 + $0x24] sm:$0xf]
        %v1589 = vld [vmem:[#allocation7 + $0x28] sm:$0xf]
        %v1590 = vld [vmem:[#allocation7 + $0x2c] sm:$0xf]
        %v1591 = vld [vmem:[#allocation7 + $0x30] sm:$0xf]
        %v1592 = vld [vmem:[#allocation7 + $0x34] sm:$0xf]
        %v1593 = vld [vmem:[#allocation7 + $0x38] sm:$0xf]
        %v1594 = vld [vmem:[#allocation7 + $0x3c] sm:$0xf]
        %v1595 = vld [vmem:[#allocation7 + $0x40] sm:$0xf]
        %v1596 = vld [vmem:[#allocation7 + $0x44] sm:$0xf]
        %v1597 = vld [vmem:[#allocation7 + $0x48] sm:$0xf]
        %v1598 = vld [vmem:[#allocation7 + $0x4c] sm:$0xf]
        %v1599 = vld [vmem:[#allocation7 + $0x50] sm:$0xf]
        %v1600 = vld [vmem:[#allocation7 + $0x54] sm:$0xf]
        %v1601 = vld [vmem:[#allocation7 + $0x58] sm:$0xf]
        %v1602 = vld [vmem:[#allocation7 + $0x5c] sm:$0xf]
        %v1603 = vld [vmem:[#allocation7 + $0x60] sm:$0xf]
        %v1604 = vld [vmem:[#allocation7 + $0x64] sm:$0xf]
        %v1605 = vld [vmem:[#allocation7 + $0x68] sm:$0xf]
        %v1606 = vld [vmem:[#allocation7 + $0x6c] sm:$0xf]
        %v1607 = vld [vmem:[#allocation7 + $0x70] sm:$0xf]
        %v1608 = vld [vmem:[#allocation7 + $0x74] sm:$0xf]
        %v1609 = vld [vmem:[#allocation7 + $0x78] sm:$0xf]
        %v1610 = vld [vmem:[#allocation7 + $0x7c] sm:$0xf]
        %v1611 = vld [vmem:[#allocation7 + $0x80] sm:$0xf]
        %v1612 = vld [vmem:[#allocation7 + $0x84] sm:$0xf]
        %v1613 = vld [vmem:[#allocation7 + $0x88] sm:$0xf]
        %v1614 = vld [vmem:[#allocation7 + $0x8c] sm:$0xf]
        %v1615 = vld [vmem:[#allocation7 + $0x90] sm:$0xf]
        %v1616 = vld [vmem:[#allocation7 + $0x94] sm:$0xf]
        %v1617 = vld [vmem:[#allocation7 + $0x98] sm:$0xf]
        %v1618 = vld [vmem:[#allocation7 + $0x9c] sm:$0xf]
        %v1619 = vld [vmem:[#allocation7 + $0xa0] sm:$0xf]
        %v1620 = vld [vmem:[#allocation7 + $0xa4] sm:$0xf]
        %v1621 = vld [vmem:[#allocation7 + $0xa8] sm:$0xf]
        %v1622 = vld [vmem:[#allocation7 + $0xac] sm:$0xf]
        %v1623 = vld [vmem:[#allocation7 + $0xb0] sm:$0xf]
        %v1624 = vld [vmem:[#allocation7 + $0xb4] sm:$0xf]
        %v1625 = vld [vmem:[#allocation7 + $0xb8] sm:$0xf]
        %v1626 = vld [vmem:[#allocation7 + $0xbc] sm:$0xf]
        %v1627 = vld [vmem:[#allocation7 + $0xc0] sm:$0xf]
        %v1628 = vld [vmem:[#allocation7 + $0xc4] sm:$0xf]
        %v1629 = vld [vmem:[#allocation7 + $0xc8] sm:$0xf]
        %v1630 = vld [vmem:[#allocation7 + $0xcc] sm:$0xf]
        %v1631 = vld [vmem:[#allocation7 + $0xd0] sm:$0xf]
        %v1632 = vld [vmem:[#allocation7 + $0xd4] sm:$0xf]
        %v1633 = vld [vmem:[#allocation7 + $0xd8] sm:$0xf]
        %v1634 = vld [vmem:[#allocation7 + $0xdc] sm:$0xf]
        %v1635 = vld [vmem:[#allocation7 + $0xe0] sm:$0xf]
        %v1636 = vld [vmem:[#allocation7 + $0xe4] sm:$0xf]
        %v1637 = vld [vmem:[#allocation7 + $0xe8] sm:$0xf]
        %v1638 = vld [vmem:[#allocation7 + $0xec] sm:$0xf]
        %v1639 = vld [vmem:[#allocation7 + $0xf0] sm:$0xf]
        %v1640 = vld [vmem:[#allocation7 + $0xf4] sm:$0xf]
        %v1641 = vld [vmem:[#allocation7 + $0xf8] sm:$0xf]
        %v1642 = vld [vmem:[#allocation7 + $0xfc] sm:$0xf]
        %v1643 = vld [vmem:[#allocation7 + $0x100] sm:$0xf]
        %v1644 = vld [vmem:[#allocation7 + $0x104] sm:$0xf]
        %v1645 = vld [vmem:[#allocation7 + $0x108] sm:$0xf]
        %v1646 = vld [vmem:[#allocation7 + $0x10c] sm:$0xf]
        %v1647 = vld [vmem:[#allocation7 + $0x110] sm:$0xf]
        %v1648 = vld [vmem:[#allocation7 + $0x114] sm:$0xf]
        %v1649 = vld [vmem:[#allocation7 + $0x118] sm:$0xf]
        %v1650 = vld [vmem:[#allocation7 + $0x11c] sm:$0xf]
        %v1651 = vld [vmem:[#allocation7 + $0x120] sm:$0xf]
        %v1652 = vld [vmem:[#allocation7 + $0x124] sm:$0xf]
        %v1653 = vld [vmem:[#allocation7 + $0x128] sm:$0xf]
        %v1654 = vld [vmem:[#allocation7 + $0x12c] sm:$0xf]
        %v1655 = vld [vmem:[#allocation7 + $0x130] sm:$0xf]
        %v1656 = vld [vmem:[#allocation7 + $0x134] sm:$0xf]
        %v1657 = vld [vmem:[#allocation7 + $0x138] sm:$0xf]
        %v1658 = vld [vmem:[#allocation7 + $0x13c] sm:$0xf]
        %v1659 = vld [vmem:[#allocation7 + $0x140] sm:$0xf]
        %v1660 = vld [vmem:[#allocation7 + $0x144] sm:$0xf]
        %v1661 = vld [vmem:[#allocation7 + $0x148] sm:$0xf]
        %v1662 = vld [vmem:[#allocation7 + $0x14c] sm:$0xf]
        %v1663 = vld [vmem:[#allocation7 + $0x150] sm:$0xf]
        %v1664 = vld [vmem:[#allocation7 + $0x154] sm:$0xf]
        %v1665 = vld [vmem:[#allocation7 + $0x158] sm:$0xf]
        %v1666 = vld [vmem:[#allocation7 + $0x15c] sm:$0xf]
        %v1667 = vld [vmem:[#allocation7 + $0x160] sm:$0xf]
        %v1668 = vld [vmem:[#allocation7 + $0x164] sm:$0xf]
        %v1669 = vld [vmem:[#allocation7 + $0x168] sm:$0xf]
        %v1670 = vld [vmem:[#allocation7 + $0x16c] sm:$0xf]
        %v1671 = vld [vmem:[#allocation7 + $0x170] sm:$0xf]
        %v1672 = vld [vmem:[#allocation7 + $0x174] sm:$0xf]
        %v1673 = vld [vmem:[#allocation7 + $0x178] sm:$0xf]
        %v1674 = vld [vmem:[#allocation7 + $0x17c] sm:$0xf]
        %v1675 = vld [vmem:[#allocation7 + $0x180] sm:$0xf]
        %v1676 = vld [vmem:[#allocation7 + $0x184] sm:$0xf]
        %v1677 = vld [vmem:[#allocation7 + $0x188] sm:$0xf]
        %v1678 = vld [vmem:[#allocation7 + $0x18c] sm:$0xf]
        %v1679 = vld [vmem:[#allocation7 + $0x190] sm:$0xf]
        %v1680 = vld [vmem:[#allocation7 + $0x194] sm:$0xf]
        %v1681 = vld [vmem:[#allocation7 + $0x198] sm:$0xf]
        %v1682 = vld [vmem:[#allocation7 + $0x19c] sm:$0xf]
        %v1683 = vld [vmem:[#allocation7 + $0x1a0] sm:$0xf]
        %v1684 = vld [vmem:[#allocation7 + $0x1a4] sm:$0xf]
        %v1685 = vld [vmem:[#allocation7 + $0x1a8] sm:$0xf]
        %v1686 = vld [vmem:[#allocation7 + $0x1ac] sm:$0xf]
        %v1687 = vld [vmem:[#allocation7 + $0x1b0] sm:$0xf]
        %v1688 = vld [vmem:[#allocation7 + $0x1b4] sm:$0xf]
        %v1689 = vld [vmem:[#allocation7 + $0x1b8] sm:$0xf]
        %v1690 = vld [vmem:[#allocation7 + $0x1bc] sm:$0xf]
        %v1691 = vld [vmem:[#allocation7 + $0x1c0] sm:$0xf]
        %v1692 = vld [vmem:[#allocation7 + $0x1c4] sm:$0xf]
        %v1693 = vld [vmem:[#allocation7 + $0x1c8] sm:$0xf]
        %v1694 = vld [vmem:[#allocation7 + $0x1cc] sm:$0xf]
        %v1695 = vld [vmem:[#allocation7 + $0x1d0] sm:$0xf]
        %v1696 = vld [vmem:[#allocation7 + $0x1d4] sm:$0xf]
        %v1697 = vld [vmem:[#allocation7 + $0x1d8] sm:$0xf]
        %v1698 = vld [vmem:[#allocation7 + $0x1dc] sm:$0xf]
        %v1699 = vld [vmem:[#allocation7 + $0x1e0] sm:$0xf]
        %v1700 = vld [vmem:[#allocation7 + $0x1e4] sm:$0xf]
        %v1701 = vld [vmem:[#allocation7 + $0x1e8] sm:$0xf]
        %v1702 = vld [vmem:[#allocation7 + $0x1ec] sm:$0xf]
        %v1703 = vld [vmem:[#allocation7 + $0x1f0] sm:$0xf]
        %v1704 = vld [vmem:[#allocation7 + $0x1f4] sm:$0xf]
        %v1705 = vld [vmem:[#allocation7 + $0x1f8] sm:$0xf]
        %v1706 = vld [vmem:[#allocation7 + $0x1fc] sm:$0xf]
        %v1707 = vld [vmem:[#allocation7 + $0x200] sm:$0xf]
        %v1708 = vld [vmem:[#allocation7 + $0x204] sm:$0xf]
        %v1709 = vld [vmem:[#allocation7 + $0x208] sm:$0xf]
        %v1710 = vld [vmem:[#allocation7 + $0x20c] sm:$0xf]
        %v1711 = vld [vmem:[#allocation7 + $0x210] sm:$0xf]
        %v1712 = vld [vmem:[#allocation7 + $0x214] sm:$0xf]
        %v1713 = vld [vmem:[#allocation7 + $0x218] sm:$0xf]
        %v1714 = vld [vmem:[#allocation7 + $0x21c] sm:$0xf]
        %v1715 = vld [vmem:[#allocation7 + $0x220] sm:$0xf]
        %v1716 = vld [vmem:[#allocation7 + $0x224] sm:$0xf]
        %v1717 = vld [vmem:[#allocation7 + $0x228] sm:$0xf]
        %v1718 = vld [vmem:[#allocation7 + $0x22c] sm:$0xf]
        %v1719 = vld [vmem:[#allocation7 + $0x230] sm:$0xf]
        %v1720 = vld [vmem:[#allocation7 + $0x234] sm:$0xf]
        %v1721 = vld [vmem:[#allocation7 + $0x238] sm:$0xf]
        %v1722 = vld [vmem:[#allocation7 + $0x23c] sm:$0xf]
        %v1867 = vunpack.c.l.b16 %v1579
        %v1868 = vunpack.c.l.b16 %v1580
        %v1869 = vunpack.c.l.b16 %v1581
        %v1870 = vunpack.c.l.b16 %v1582
        %v1871 = vunpack.c.l.b16 %v1583
        %v1872 = vunpack.c.l.b16 %v1584
        %v1873 = vunpack.c.l.b16 %v1585
        %v1874 = vunpack.c.l.b16 %v1586
        %v1875 = vunpack.c.l.b16 %v1587
        %v1876 = vunpack.c.l.b16 %v1588
        %v1877 = vunpack.c.l.b16 %v1589
        %v1878 = vunpack.c.l.b16 %v1590
        %v1879 = vunpack.c.l.b16 %v1591
        %v1880 = vunpack.c.l.b16 %v1592
        %v1881 = vunpack.c.l.b16 %v1593
        %v1882 = vunpack.c.l.b16 %v1594
        %v1883 = vunpack.c.l.b16 %v1595
        %v1884 = vunpack.c.l.b16 %v1596
        %v1885 = vunpack.c.l.b16 %v1597
        %v1886 = vunpack.c.l.b16 %v1598
        %v1887 = vunpack.c.l.b16 %v1599
        %v1888 = vunpack.c.l.b16 %v1600
        %v1889 = vunpack.c.l.b16 %v1601
        %v1890 = vunpack.c.l.b16 %v1602
        %v1891 = vunpack.c.l.b16 %v1603
        %v1892 = vunpack.c.l.b16 %v1604
        %v1893 = vunpack.c.l.b16 %v1605
        %v1894 = vunpack.c.l.b16 %v1606
        %v1895 = vunpack.c.l.b16 %v1607
        %v1896 = vunpack.c.l.b16 %v1608
        %v1897 = vunpack.c.l.b16 %v1609
        %v1898 = vunpack.c.l.b16 %v1610
        %v1899 = vunpack.c.l.b16 %v1611
        %v1900 = vunpack.c.l.b16 %v1612
        %v1901 = vunpack.c.l.b16 %v1613
        %v1902 = vunpack.c.l.b16 %v1614
        %v1903 = vunpack.c.l.b16 %v1615
        %v1904 = vunpack.c.l.b16 %v1616
        %v1905 = vunpack.c.l.b16 %v1617
        %v1906 = vunpack.c.l.b16 %v1618
        %v1907 = vunpack.c.l.b16 %v1619
        %v1908 = vunpack.c.l.b16 %v1620
        %v1909 = vunpack.c.l.b16 %v1621
        %v1910 = vunpack.c.l.b16 %v1622
        %v1911 = vunpack.c.l.b16 %v1623
        %v1912 = vunpack.c.l.b16 %v1624
        %v1913 = vunpack.c.l.b16 %v1625
        %v1914 = vunpack.c.l.b16 %v1626
        %v1915 = vunpack.c.l.b16 %v1627
        %v1916 = vunpack.c.l.b16 %v1628
        %v1917 = vunpack.c.l.b16 %v1629
        %v1918 = vunpack.c.l.b16 %v1630
        %v1919 = vunpack.c.l.b16 %v1631
        %v1920 = vunpack.c.l.b16 %v1632
        %v1921 = vunpack.c.l.b16 %v1633
        %v1922 = vunpack.c.l.b16 %v1634
        %v1923 = vunpack.c.l.b16 %v1635
        %v1924 = vunpack.c.l.b16 %v1636
        %v1925 = vunpack.c.l.b16 %v1637
        %v1926 = vunpack.c.l.b16 %v1638
        %v1927 = vunpack.c.l.b16 %v1639
        %v1928 = vunpack.c.l.b16 %v1640
        %v1929 = vunpack.c.l.b16 %v1641
        %v1930 = vunpack.c.l.b16 %v1642
        %v1931 = vunpack.c.l.b16 %v1643
        %v1932 = vunpack.c.l.b16 %v1644
        %v1933 = vunpack.c.l.b16 %v1645
        %v1934 = vunpack.c.l.b16 %v1646
        %v1935 = vunpack.c.l.b16 %v1647
        %v1936 = vunpack.c.l.b16 %v1648
        %v1937 = vunpack.c.l.b16 %v1649
        %v1938 = vunpack.c.l.b16 %v1650
        %v1939 = vunpack.c.l.b16 %v1651
        %v1940 = vunpack.c.l.b16 %v1652
        %v1941 = vunpack.c.l.b16 %v1653
        %v1942 = vunpack.c.l.b16 %v1654
        %v1943 = vunpack.c.l.b16 %v1655
        %v1944 = vunpack.c.l.b16 %v1656
        %v1945 = vunpack.c.l.b16 %v1657
        %v1946 = vunpack.c.l.b16 %v1658
        %v1947 = vunpack.c.l.b16 %v1659
        %v1948 = vunpack.c.l.b16 %v1660
        %v1949 = vunpack.c.l.b16 %v1661
        %v1950 = vunpack.c.l.b16 %v1662
        %v1951 = vunpack.c.l.b16 %v1663
        %v1952 = vunpack.c.l.b16 %v1664
        %v1953 = vunpack.c.l.b16 %v1665
        %v1954 = vunpack.c.l.b16 %v1666
        %v1955 = vunpack.c.l.b16 %v1667
        %v1956 = vunpack.c.l.b16 %v1668
        %v1957 = vunpack.c.l.b16 %v1669
        %v1958 = vunpack.c.l.b16 %v1670
        %v1959 = vunpack.c.l.b16 %v1671
        %v1960 = vunpack.c.l.b16 %v1672
        %v1961 = vunpack.c.l.b16 %v1673
        %v1962 = vunpack.c.l.b16 %v1674
        %v1963 = vunpack.c.l.b16 %v1675
        %v1964 = vunpack.c.l.b16 %v1676
        %v1965 = vunpack.c.l.b16 %v1677
        %v1966 = vunpack.c.l.b16 %v1678
        %v1967 = vunpack.c.l.b16 %v1679
        %v1968 = vunpack.c.l.b16 %v1680
        %v1969 = vunpack.c.l.b16 %v1681
        %v1970 = vunpack.c.l.b16 %v1682
        %v1971 = vunpack.c.l.b16 %v1683
        %v1972 = vunpack.c.l.b16 %v1684
        %v1973 = vunpack.c.l.b16 %v1685
        %v1974 = vunpack.c.l.b16 %v1686
        %v1975 = vunpack.c.l.b16 %v1687
        %v1976 = vunpack.c.l.b16 %v1688
        %v1977 = vunpack.c.l.b16 %v1689
        %v1978 = vunpack.c.l.b16 %v1690
        %v1979 = vunpack.c.l.b16 %v1691
        %v1980 = vunpack.c.l.b16 %v1692
        %v1981 = vunpack.c.l.b16 %v1693
        %v1982 = vunpack.c.l.b16 %v1694
        %v1983 = vunpack.c.l.b16 %v1695
        %v1984 = vunpack.c.l.b16 %v1696
        %v1985 = vunpack.c.l.b16 %v1697
        %v1986 = vunpack.c.l.b16 %v1698
        %v1987 = vunpack.c.l.b16 %v1699
        %v1988 = vunpack.c.l.b16 %v1700
        %v1989 = vunpack.c.l.b16 %v1701
        %v1990 = vunpack.c.l.b16 %v1702
        %v1991 = vunpack.c.l.b16 %v1703
        %v1992 = vunpack.c.l.b16 %v1704
        %v1993 = vunpack.c.l.b16 %v1705
        %v1994 = vunpack.c.l.b16 %v1706
        %v1995 = vunpack.c.l.b16 %v1707
        %v1996 = vunpack.c.l.b16 %v1708
        %v1997 = vunpack.c.l.b16 %v1709
        %v1998 = vunpack.c.l.b16 %v1710
        %v1999 = vunpack.c.l.b16 %v1711
        %v2000 = vunpack.c.l.b16 %v1712
        %v2001 = vunpack.c.l.b16 %v1713
        %v2002 = vunpack.c.l.b16 %v1714
        %v2003 = vunpack.c.l.b16 %v1715
        %v2004 = vunpack.c.l.b16 %v1716
        %v2005 = vunpack.c.l.b16 %v1717
        %v2006 = vunpack.c.l.b16 %v1718
        %v2007 = vunpack.c.l.b16 %v1719
        %v2008 = vunpack.c.l.b16 %v1720
        %v2009 = vunpack.c.l.b16 %v1721
        %v2010 = vunpack.c.l.b16 %v1722
        %v2011 = vpack.c.b16 %v1868, %v1867
        %v2012 = vpack.c.b16 %v1870, %v1869
        %v2013 = vpack.c.b16 %v1872, %v1871
        %v2014 = vpack.c.b16 %v1874, %v1873
        %v2015 = vpack.c.b16 %v1876, %v1875
        %v2016 = vpack.c.b16 %v1878, %v1877
        %v2017 = vpack.c.b16 %v1880, %v1879
        %v2018 = vpack.c.b16 %v1882, %v1881
        %v2019 = vpack.c.b16 %v1884, %v1883
        %v2020 = vpack.c.b16 %v1886, %v1885
        %v2021 = vpack.c.b16 %v1888, %v1887
        %v2022 = vpack.c.b16 %v1890, %v1889
        %v2023 = vpack.c.b16 %v1892, %v1891
        %v2024 = vpack.c.b16 %v1894, %v1893
        %v2025 = vpack.c.b16 %v1896, %v1895
        %v2026 = vpack.c.b16 %v1898, %v1897
        %v2027 = vpack.c.b16 %v1900, %v1899
        %v2028 = vpack.c.b16 %v1902, %v1901
        %v2029 = vpack.c.b16 %v1904, %v1903
        %v2030 = vpack.c.b16 %v1906, %v1905
        %v2031 = vpack.c.b16 %v1908, %v1907
        %v2032 = vpack.c.b16 %v1910, %v1909
        %v2033 = vpack.c.b16 %v1912, %v1911
        %v2034 = vpack.c.b16 %v1914, %v1913
        %v2035 = vpack.c.b16 %v1916, %v1915
        %v2036 = vpack.c.b16 %v1918, %v1917
        %v2037 = vpack.c.b16 %v1920, %v1919
        %v2038 = vpack.c.b16 %v1922, %v1921
        %v2039 = vpack.c.b16 %v1924, %v1923
        %v2040 = vpack.c.b16 %v1926, %v1925
        %v2041 = vpack.c.b16 %v1928, %v1927
        %v2042 = vpack.c.b16 %v1930, %v1929
        %v2043 = vpack.c.b16 %v1932, %v1931
        %v2044 = vpack.c.b16 %v1934, %v1933
        %v2045 = vpack.c.b16 %v1936, %v1935
        %v2046 = vpack.c.b16 %v1938, %v1937
        %v2047 = vpack.c.b16 %v1940, %v1939
        %v2048 = vpack.c.b16 %v1942, %v1941
        %v2049 = vpack.c.b16 %v1944, %v1943
        %v2050 = vpack.c.b16 %v1946, %v1945
        %v2051 = vpack.c.b16 %v1948, %v1947
        %v2052 = vpack.c.b16 %v1950, %v1949
        %v2053 = vpack.c.b16 %v1952, %v1951
        %v2054 = vpack.c.b16 %v1954, %v1953
        %v2055 = vpack.c.b16 %v1956, %v1955
        %v2056 = vpack.c.b16 %v1958, %v1957
        %v2057 = vpack.c.b16 %v1960, %v1959
        %v2058 = vpack.c.b16 %v1962, %v1961
        %v2059 = vpack.c.b16 %v1964, %v1963
        %v2060 = vpack.c.b16 %v1966, %v1965
        %v2061 = vpack.c.b16 %v1968, %v1967
        %v2062 = vpack.c.b16 %v1970, %v1969
        %v2063 = vpack.c.b16 %v1972, %v1971
        %v2064 = vpack.c.b16 %v1974, %v1973
        %v2065 = vpack.c.b16 %v1976, %v1975
        %v2066 = vpack.c.b16 %v1978, %v1977
        %v2067 = vpack.c.b16 %v1980, %v1979
        %v2068 = vpack.c.b16 %v1982, %v1981
        %v2069 = vpack.c.b16 %v1984, %v1983
        %v2070 = vpack.c.b16 %v1986, %v1985
        %v2071 = vpack.c.b16 %v1988, %v1987
        %v2072 = vpack.c.b16 %v1990, %v1989
        %v2073 = vpack.c.b16 %v1992, %v1991
        %v2074 = vpack.c.b16 %v1994, %v1993
        %v2075 = vpack.c.b16 %v1996, %v1995
        %v2076 = vpack.c.b16 %v1998, %v1997
        %v2077 = vpack.c.b16 %v2000, %v1999
        %v2078 = vpack.c.b16 %v2002, %v2001
        %v2079 = vpack.c.b16 %v2004, %v2003
        %v2080 = vpack.c.b16 %v2006, %v2005
        %v2081 = vpack.c.b16 %v2008, %v2007
        %v2082 = vpack.c.b16 %v2010, %v2009
        %2155 = vmatpush.bf16.msra.mxu0 %v2018
        %2156 = vmatpush.bf16.msra.mxu0 %v2017
        %2157 = vmatpush.bf16.msra.mxu0 %v2016
        %2158 = vmatpush.bf16.msra.mxu0 %v2015
        %2159 = vmatpush.bf16.msra.mxu0 %v2014
        %2160 = vmatpush.bf16.msra.mxu0 %v2013
        %2161 = vmatpush.bf16.msra.mxu0 %v2012
        %2162 = vmatpush.bf16.msra.mxu0 %v2011
        %2163 = vmatmul.bf16.gmra.mxu0 %v1319
        %v2164 = vpop.f32.mrf.mxu0
        %v2165 = vadd.f32 0.0, %v2164
        %v2166 = vpop.f32.mrf.mxu0
        %v2167 = vadd.f32 0.0, %v2166
        %2168 = vmatmul.bf16.gmra.mxu0 %v1320
        %v2169 = vpop.f32.mrf.mxu0
        %v2170 = vadd.f32 0.0, %v2169
        %v2171 = vpop.f32.mrf.mxu0
        %v2172 = vadd.f32 0.0, %v2171
        %2173 = vmatmul.bf16.gmra.mxu0 %v1321
        %v2174 = vpop.f32.mrf.mxu0
        %v2175 = vadd.f32 0.0, %v2174
        %v2176 = vpop.f32.mrf.mxu0
        %v2177 = vadd.f32 0.0, %v2176
        %2178 = vmatmul.bf16.gmra.mxu0 %v1322
        %v2179 = vpop.f32.mrf.mxu0
        %v2180 = vadd.f32 0.0, %v2179
        %v2181 = vpop.f32.mrf.mxu0
        %v2182 = vadd.f32 0.0, %v2181
        %2183 = vmatmul.bf16.gmra.mxu0 %v1323
        %v2184 = vpop.f32.mrf.mxu0
        %v2185 = vadd.f32 0.0, %v2184
        %v2186 = vpop.f32.mrf.mxu0
        %v2187 = vadd.f32 0.0, %v2186
        %2188 = vmatmul.bf16.gmra.mxu0 %v1324
        %v2189 = vpop.f32.mrf.mxu0
        %v2190 = vadd.f32 0.0, %v2189
        %v2191 = vpop.f32.mrf.mxu0
        %v2192 = vadd.f32 0.0, %v2191
        %2193 = vmatmul.bf16.gmra.mxu0 %v1325
        %v2194 = vpop.f32.mrf.mxu0
        %v2195 = vadd.f32 0.0, %v2194
        %v2196 = vpop.f32.mrf.mxu0
        %v2197 = vadd.f32 0.0, %v2196
        %2198 = vmatmul.bf16.gmra.mxu0 %v1326
        %v2199 = vpop.f32.mrf.mxu0
        %v2200 = vadd.f32 0.0, %v2199
        %v2201 = vpop.f32.mrf.mxu0
        %v2202 = vadd.f32 0.0, %v2201
        %2203 = vmatmul.bf16.gmra.mxu0 %v1327
        %v2204 = vpop.f32.mrf.mxu0
        %v2205 = vadd.f32 0.0, %v2204
        %v2206 = vpop.f32.mrf.mxu0
        %v2207 = vadd.f32 0.0, %v2206
        %2208 = vmatmul.bf16.gmra.mxu0 %v1328
        %v2209 = vpop.f32.mrf.mxu0
        %v2210 = vadd.f32 0.0, %v2209
        %v2211 = vpop.f32.mrf.mxu0
        %v2212 = vadd.f32 0.0, %v2211
        %2213 = vmatmul.bf16.gmra.mxu0 %v1329
        %v2214 = vpop.f32.mrf.mxu0
        %v2215 = vadd.f32 0.0, %v2214
        %v2216 = vpop.f32.mrf.mxu0
        %v2217 = vadd.f32 0.0, %v2216
        %2218 = vmatmul.bf16.gmra.mxu0 %v1330
        %v2219 = vpop.f32.mrf.mxu0
        %v2220 = vadd.f32 0.0, %v2219
        %v2221 = vpop.f32.mrf.mxu0
        %v2222 = vadd.f32 0.0, %v2221
        %2223 = vmatmul.bf16.gmra.mxu0 %v1331
        %v2224 = vpop.f32.mrf.mxu0
        %v2225 = vadd.f32 0.0, %v2224
        %v2226 = vpop.f32.mrf.mxu0
        %v2227 = vadd.f32 0.0, %v2226
        %2228 = vmatmul.bf16.gmra.mxu0 %v1332
        %v2229 = vpop.f32.mrf.mxu0
        %v2230 = vadd.f32 0.0, %v2229
        %v2231 = vpop.f32.mrf.mxu0
        %v2232 = vadd.f32 0.0, %v2231
        %2233 = vmatmul.bf16.gmra.mxu0 %v1333
        %v2234 = vpop.f32.mrf.mxu0
        %v2235 = vadd.f32 0.0, %v2234
        %v2236 = vpop.f32.mrf.mxu0
        %v2237 = vadd.f32 0.0, %v2236
        %2238 = vmatmul.bf16.gmra.mxu0 %v1334
        %v2239 = vpop.f32.mrf.mxu0
        %v2240 = vadd.f32 0.0, %v2239
        %v2241 = vpop.f32.mrf.mxu0
        %v2242 = vadd.f32 0.0, %v2241
        %2243 = vdwg.mxu0
        %2244 = vmatpush.bf16.msra.mxu0 %v2026
        %2245 = vmatpush.bf16.msra.mxu0 %v2025
        %2246 = vmatpush.bf16.msra.mxu0 %v2024
        %2247 = vmatpush.bf16.msra.mxu0 %v2023
        %2248 = vmatpush.bf16.msra.mxu0 %v2022
        %2249 = vmatpush.bf16.msra.mxu0 %v2021
        %2250 = vmatpush.bf16.msra.mxu0 %v2020
        %2251 = vmatpush.bf16.msra.mxu0 %v2019
        %2252 = vmatmul.bf16.gmra.mxu0 %v1415
        %v2253 = vpop.f32.mrf.mxu0
        %v2254 = vadd.f32 %v2165, %v2253
        %v2255 = vpop.f32.mrf.mxu0
        %v2256 = vadd.f32 %v2167, %v2255
        %2257 = vmatmul.bf16.gmra.mxu0 %v1416
        %v2258 = vpop.f32.mrf.mxu0
        %v2259 = vadd.f32 %v2170, %v2258
        %v2260 = vpop.f32.mrf.mxu0
        %v2261 = vadd.f32 %v2172, %v2260
        %2262 = vmatmul.bf16.gmra.mxu0 %v1417
        %v2263 = vpop.f32.mrf.mxu0
        %v2264 = vadd.f32 %v2175, %v2263
        %v2265 = vpop.f32.mrf.mxu0
        %v2266 = vadd.f32 %v2177, %v2265
        %2267 = vmatmul.bf16.gmra.mxu0 %v1418
        %v2268 = vpop.f32.mrf.mxu0
        %v2269 = vadd.f32 %v2180, %v2268
        %v2270 = vpop.f32.mrf.mxu0
        %v2271 = vadd.f32 %v2182, %v2270
        %2272 = vmatmul.bf16.gmra.mxu0 %v1419
        %v2273 = vpop.f32.mrf.mxu0
        %v2274 = vadd.f32 %v2185, %v2273
        %v2275 = vpop.f32.mrf.mxu0
        %v2276 = vadd.f32 %v2187, %v2275
        %2277 = vmatmul.bf16.gmra.mxu0 %v1420
        %v2278 = vpop.f32.mrf.mxu0
        %v2279 = vadd.f32 %v2190, %v2278
        %v2280 = vpop.f32.mrf.mxu0
        %v2281 = vadd.f32 %v2192, %v2280
        %2282 = vmatmul.bf16.gmra.mxu0 %v1421
        %v2283 = vpop.f32.mrf.mxu0
        %v2284 = vadd.f32 %v2195, %v2283
        %v2285 = vpop.f32.mrf.mxu0
        %v2286 = vadd.f32 %v2197, %v2285
        %2287 = vmatmul.bf16.gmra.mxu0 %v1422
        %v2288 = vpop.f32.mrf.mxu0
        %v2289 = vadd.f32 %v2200, %v2288
        %v2290 = vpop.f32.mrf.mxu0
        %v2291 = vadd.f32 %v2202, %v2290
        %2292 = vmatmul.bf16.gmra.mxu0 %v1423
        %v2293 = vpop.f32.mrf.mxu0
        %v2294 = vadd.f32 %v2205, %v2293
        %v2295 = vpop.f32.mrf.mxu0
        %v2296 = vadd.f32 %v2207, %v2295
        %2297 = vmatmul.bf16.gmra.mxu0 %v1424
        %v2298 = vpop.f32.mrf.mxu0
        %v2299 = vadd.f32 %v2210, %v2298
        %v2300 = vpop.f32.mrf.mxu0
        %v2301 = vadd.f32 %v2212, %v2300
        %2302 = vmatmul.bf16.gmra.mxu0 %v1425
        %v2303 = vpop.f32.mrf.mxu0
        %v2304 = vadd.f32 %v2215, %v2303
        %v2305 = vpop.f32.mrf.mxu0
        %v2306 = vadd.f32 %v2217, %v2305
        %2307 = vmatmul.bf16.gmra.mxu0 %v1426
        %v2308 = vpop.f32.mrf.mxu0
        %v2309 = vadd.f32 %v2220, %v2308
        %v2310 = vpop.f32.mrf.mxu0
        %v2311 = vadd.f32 %v2222, %v2310
        %2312 = vmatmul.bf16.gmra.mxu0 %v1427
        %v2313 = vpop.f32.mrf.mxu0
        %v2314 = vadd.f32 %v2225, %v2313
        %v2315 = vpop.f32.mrf.mxu0
        %v2316 = vadd.f32 %v2227, %v2315
        %2317 = vmatmul.bf16.gmra.mxu0 %v1428
        %v2318 = vpop.f32.mrf.mxu0
        %v2319 = vadd.f32 %v2230, %v2318
        %v2320 = vpop.f32.mrf.mxu0
        %v2321 = vadd.f32 %v2232, %v2320
        %2322 = vmatmul.bf16.gmra.mxu0 %v1429
        %v2323 = vpop.f32.mrf.mxu0
        %v2324 = vadd.f32 %v2235, %v2323
        %v2325 = vpop.f32.mrf.mxu0
        %v2326 = vadd.f32 %v2237, %v2325
        %2327 = vmatmul.bf16.gmra.mxu0 %v1430
        %v2328 = vpop.f32.mrf.mxu0
        %v2329 = vadd.f32 %v2240, %v2328
        %v2330 = vpop.f32.mrf.mxu0
        %v2331 = vadd.f32 %v2242, %v2330
        %2332 = vdwg.mxu0
        %2333 = vmatpush.bf16.msra.mxu0 %v2034
        %2334 = vmatpush.bf16.msra.mxu0 %v2033
        %2335 = vmatpush.bf16.msra.mxu0 %v2032
        %2336 = vmatpush.bf16.msra.mxu0 %v2031
        %2337 = vmatpush.bf16.msra.mxu0 %v2030
        %2338 = vmatpush.bf16.msra.mxu0 %v2029
        %2339 = vmatpush.bf16.msra.mxu0 %v2028
        %2340 = vmatpush.bf16.msra.mxu0 %v2027
        %2341 = vmatmul.bf16.gmra.mxu0 %v1511
        %v2342 = vpop.f32.mrf.mxu0
        %v2343 = vadd.f32 %v2254, %v2342
        %v2344 = vpop.f32.mrf.mxu0
        %v2345 = vadd.f32 %v2256, %v2344
        %2346 = vmatmul.bf16.gmra.mxu0 %v1512
        %v2347 = vpop.f32.mrf.mxu0
        %v2348 = vadd.f32 %v2259, %v2347
        %v2349 = vpop.f32.mrf.mxu0
        %v2350 = vadd.f32 %v2261, %v2349
        %2351 = vmatmul.bf16.gmra.mxu0 %v1513
        %v2352 = vpop.f32.mrf.mxu0
        %v2353 = vadd.f32 %v2264, %v2352
        %v2354 = vpop.f32.mrf.mxu0
        %v2355 = vadd.f32 %v2266, %v2354
        %2356 = vmatmul.bf16.gmra.mxu0 %v1514
        %v2357 = vpop.f32.mrf.mxu0
        %v2358 = vadd.f32 %v2269, %v2357
        %v2359 = vpop.f32.mrf.mxu0
        %v2360 = vadd.f32 %v2271, %v2359
        %2361 = vmatmul.bf16.gmra.mxu0 %v1515
        %v2362 = vpop.f32.mrf.mxu0
        %v2363 = vadd.f32 %v2274, %v2362
        %v2364 = vpop.f32.mrf.mxu0
        %v2365 = vadd.f32 %v2276, %v2364
        %2366 = vmatmul.bf16.gmra.mxu0 %v1516
        %v2367 = vpop.f32.mrf.mxu0
        %v2368 = vadd.f32 %v2279, %v2367
        %v2369 = vpop.f32.mrf.mxu0
        %v2370 = vadd.f32 %v2281, %v2369
        %2371 = vmatmul.bf16.gmra.mxu0 %v1517
        %v2372 = vpop.f32.mrf.mxu0
        %v2373 = vadd.f32 %v2284, %v2372
        %v2374 = vpop.f32.mrf.mxu0
        %v2375 = vadd.f32 %v2286, %v2374
        %2376 = vmatmul.bf16.gmra.mxu0 %v1518
        %v2377 = vpop.f32.mrf.mxu0
        %v2378 = vadd.f32 %v2289, %v2377
        %v2379 = vpop.f32.mrf.mxu0
        %v2380 = vadd.f32 %v2291, %v2379
        %2381 = vmatmul.bf16.gmra.mxu0 %v1519
        %v2382 = vpop.f32.mrf.mxu0
        %v2383 = vadd.f32 %v2294, %v2382
        %v2384 = vpop.f32.mrf.mxu0
        %v2385 = vadd.f32 %v2296, %v2384
        %2386 = vmatmul.bf16.gmra.mxu0 %v1520
        %v2387 = vpop.f32.mrf.mxu0
        %v2388 = vadd.f32 %v2299, %v2387
        %v2389 = vpop.f32.mrf.mxu0
        %v2390 = vadd.f32 %v2301, %v2389
        %2391 = vmatmul.bf16.gmra.mxu0 %v1521
        %v2392 = vpop.f32.mrf.mxu0
        %v2393 = vadd.f32 %v2304, %v2392
        %v2394 = vpop.f32.mrf.mxu0
        %v2395 = vadd.f32 %v2306, %v2394
        %2396 = vmatmul.bf16.gmra.mxu0 %v1522
        %v2397 = vpop.f32.mrf.mxu0
        %v2398 = vadd.f32 %v2309, %v2397
        %v2399 = vpop.f32.mrf.mxu0
        %v2400 = vadd.f32 %v2311, %v2399
        %2401 = vmatmul.bf16.gmra.mxu0 %v1523
        %v2402 = vpop.f32.mrf.mxu0
        %v2403 = vadd.f32 %v2314, %v2402
        %v2404 = vpop.f32.mrf.mxu0
        %v2405 = vadd.f32 %v2316, %v2404
        %2406 = vmatmul.bf16.gmra.mxu0 %v1524
        %v2407 = vpop.f32.mrf.mxu0
        %v2408 = vadd.f32 %v2319, %v2407
        %v2409 = vpop.f32.mrf.mxu0
        %v2410 = vadd.f32 %v2321, %v2409
        %2411 = vmatmul.bf16.gmra.mxu0 %v1525
        %v2412 = vpop.f32.mrf.mxu0
        %v2413 = vadd.f32 %v2324, %v2412
        %v2414 = vpop.f32.mrf.mxu0
        %v2415 = vadd.f32 %v2326, %v2414
        %2416 = vmatmul.bf16.gmra.mxu0 %v1526
        %v2417 = vpop.f32.mrf.mxu0
        %v2418 = vadd.f32 %v2329, %v2417
        %v2419 = vpop.f32.mrf.mxu0
        %v2420 = vadd.f32 %v2331, %v2419
        %2421 = vdwg.mxu0
        %2422 = vmatpush.bf16.msra.mxu0 %v2042
        %2423 = vmatpush.bf16.msra.mxu0 %v2041
        %2424 = vmatpush.bf16.msra.mxu0 %v2040
        %2425 = vmatpush.bf16.msra.mxu0 %v2039
        %2426 = vmatpush.bf16.msra.mxu0 %v2038
        %2427 = vmatpush.bf16.msra.mxu0 %v2037
        %2428 = vmatpush.bf16.msra.mxu0 %v2036
        %2429 = vmatpush.bf16.msra.mxu0 %v2035
        %2430 = vmatmul.bf16.gmra.mxu0 %v1320
        %v2431 = vpop.f32.mrf.mxu0
        %v2432 = vadd.f32 %v2343, %v2431
        %v2433 = vpop.f32.mrf.mxu0
        %v2434 = vadd.f32 %v2345, %v2433
        %2435 = vmatmul.bf16.gmra.mxu0 %v1321
        %v2436 = vpop.f32.mrf.mxu0
        %v2437 = vadd.f32 %v2348, %v2436
        %v2438 = vpop.f32.mrf.mxu0
        %v2439 = vadd.f32 %v2350, %v2438
        %2440 = vmatmul.bf16.gmra.mxu0 %v1322
        %v2441 = vpop.f32.mrf.mxu0
        %v2442 = vadd.f32 %v2353, %v2441
        %v2443 = vpop.f32.mrf.mxu0
        %v2444 = vadd.f32 %v2355, %v2443
        %2445 = vmatmul.bf16.gmra.mxu0 %v1323
        %v2446 = vpop.f32.mrf.mxu0
        %v2447 = vadd.f32 %v2358, %v2446
        %v2448 = vpop.f32.mrf.mxu0
        %v2449 = vadd.f32 %v2360, %v2448
        %2450 = vmatmul.bf16.gmra.mxu0 %v1324
        %v2451 = vpop.f32.mrf.mxu0
        %v2452 = vadd.f32 %v2363, %v2451
        %v2453 = vpop.f32.mrf.mxu0
        %v2454 = vadd.f32 %v2365, %v2453
        %2455 = vmatmul.bf16.gmra.mxu0 %v1325
        %v2456 = vpop.f32.mrf.mxu0
        %v2457 = vadd.f32 %v2368, %v2456
        %v2458 = vpop.f32.mrf.mxu0
        %v2459 = vadd.f32 %v2370, %v2458
        %2460 = vmatmul.bf16.gmra.mxu0 %v1326
        %v2461 = vpop.f32.mrf.mxu0
        %v2462 = vadd.f32 %v2373, %v2461
        %v2463 = vpop.f32.mrf.mxu0
        %v2464 = vadd.f32 %v2375, %v2463
        %2465 = vmatmul.bf16.gmra.mxu0 %v1327
        %v2466 = vpop.f32.mrf.mxu0
        %v2467 = vadd.f32 %v2378, %v2466
        %v2468 = vpop.f32.mrf.mxu0
        %v2469 = vadd.f32 %v2380, %v2468
        %2470 = vmatmul.bf16.gmra.mxu0 %v1328
        %v2471 = vpop.f32.mrf.mxu0
        %v2472 = vadd.f32 %v2383, %v2471
        %v2473 = vpop.f32.mrf.mxu0
        %v2474 = vadd.f32 %v2385, %v2473
        %2475 = vmatmul.bf16.gmra.mxu0 %v1329
        %v2476 = vpop.f32.mrf.mxu0
        %v2477 = vadd.f32 %v2388, %v2476
        %v2478 = vpop.f32.mrf.mxu0
        %v2479 = vadd.f32 %v2390, %v2478
        %2480 = vmatmul.bf16.gmra.mxu0 %v1330
        %v2481 = vpop.f32.mrf.mxu0
        %v2482 = vadd.f32 %v2393, %v2481
        %v2483 = vpop.f32.mrf.mxu0
        %v2484 = vadd.f32 %v2395, %v2483
        %2485 = vmatmul.bf16.gmra.mxu0 %v1331
        %v2486 = vpop.f32.mrf.mxu0
        %v2487 = vadd.f32 %v2398, %v2486
        %v2488 = vpop.f32.mrf.mxu0
        %v2489 = vadd.f32 %v2400, %v2488
        %2490 = vmatmul.bf16.gmra.mxu0 %v1332
        %v2491 = vpop.f32.mrf.mxu0
        %v2492 = vadd.f32 %v2403, %v2491
        %v2493 = vpop.f32.mrf.mxu0
        %v2494 = vadd.f32 %v2405, %v2493
        %2495 = vmatmul.bf16.gmra.mxu0 %v1333
        %v2496 = vpop.f32.mrf.mxu0
        %v2497 = vadd.f32 %v2408, %v2496
        %v2498 = vpop.f32.mrf.mxu0
        %v2499 = vadd.f32 %v2410, %v2498
        %2500 = vmatmul.bf16.gmra.mxu0 %v1334
        %v2501 = vpop.f32.mrf.mxu0
        %v2502 = vadd.f32 %v2413, %v2501
        %v2503 = vpop.f32.mrf.mxu0
        %v2504 = vadd.f32 %v2415, %v2503
        %2505 = vmatmul.bf16.gmra.mxu0 %v1547
        %v2506 = vpop.f32.mrf.mxu0
        %v2507 = vadd.f32 %v2418, %v2506
        %v2508 = vpop.f32.mrf.mxu0
        %v2509 = vadd.f32 %v2420, %v2508
        %2510 = vdwg.mxu0
        %2511 = vmatpush.bf16.msra.mxu0 %v2050
        %2512 = vmatpush.bf16.msra.mxu0 %v2049
        %2513 = vmatpush.bf16.msra.mxu0 %v2048
        %2514 = vmatpush.bf16.msra.mxu0 %v2047
        %2515 = vmatpush.bf16.msra.mxu0 %v2046
        %2516 = vmatpush.bf16.msra.mxu0 %v2045
        %2517 = vmatpush.bf16.msra.mxu0 %v2044
        %2518 = vmatpush.bf16.msra.mxu0 %v2043
        %2519 = vmatmul.bf16.gmra.mxu0 %v1416
        %v2520 = vpop.f32.mrf.mxu0
        %v2521 = vadd.f32 %v2432, %v2520
        %v2522 = vpop.f32.mrf.mxu0
        %v2523 = vadd.f32 %v2434, %v2522
        %2524 = vmatmul.bf16.gmra.mxu0 %v1417
        %v2525 = vpop.f32.mrf.mxu0
        %v2526 = vadd.f32 %v2437, %v2525
        %v2527 = vpop.f32.mrf.mxu0
        %v2528 = vadd.f32 %v2439, %v2527
        %2529 = vmatmul.bf16.gmra.mxu0 %v1418
        %v2530 = vpop.f32.mrf.mxu0
        %v2531 = vadd.f32 %v2442, %v2530
        %v2532 = vpop.f32.mrf.mxu0
        %v2533 = vadd.f32 %v2444, %v2532
        %2534 = vmatmul.bf16.gmra.mxu0 %v1419
        %v2535 = vpop.f32.mrf.mxu0
        %v2536 = vadd.f32 %v2447, %v2535
        %v2537 = vpop.f32.mrf.mxu0
        %v2538 = vadd.f32 %v2449, %v2537
        %2539 = vmatmul.bf16.gmra.mxu0 %v1420
        %v2540 = vpop.f32.mrf.mxu0
        %v2541 = vadd.f32 %v2452, %v2540
        %v2542 = vpop.f32.mrf.mxu0
        %v2543 = vadd.f32 %v2454, %v2542
        %2544 = vmatmul.bf16.gmra.mxu0 %v1421
        %v2545 = vpop.f32.mrf.mxu0
        %v2546 = vadd.f32 %v2457, %v2545
        %v2547 = vpop.f32.mrf.mxu0
        %v2548 = vadd.f32 %v2459, %v2547
        %2549 = vmatmul.bf16.gmra.mxu0 %v1422
        %v2550 = vpop.f32.mrf.mxu0
        %v2551 = vadd.f32 %v2462, %v2550
        %v2552 = vpop.f32.mrf.mxu0
        %v2553 = vadd.f32 %v2464, %v2552
        %2554 = vmatmul.bf16.gmra.mxu0 %v1423
        %v2555 = vpop.f32.mrf.mxu0
        %v2556 = vadd.f32 %v2467, %v2555
        %v2557 = vpop.f32.mrf.mxu0
        %v2558 = vadd.f32 %v2469, %v2557
        %2559 = vmatmul.bf16.gmra.mxu0 %v1424
        %v2560 = vpop.f32.mrf.mxu0
        %v2561 = vadd.f32 %v2472, %v2560
        %v2562 = vpop.f32.mrf.mxu0
        %v2563 = vadd.f32 %v2474, %v2562
        %2564 = vmatmul.bf16.gmra.mxu0 %v1425
        %v2565 = vpop.f32.mrf.mxu0
        %v2566 = vadd.f32 %v2477, %v2565
        %v2567 = vpop.f32.mrf.mxu0
        %v2568 = vadd.f32 %v2479, %v2567
        %2569 = vmatmul.bf16.gmra.mxu0 %v1426
        %v2570 = vpop.f32.mrf.mxu0
        %v2571 = vadd.f32 %v2482, %v2570
        %v2572 = vpop.f32.mrf.mxu0
        %v2573 = vadd.f32 %v2484, %v2572
        %2574 = vmatmul.bf16.gmra.mxu0 %v1427
        %v2575 = vpop.f32.mrf.mxu0
        %v2576 = vadd.f32 %v2487, %v2575
        %v2577 = vpop.f32.mrf.mxu0
        %v2578 = vadd.f32 %v2489, %v2577
        %2579 = vmatmul.bf16.gmra.mxu0 %v1428
        %v2580 = vpop.f32.mrf.mxu0
        %v2581 = vadd.f32 %v2492, %v2580
        %v2582 = vpop.f32.mrf.mxu0
        %v2583 = vadd.f32 %v2494, %v2582
        %2584 = vmatmul.bf16.gmra.mxu0 %v1429
        %v2585 = vpop.f32.mrf.mxu0
        %v2586 = vadd.f32 %v2497, %v2585
        %v2587 = vpop.f32.mrf.mxu0
        %v2588 = vadd.f32 %v2499, %v2587
        %2589 = vmatmul.bf16.gmra.mxu0 %v1430
        %v2590 = vpop.f32.mrf.mxu0
        %v2591 = vadd.f32 %v2502, %v2590
        %v2592 = vpop.f32.mrf.mxu0
        %v2593 = vadd.f32 %v2504, %v2592
        %2594 = vmatmul.bf16.gmra.mxu0 %v1553
        %v2595 = vpop.f32.mrf.mxu0
        %v2596 = vadd.f32 %v2507, %v2595
        %v2597 = vpop.f32.mrf.mxu0
        %v2598 = vadd.f32 %v2509, %v2597
        %2599 = vdwg.mxu0
        %2600 = vmatpush.bf16.msra.mxu0 %v2058
        %2601 = vmatpush.bf16.msra.mxu0 %v2057
        %2602 = vmatpush.bf16.msra.mxu0 %v2056
        %2603 = vmatpush.bf16.msra.mxu0 %v2055
        %2604 = vmatpush.bf16.msra.mxu0 %v2054
        %2605 = vmatpush.bf16.msra.mxu0 %v2053
        %2606 = vmatpush.bf16.msra.mxu0 %v2052
        %2607 = vmatpush.bf16.msra.mxu0 %v2051
        %2608 = vmatmul.bf16.gmra.mxu0 %v1512
        %v2609 = vpop.f32.mrf.mxu0
        %v2610 = vadd.f32 %v2521, %v2609
        %v2611 = vpop.f32.mrf.mxu0
        %v2612 = vadd.f32 %v2523, %v2611
        %2613 = vmatmul.bf16.gmra.mxu0 %v1513
        %v2614 = vpop.f32.mrf.mxu0
        %v2615 = vadd.f32 %v2526, %v2614
        %v2616 = vpop.f32.mrf.mxu0
        %v2617 = vadd.f32 %v2528, %v2616
        %2618 = vmatmul.bf16.gmra.mxu0 %v1514
        %v2619 = vpop.f32.mrf.mxu0
        %v2620 = vadd.f32 %v2531, %v2619
        %v2621 = vpop.f32.mrf.mxu0
        %v2622 = vadd.f32 %v2533, %v2621
        %2623 = vmatmul.bf16.gmra.mxu0 %v1515
        %v2624 = vpop.f32.mrf.mxu0
        %v2625 = vadd.f32 %v2536, %v2624
        %v2626 = vpop.f32.mrf.mxu0
        %v2627 = vadd.f32 %v2538, %v2626
        %2628 = vmatmul.bf16.gmra.mxu0 %v1516
        %v2629 = vpop.f32.mrf.mxu0
        %v2630 = vadd.f32 %v2541, %v2629
        %v2631 = vpop.f32.mrf.mxu0
        %v2632 = vadd.f32 %v2543, %v2631
        %2633 = vmatmul.bf16.gmra.mxu0 %v1517
        %v2634 = vpop.f32.mrf.mxu0
        %v2635 = vadd.f32 %v2546, %v2634
        %v2636 = vpop.f32.mrf.mxu0
        %v2637 = vadd.f32 %v2548, %v2636
        %2638 = vmatmul.bf16.gmra.mxu0 %v1518
        %v2639 = vpop.f32.mrf.mxu0
        %v2640 = vadd.f32 %v2551, %v2639
        %v2641 = vpop.f32.mrf.mxu0
        %v2642 = vadd.f32 %v2553, %v2641
        %2643 = vmatmul.bf16.gmra.mxu0 %v1519
        %v2644 = vpop.f32.mrf.mxu0
        %v2645 = vadd.f32 %v2556, %v2644
        %v2646 = vpop.f32.mrf.mxu0
        %v2647 = vadd.f32 %v2558, %v2646
        %2648 = vmatmul.bf16.gmra.mxu0 %v1520
        %v2649 = vpop.f32.mrf.mxu0
        %v2650 = vadd.f32 %v2561, %v2649
        %v2651 = vpop.f32.mrf.mxu0
        %v2652 = vadd.f32 %v2563, %v2651
        %2653 = vmatmul.bf16.gmra.mxu0 %v1521
        %v2654 = vpop.f32.mrf.mxu0
        %v2655 = vadd.f32 %v2566, %v2654
        %v2656 = vpop.f32.mrf.mxu0
        %v2657 = vadd.f32 %v2568, %v2656
        %2658 = vmatmul.bf16.gmra.mxu0 %v1522
        %v2659 = vpop.f32.mrf.mxu0
        %v2660 = vadd.f32 %v2571, %v2659
        %v2661 = vpop.f32.mrf.mxu0
        %v2662 = vadd.f32 %v2573, %v2661
        %2663 = vmatmul.bf16.gmra.mxu0 %v1523
        %v2664 = vpop.f32.mrf.mxu0
        %v2665 = vadd.f32 %v2576, %v2664
        %v2666 = vpop.f32.mrf.mxu0
        %v2667 = vadd.f32 %v2578, %v2666
        %2668 = vmatmul.bf16.gmra.mxu0 %v1524
        %v2669 = vpop.f32.mrf.mxu0
        %v2670 = vadd.f32 %v2581, %v2669
        %v2671 = vpop.f32.mrf.mxu0
        %v2672 = vadd.f32 %v2583, %v2671
        %2673 = vmatmul.bf16.gmra.mxu0 %v1525
        %v2674 = vpop.f32.mrf.mxu0
        %v2675 = vadd.f32 %v2586, %v2674
        %v2676 = vpop.f32.mrf.mxu0
        %v2677 = vadd.f32 %v2588, %v2676
        %2678 = vmatmul.bf16.gmra.mxu0 %v1526
        %v2679 = vpop.f32.mrf.mxu0
        %v2680 = vadd.f32 %v2591, %v2679
        %v2681 = vpop.f32.mrf.mxu0
        %v2682 = vadd.f32 %v2593, %v2681
        %2683 = vmatmul.bf16.gmra.mxu0 %v1559
        %v2684 = vpop.f32.mrf.mxu0
        %v2685 = vadd.f32 %v2596, %v2684
        %v2686 = vpop.f32.mrf.mxu0
        %v2687 = vadd.f32 %v2598, %v2686
        %2688 = vdwg.mxu0
        %2689 = vmatpush.bf16.msra.mxu0 %v2066
        %2690 = vmatpush.bf16.msra.mxu0 %v2065
        %2691 = vmatpush.bf16.msra.mxu0 %v2064
        %2692 = vmatpush.bf16.msra.mxu0 %v2063
        %2693 = vmatpush.bf16.msra.mxu0 %v2062
        %2694 = vmatpush.bf16.msra.mxu0 %v2061
        %2695 = vmatpush.bf16.msra.mxu0 %v2060
        %2696 = vmatpush.bf16.msra.mxu0 %v2059
        %2697 = vmatmul.bf16.gmra.mxu0 %v1321
        %v2698 = vpop.f32.mrf.mxu0
        %v2699 = vadd.f32 %v2610, %v2698
        %v2700 = vpop.f32.mrf.mxu0
        %v2701 = vadd.f32 %v2612, %v2700
        %2702 = vmatmul.bf16.gmra.mxu0 %v1322
        %v2703 = vpop.f32.mrf.mxu0
        %v2704 = vadd.f32 %v2615, %v2703
        %v2705 = vpop.f32.mrf.mxu0
        %v2706 = vadd.f32 %v2617, %v2705
        %2707 = vmatmul.bf16.gmra.mxu0 %v1323
        %v2708 = vpop.f32.mrf.mxu0
        %v2709 = vadd.f32 %v2620, %v2708
        %v2710 = vpop.f32.mrf.mxu0
        %v2711 = vadd.f32 %v2622, %v2710
        %2712 = vmatmul.bf16.gmra.mxu0 %v1324
        %v2713 = vpop.f32.mrf.mxu0
        %v2714 = vadd.f32 %v2625, %v2713
        %v2715 = vpop.f32.mrf.mxu0
        %v2716 = vadd.f32 %v2627, %v2715
        %2717 = vmatmul.bf16.gmra.mxu0 %v1325
        %v2718 = vpop.f32.mrf.mxu0
        %v2719 = vadd.f32 %v2630, %v2718
        %v2720 = vpop.f32.mrf.mxu0
        %v2721 = vadd.f32 %v2632, %v2720
        %2722 = vmatmul.bf16.gmra.mxu0 %v1326
        %v2723 = vpop.f32.mrf.mxu0
        %v2724 = vadd.f32 %v2635, %v2723
        %v2725 = vpop.f32.mrf.mxu0
        %v2726 = vadd.f32 %v2637, %v2725
        %2727 = vmatmul.bf16.gmra.mxu0 %v1327
        %v2728 = vpop.f32.mrf.mxu0
        %v2729 = vadd.f32 %v2640, %v2728
        %v2730 = vpop.f32.mrf.mxu0
        %v2731 = vadd.f32 %v2642, %v2730
        %2732 = vmatmul.bf16.gmra.mxu0 %v1328
        %v2733 = vpop.f32.mrf.mxu0
        %v2734 = vadd.f32 %v2645, %v2733
        %v2735 = vpop.f32.mrf.mxu0
        %v2736 = vadd.f32 %v2647, %v2735
        %2737 = vmatmul.bf16.gmra.mxu0 %v1329
        %v2738 = vpop.f32.mrf.mxu0
        %v2739 = vadd.f32 %v2650, %v2738
        %v2740 = vpop.f32.mrf.mxu0
        %v2741 = vadd.f32 %v2652, %v2740
        %2742 = vmatmul.bf16.gmra.mxu0 %v1330
        %v2743 = vpop.f32.mrf.mxu0
        %v2744 = vadd.f32 %v2655, %v2743
        %v2745 = vpop.f32.mrf.mxu0
        %v2746 = vadd.f32 %v2657, %v2745
        %2747 = vmatmul.bf16.gmra.mxu0 %v1331
        %v2748 = vpop.f32.mrf.mxu0
        %v2749 = vadd.f32 %v2660, %v2748
        %v2750 = vpop.f32.mrf.mxu0
        %v2751 = vadd.f32 %v2662, %v2750
        %2752 = vmatmul.bf16.gmra.mxu0 %v1332
        %v2753 = vpop.f32.mrf.mxu0
        %v2754 = vadd.f32 %v2665, %v2753
        %v2755 = vpop.f32.mrf.mxu0
        %v2756 = vadd.f32 %v2667, %v2755
        %2757 = vmatmul.bf16.gmra.mxu0 %v1333
        %v2758 = vpop.f32.mrf.mxu0
        %v2759 = vadd.f32 %v2670, %v2758
        %v2760 = vpop.f32.mrf.mxu0
        %v2761 = vadd.f32 %v2672, %v2760
        %2762 = vmatmul.bf16.gmra.mxu0 %v1334
        %v2763 = vpop.f32.mrf.mxu0
        %v2764 = vadd.f32 %v2675, %v2763
        %v2765 = vpop.f32.mrf.mxu0
        %v2766 = vadd.f32 %v2677, %v2765
        %2767 = vmatmul.bf16.gmra.mxu0 %v1547
        %v2768 = vpop.f32.mrf.mxu0
        %v2769 = vadd.f32 %v2680, %v2768
        %v2770 = vpop.f32.mrf.mxu0
        %v2771 = vadd.f32 %v2682, %v2770
        %2772 = vmatmul.bf16.gmra.mxu0 %v1565
        %v2773 = vpop.f32.mrf.mxu0
        %v2774 = vadd.f32 %v2685, %v2773
        %v2775 = vpop.f32.mrf.mxu0
        %v2776 = vadd.f32 %v2687, %v2775
        %2777 = vdwg.mxu0
        %2778 = vmatpush.bf16.msra.mxu0 %v2074
        %2779 = vmatpush.bf16.msra.mxu0 %v2073
        %2780 = vmatpush.bf16.msra.mxu0 %v2072
        %2781 = vmatpush.bf16.msra.mxu0 %v2071
        %2782 = vmatpush.bf16.msra.mxu0 %v2070
        %2783 = vmatpush.bf16.msra.mxu0 %v2069
        %2784 = vmatpush.bf16.msra.mxu0 %v2068
        %2785 = vmatpush.bf16.msra.mxu0 %v2067
        %2786 = vmatmul.bf16.gmra.mxu0 %v1417
        %v2787 = vpop.f32.mrf.mxu0
        %v2788 = vadd.f32 %v2699, %v2787
        %v2789 = vpop.f32.mrf.mxu0
        %v2790 = vadd.f32 %v2701, %v2789
        %2791 = vmatmul.bf16.gmra.mxu0 %v1418
        %v2792 = vpop.f32.mrf.mxu0
        %v2793 = vadd.f32 %v2704, %v2792
        %v2794 = vpop.f32.mrf.mxu0
        %v2795 = vadd.f32 %v2706, %v2794
        %2796 = vmatmul.bf16.gmra.mxu0 %v1419
        %v2797 = vpop.f32.mrf.mxu0
        %v2798 = vadd.f32 %v2709, %v2797
        %v2799 = vpop.f32.mrf.mxu0
        %v2800 = vadd.f32 %v2711, %v2799
        %2801 = vmatmul.bf16.gmra.mxu0 %v1420
        %v2802 = vpop.f32.mrf.mxu0
        %v2803 = vadd.f32 %v2714, %v2802
        %v2804 = vpop.f32.mrf.mxu0
        %v2805 = vadd.f32 %v2716, %v2804
        %2806 = vmatmul.bf16.gmra.mxu0 %v1421
        %v2807 = vpop.f32.mrf.mxu0
        %v2808 = vadd.f32 %v2719, %v2807
        %v2809 = vpop.f32.mrf.mxu0
        %v2810 = vadd.f32 %v2721, %v2809
        %2811 = vmatmul.bf16.gmra.mxu0 %v1422
        %v2812 = vpop.f32.mrf.mxu0
        %v2813 = vadd.f32 %v2724, %v2812
        %v2814 = vpop.f32.mrf.mxu0
        %v2815 = vadd.f32 %v2726, %v2814
        %2816 = vmatmul.bf16.gmra.mxu0 %v1423
        %v2817 = vpop.f32.mrf.mxu0
        %v2818 = vadd.f32 %v2729, %v2817
        %v2819 = vpop.f32.mrf.mxu0
        %v2820 = vadd.f32 %v2731, %v2819
        %2821 = vmatmul.bf16.gmra.mxu0 %v1424
        %v2822 = vpop.f32.mrf.mxu0
        %v2823 = vadd.f32 %v2734, %v2822
        %v2824 = vpop.f32.mrf.mxu0
        %v2825 = vadd.f32 %v2736, %v2824
        %2826 = vmatmul.bf16.gmra.mxu0 %v1425
        %v2827 = vpop.f32.mrf.mxu0
        %v2828 = vadd.f32 %v2739, %v2827
        %v2829 = vpop.f32.mrf.mxu0
        %v2830 = vadd.f32 %v2741, %v2829
        %2831 = vmatmul.bf16.gmra.mxu0 %v1426
        %v2832 = vpop.f32.mrf.mxu0
        %v2833 = vadd.f32 %v2744, %v2832
        %v2834 = vpop.f32.mrf.mxu0
        %v2835 = vadd.f32 %v2746, %v2834
        %2836 = vmatmul.bf16.gmra.mxu0 %v1427
        %v2837 = vpop.f32.mrf.mxu0
        %v2838 = vadd.f32 %v2749, %v2837
        %v2839 = vpop.f32.mrf.mxu0
        %v2840 = vadd.f32 %v2751, %v2839
        %2841 = vmatmul.bf16.gmra.mxu0 %v1428
        %v2842 = vpop.f32.mrf.mxu0
        %v2843 = vadd.f32 %v2754, %v2842
        %v2844 = vpop.f32.mrf.mxu0
        %v2845 = vadd.f32 %v2756, %v2844
        %2846 = vmatmul.bf16.gmra.mxu0 %v1429
        %v2847 = vpop.f32.mrf.mxu0
        %v2848 = vadd.f32 %v2759, %v2847
        %v2849 = vpop.f32.mrf.mxu0
        %v2850 = vadd.f32 %v2761, %v2849
        %2851 = vmatmul.bf16.gmra.mxu0 %v1430
        %v2852 = vpop.f32.mrf.mxu0
        %v2853 = vadd.f32 %v2764, %v2852
        %v2854 = vpop.f32.mrf.mxu0
        %v2855 = vadd.f32 %v2766, %v2854
        %2856 = vmatmul.bf16.gmra.mxu0 %v1553
        %v2857 = vpop.f32.mrf.mxu0
        %v2858 = vadd.f32 %v2769, %v2857
        %v2859 = vpop.f32.mrf.mxu0
        %v2860 = vadd.f32 %v2771, %v2859
        %2861 = vmatmul.bf16.gmra.mxu0 %v1571
        %v2862 = vpop.f32.mrf.mxu0
        %v2863 = vadd.f32 %v2774, %v2862
        %v2864 = vpop.f32.mrf.mxu0
        %v2865 = vadd.f32 %v2776, %v2864
        %2866 = vdwg.mxu0
        %2867 = vmatpush.bf16.msra.mxu0 %v2082
        %2868 = vmatpush.bf16.msra.mxu0 %v2081
        %2869 = vmatpush.bf16.msra.mxu0 %v2080
        %2870 = vmatpush.bf16.msra.mxu0 %v2079
        %2871 = vmatpush.bf16.msra.mxu0 %v2078
        %2872 = vmatpush.bf16.msra.mxu0 %v2077
        %2873 = vmatpush.bf16.msra.mxu0 %v2076
        %2874 = vmatpush.bf16.msra.mxu0 %v2075
        %2875 = vmatmul.bf16.gmra.mxu0 %v1513
        %v2876 = vpop.f32.mrf.mxu0
        %v2877 = vadd.f32 %v2788, %v2876
        %v2878 = vpop.f32.mrf.mxu0
        %v2879 = vadd.f32 %v2790, %v2878
        %2880 = vmatmul.bf16.gmra.mxu0 %v1514
        %v2881 = vpop.f32.mrf.mxu0
        %v2882 = vadd.f32 %v2793, %v2881
        %v2883 = vpop.f32.mrf.mxu0
        %v2884 = vadd.f32 %v2795, %v2883
        %2885 = vmatmul.bf16.gmra.mxu0 %v1515
        %v2886 = vpop.f32.mrf.mxu0
        %v2887 = vadd.f32 %v2798, %v2886
        %v2888 = vpop.f32.mrf.mxu0
        %v2889 = vadd.f32 %v2800, %v2888
        %2890 = vmatmul.bf16.gmra.mxu0 %v1516
        %v2891 = vpop.f32.mrf.mxu0
        %v2892 = vadd.f32 %v2803, %v2891
        %v2893 = vpop.f32.mrf.mxu0
        %v2894 = vadd.f32 %v2805, %v2893
        %2895 = vmatmul.bf16.gmra.mxu0 %v1517
        %v2896 = vpop.f32.mrf.mxu0
        %v2897 = vadd.f32 %v2808, %v2896
        %v2898 = vpop.f32.mrf.mxu0
        %v2899 = vadd.f32 %v2810, %v2898
        %2900 = vmatmul.bf16.gmra.mxu0 %v1518
        %v2901 = vpop.f32.mrf.mxu0
        %v2902 = vadd.f32 %v2813, %v2901
        %v2903 = vpop.f32.mrf.mxu0
        %v2904 = vadd.f32 %v2815, %v2903
        %2905 = vmatmul.bf16.gmra.mxu0 %v1519
        %v2906 = vpop.f32.mrf.mxu0
        %v2907 = vadd.f32 %v2818, %v2906
        %v2908 = vpop.f32.mrf.mxu0
        %v2909 = vadd.f32 %v2820, %v2908
        %2910 = vmatmul.bf16.gmra.mxu0 %v1520
        %v2911 = vpop.f32.mrf.mxu0
        %v2912 = vadd.f32 %v2823, %v2911
        %v2913 = vpop.f32.mrf.mxu0
        %v2914 = vadd.f32 %v2825, %v2913
        %2915 = vmatmul.bf16.gmra.mxu0 %v1521
        %v2916 = vpop.f32.mrf.mxu0
        %v2917 = vadd.f32 %v2828, %v2916
        %v2918 = vpop.f32.mrf.mxu0
        %v2919 = vadd.f32 %v2830, %v2918
        %2920 = vmatmul.bf16.gmra.mxu0 %v1522
        %v2921 = vpop.f32.mrf.mxu0
        %v2922 = vadd.f32 %v2833, %v2921
        %v2923 = vpop.f32.mrf.mxu0
        %v2924 = vadd.f32 %v2835, %v2923
        %2925 = vmatmul.bf16.gmra.mxu0 %v1523
        %v2926 = vpop.f32.mrf.mxu0
        %v2927 = vadd.f32 %v2838, %v2926
        %v2928 = vpop.f32.mrf.mxu0
        %v2929 = vadd.f32 %v2840, %v2928
        %2930 = vmatmul.bf16.gmra.mxu0 %v1524
        %v2931 = vpop.f32.mrf.mxu0
        %v2932 = vadd.f32 %v2843, %v2931
        %v2933 = vpop.f32.mrf.mxu0
        %v2934 = vadd.f32 %v2845, %v2933
        %2935 = vmatmul.bf16.gmra.mxu0 %v1525
        %v2936 = vpop.f32.mrf.mxu0
        %v2937 = vadd.f32 %v2848, %v2936
        %v2938 = vpop.f32.mrf.mxu0
        %v2939 = vadd.f32 %v2850, %v2938
        %2940 = vmatmul.bf16.gmra.mxu0 %v1526
        %v2941 = vpop.f32.mrf.mxu0
        %v2942 = vadd.f32 %v2853, %v2941
        %v2943 = vpop.f32.mrf.mxu0
        %v2944 = vadd.f32 %v2855, %v2943
        %2945 = vmatmul.bf16.gmra.mxu0 %v1559
        %v2946 = vpop.f32.mrf.mxu0
        %v2947 = vadd.f32 %v2858, %v2946
        %v2948 = vpop.f32.mrf.mxu0
        %v2949 = vadd.f32 %v2860, %v2948
        %2950 = vmatmul.bf16.gmra.mxu0 %v1577
        %v2951 = vpop.f32.mrf.mxu0
        %v2952 = vadd.f32 %v2863, %v2951
        %v2953 = vpop.f32.mrf.mxu0
        %v2954 = vadd.f32 %v2865, %v2953
        %2955 = vdwg.mxu0
        %v2956 = vld [vmem:[%s5] sm:$0x1]
        %v2958 = vperm.slane %v2956, 0
        %v2960 = vmul.f32 %v2877, %v2958
        %v2961 = vmul.f32 %v2879, %v2958
        %v2962 = vmul.f32 %v2882, %v2958
        %v2963 = vmul.f32 %v2884, %v2958
        %v2964 = vmul.f32 %v2887, %v2958
        %v2965 = vmul.f32 %v2889, %v2958
        %v2966 = vmul.f32 %v2892, %v2958
        %v2967 = vmul.f32 %v2894, %v2958
        %v2968 = vmul.f32 %v2897, %v2958
        %v2969 = vmul.f32 %v2899, %v2958
        %v2970 = vmul.f32 %v2902, %v2958
        %v2971 = vmul.f32 %v2904, %v2958
        %v2972 = vmul.f32 %v2907, %v2958
        %v2973 = vmul.f32 %v2909, %v2958
        %v2974 = vmul.f32 %v2912, %v2958
        %v2975 = vmul.f32 %v2914, %v2958
        %v2976 = vmul.f32 %v2917, %v2958
        %v2977 = vmul.f32 %v2919, %v2958
        %v2978 = vmul.f32 %v2922, %v2958
        %v2979 = vmul.f32 %v2924, %v2958
        %v2980 = vmul.f32 %v2927, %v2958
        %v2981 = vmul.f32 %v2929, %v2958
        %v2982 = vmul.f32 %v2932, %v2958
        %v2983 = vmul.f32 %v2934, %v2958
        %v2984 = vmul.f32 %v2937, %v2958
        %v2985 = vmul.f32 %v2939, %v2958
        %v2986 = vmul.f32 %v2942, %v2958
        %v2987 = vmul.f32 %v2944, %v2958
        %v2988 = vmul.f32 %v2947, %v2958
        %v2989 = vmul.f32 %v2949, %v2958
        %v2990 = vmul.f32 %v2952, %v2958
        %v2991 = vmul.f32 %v2954, %v2958
        %v2992 = vld [vmem:[%s6] sm:$0x1]
        %v2994 = vperm.slane %v2992, 0
        %v2996 = vadd.f32 %v2960, %v2994
        %v2997 = vadd.f32 %v2961, %v2994
        %v2998 = vadd.f32 %v2962, %v2994
        %v2999 = vadd.f32 %v2963, %v2994
        %v3000 = vadd.f32 %v2964, %v2994
        %v3001 = vadd.f32 %v2965, %v2994
        %v3002 = vadd.f32 %v2966, %v2994
        %v3003 = vadd.f32 %v2967, %v2994
        %v3004 = vadd.f32 %v2968, %v2994
        %v3005 = vadd.f32 %v2969, %v2994
        %v3006 = vadd.f32 %v2970, %v2994
        %v3007 = vadd.f32 %v2971, %v2994
        %v3008 = vadd.f32 %v2972, %v2994
        %v3009 = vadd.f32 %v2973, %v2994
        %v3010 = vadd.f32 %v2974, %v2994
        %v3011 = vadd.f32 %v2975, %v2994
        %v3012 = vadd.f32 %v2976, %v2994
        %v3013 = vadd.f32 %v2977, %v2994
        %v3014 = vadd.f32 %v2978, %v2994
        %v3015 = vadd.f32 %v2979, %v2994
        %v3016 = vadd.f32 %v2980, %v2994
        %v3017 = vadd.f32 %v2981, %v2994
        %v3018 = vadd.f32 %v2982, %v2994
        %v3019 = vadd.f32 %v2983, %v2994
        %v3020 = vadd.f32 %v2984, %v2994
        %v3021 = vadd.f32 %v2985, %v2994
        %v3022 = vadd.f32 %v2986, %v2994
        %v3023 = vadd.f32 %v2987, %v2994
        %v3024 = vadd.f32 %v2988, %v2994
        %v3025 = vadd.f32 %v2989, %v2994
        %v3026 = vadd.f32 %v2990, %v2994
        %v3027 = vadd.f32 %v2991, %v2994
        %v3028 = vmax.f32 %v2996, 0.0
        %v3029 = vmax.f32 %v2997, 0.0
        %v3030 = vmax.f32 %v2998, 0.0
        %v3031 = vmax.f32 %v2999, 0.0
        %v3032 = vmax.f32 %v3000, 0.0
        %v3033 = vmax.f32 %v3001, 0.0
        %v3034 = vmax.f32 %v3002, 0.0
        %v3035 = vmax.f32 %v3003, 0.0
        %v3036 = vmax.f32 %v3004, 0.0
        %v3037 = vmax.f32 %v3005, 0.0
        %v3038 = vmax.f32 %v3006, 0.0
        %v3039 = vmax.f32 %v3007, 0.0
        %v3040 = vmax.f32 %v3008, 0.0
        %v3041 = vmax.f32 %v3009, 0.0
        %v3042 = vmax.f32 %v3010, 0.0
        %v3043 = vmax.f32 %v3011, 0.0
        %v3044 = vmax.f32 %v3012, 0.0
        %v3045 = vmax.f32 %v3013, 0.0
        %v3046 = vmax.f32 %v3014, 0.0
        %v3047 = vmax.f32 %v3015, 0.0
        %v3048 = vmax.f32 %v3016, 0.0
        %v3049 = vmax.f32 %v3017, 0.0
        %v3050 = vmax.f32 %v3018, 0.0
        %v3051 = vmax.f32 %v3019, 0.0
        %v3052 = vmax.f32 %v3020, 0.0
        %v3053 = vmax.f32 %v3021, 0.0
        %v3054 = vmax.f32 %v3022, 0.0
        %v3055 = vmax.f32 %v3023, 0.0
        %v3056 = vmax.f32 %v3024, 0.0
        %v3057 = vmax.f32 %v3025, 0.0
        %v3058 = vmax.f32 %v3026, 0.0
        %v3059 = vmax.f32 %v3027, 0.0
        %v3060 = vpack.c.bf16 %v3029, %v3028
        %v3061 = vpack.c.bf16 %v3031, %v3030
        %v3062 = vpack.c.bf16 %v3033, %v3032
        %v3063 = vpack.c.bf16 %v3035, %v3034
        %v3064 = vpack.c.bf16 %v3037, %v3036
        %v3065 = vpack.c.bf16 %v3039, %v3038
        %v3066 = vpack.c.bf16 %v3041, %v3040
        %v3067 = vpack.c.bf16 %v3043, %v3042
        %v3068 = vpack.c.bf16 %v3045, %v3044
        %v3069 = vpack.c.bf16 %v3047, %v3046
        %v3070 = vpack.c.bf16 %v3049, %v3048
        %v3071 = vpack.c.bf16 %v3051, %v3050
        %v3072 = vpack.c.bf16 %v3053, %v3052
        %v3073 = vpack.c.bf16 %v3055, %v3054
        %v3074 = vpack.c.bf16 %v3057, %v3056
        %v3075 = vpack.c.bf16 %v3059, %v3058
        %v3076 = vld [vmem:[#allocation8] sm:$0xf]
        %v3077 = vld [vmem:[#allocation8 + $0x4] sm:$0xf]
        %v3078 = vld [vmem:[#allocation8 + $0x8] sm:$0xf]
        %v3079 = vld [vmem:[#allocation8 + $0xc] sm:$0xf]
        %v3080 = vld [vmem:[#allocation8 + $0x10] sm:$0xf]
        %v3081 = vld [vmem:[#allocation8 + $0x14] sm:$0xf]
        %v3082 = vld [vmem:[#allocation8 + $0x18] sm:$0xf]
        %v3083 = vld [vmem:[#allocation8 + $0x1c] sm:$0xf]
        %v3084 = vld [vmem:[#allocation8 + $0x20] sm:$0xf]
        %v3085 = vld [vmem:[#allocation8 + $0x24] sm:$0xf]
        %v3086 = vld [vmem:[#allocation8 + $0x28] sm:$0xf]
        %v3087 = vld [vmem:[#allocation8 + $0x2c] sm:$0xf]
        %v3088 = vld [vmem:[#allocation8 + $0x30] sm:$0xf]
        %v3089 = vld [vmem:[#allocation8 + $0x34] sm:$0xf]
        %v3090 = vld [vmem:[#allocation8 + $0x38] sm:$0xf]
        %v3091 = vld [vmem:[#allocation8 + $0x3c] sm:$0xf]
        %v3108 = vunpack.c.l.b16 %v3076
        %v3109 = vunpack.c.l.b16 %v3077
        %v3110 = vunpack.c.l.b16 %v3078
        %v3111 = vunpack.c.l.b16 %v3079
        %v3112 = vunpack.c.l.b16 %v3080
        %v3113 = vunpack.c.l.b16 %v3081
        %v3114 = vunpack.c.l.b16 %v3082
        %v3115 = vunpack.c.l.b16 %v3083
        %v3116 = vunpack.c.l.b16 %v3084
        %v3117 = vunpack.c.l.b16 %v3085
        %v3118 = vunpack.c.l.b16 %v3086
        %v3119 = vunpack.c.l.b16 %v3087
        %v3120 = vunpack.c.l.b16 %v3088
        %v3121 = vunpack.c.l.b16 %v3089
        %v3122 = vunpack.c.l.b16 %v3090
        %v3123 = vunpack.c.l.b16 %v3091
        %v3124 = vpack.c.b16 %v3109, %v3108
        %v3125 = vpack.c.b16 %v3111, %v3110
        %v3126 = vpack.c.b16 %v3113, %v3112
        %v3127 = vpack.c.b16 %v3115, %v3114
        %v3128 = vpack.c.b16 %v3117, %v3116
        %v3129 = vpack.c.b16 %v3119, %v3118
        %v3130 = vpack.c.b16 %v3121, %v3120
        %v3131 = vpack.c.b16 %v3123, %v3122
        %3140 = vmatpush.bf16.msra.mxu0 %v3131
        %3141 = vmatpush.bf16.msra.mxu0 %v3130
        %3142 = vmatpush.bf16.msra.mxu0 %v3129
        %3143 = vmatpush.bf16.msra.mxu0 %v3128
        %3144 = vmatpush.bf16.msra.mxu0 %v3127
        %3145 = vmatpush.bf16.msra.mxu0 %v3126
        %3146 = vmatpush.bf16.msra.mxu0 %v3125
        %3147 = vmatpush.bf16.msra.mxu0 %v3124
        %3148 = vmatmul.bf16.gmra.mxu0 %v3060
        %v3149 = vpop.f32.mrf.mxu0
        %v3150 = vadd.f32 0.0, %v3149
        %v3151 = vpop.f32.mrf.mxu0
        %v3152 = vadd.f32 0.0, %v3151
        %3153 = vmatmul.bf16.gmra.mxu0 %v3061
        %v3154 = vpop.f32.mrf.mxu0
        %v3155 = vadd.f32 0.0, %v3154
        %v3156 = vpop.f32.mrf.mxu0
        %v3157 = vadd.f32 0.0, %v3156
        %3158 = vmatmul.bf16.gmra.mxu0 %v3062
        %v3159 = vpop.f32.mrf.mxu0
        %v3160 = vadd.f32 0.0, %v3159
        %v3161 = vpop.f32.mrf.mxu0
        %v3162 = vadd.f32 0.0, %v3161
        %3163 = vmatmul.bf16.gmra.mxu0 %v3063
        %v3164 = vpop.f32.mrf.mxu0
        %v3165 = vadd.f32 0.0, %v3164
        %v3166 = vpop.f32.mrf.mxu0
        %v3167 = vadd.f32 0.0, %v3166
        %3168 = vmatmul.bf16.gmra.mxu0 %v3064
        %v3169 = vpop.f32.mrf.mxu0
        %v3170 = vadd.f32 0.0, %v3169
        %v3171 = vpop.f32.mrf.mxu0
        %v3172 = vadd.f32 0.0, %v3171
        %3173 = vmatmul.bf16.gmra.mxu0 %v3065
        %v3174 = vpop.f32.mrf.mxu0
        %v3175 = vadd.f32 0.0, %v3174
        %v3176 = vpop.f32.mrf.mxu0
        %v3177 = vadd.f32 0.0, %v3176
        %3178 = vmatmul.bf16.gmra.mxu0 %v3066
        %v3179 = vpop.f32.mrf.mxu0
        %v3180 = vadd.f32 0.0, %v3179
        %v3181 = vpop.f32.mrf.mxu0
        %v3182 = vadd.f32 0.0, %v3181
        %3183 = vmatmul.bf16.gmra.mxu0 %v3067
        %v3184 = vpop.f32.mrf.mxu0
        %v3185 = vadd.f32 0.0, %v3184
        %v3186 = vpop.f32.mrf.mxu0
        %v3187 = vadd.f32 0.0, %v3186
        %3188 = vmatmul.bf16.gmra.mxu0 %v3068
        %v3189 = vpop.f32.mrf.mxu0
        %v3190 = vadd.f32 0.0, %v3189
        %v3191 = vpop.f32.mrf.mxu0
        %v3192 = vadd.f32 0.0, %v3191
        %3193 = vmatmul.bf16.gmra.mxu0 %v3069
        %v3194 = vpop.f32.mrf.mxu0
        %v3195 = vadd.f32 0.0, %v3194
        %v3196 = vpop.f32.mrf.mxu0
        %v3197 = vadd.f32 0.0, %v3196
        %3198 = vmatmul.bf16.gmra.mxu0 %v3070
        %v3199 = vpop.f32.mrf.mxu0
        %v3200 = vadd.f32 0.0, %v3199
        %v3201 = vpop.f32.mrf.mxu0
        %v3202 = vadd.f32 0.0, %v3201
        %3203 = vmatmul.bf16.gmra.mxu0 %v3071
        %v3204 = vpop.f32.mrf.mxu0
        %v3205 = vadd.f32 0.0, %v3204
        %v3206 = vpop.f32.mrf.mxu0
        %v3207 = vadd.f32 0.0, %v3206
        %3208 = vmatmul.bf16.gmra.mxu0 %v3072
        %v3209 = vpop.f32.mrf.mxu0
        %v3210 = vadd.f32 0.0, %v3209
        %v3211 = vpop.f32.mrf.mxu0
        %v3212 = vadd.f32 0.0, %v3211
        %3213 = vmatmul.bf16.gmra.mxu0 %v3073
        %v3214 = vpop.f32.mrf.mxu0
        %v3215 = vadd.f32 0.0, %v3214
        %v3216 = vpop.f32.mrf.mxu0
        %v3217 = vadd.f32 0.0, %v3216
        %3218 = vmatmul.bf16.gmra.mxu0 %v3074
        %v3219 = vpop.f32.mrf.mxu0
        %v3220 = vadd.f32 0.0, %v3219
        %v3221 = vpop.f32.mrf.mxu0
        %v3222 = vadd.f32 0.0, %v3221
        %3223 = vmatmul.bf16.gmra.mxu0 %v3075
        %v3224 = vpop.f32.mrf.mxu0
        %v3225 = vadd.f32 0.0, %v3224
        %v3226 = vpop.f32.mrf.mxu0
        %v3227 = vadd.f32 0.0, %v3226
        %3228 = vdwg.mxu0
        %v3229 = vld [vmem:[%s8] sm:$0x1]
        %v3231 = vperm.slane %v3229, 0
        %v3233 = vmul.f32 %v3150, %v3231
        %v3234 = vmul.f32 %v3152, %v3231
        %v3235 = vmul.f32 %v3155, %v3231
        %v3236 = vmul.f32 %v3157, %v3231
        %v3237 = vmul.f32 %v3160, %v3231
        %v3238 = vmul.f32 %v3162, %v3231
        %v3239 = vmul.f32 %v3165, %v3231
        %v3240 = vmul.f32 %v3167, %v3231
        %v3241 = vmul.f32 %v3170, %v3231
        %v3242 = vmul.f32 %v3172, %v3231
        %v3243 = vmul.f32 %v3175, %v3231
        %v3244 = vmul.f32 %v3177, %v3231
        %v3245 = vmul.f32 %v3180, %v3231
        %v3246 = vmul.f32 %v3182, %v3231
        %v3247 = vmul.f32 %v3185, %v3231
        %v3248 = vmul.f32 %v3187, %v3231
        %v3249 = vmul.f32 %v3190, %v3231
        %v3250 = vmul.f32 %v3192, %v3231
        %v3251 = vmul.f32 %v3195, %v3231
        %v3252 = vmul.f32 %v3197, %v3231
        %v3253 = vmul.f32 %v3200, %v3231
        %v3254 = vmul.f32 %v3202, %v3231
        %v3255 = vmul.f32 %v3205, %v3231
        %v3256 = vmul.f32 %v3207, %v3231
        %v3257 = vmul.f32 %v3210, %v3231
        %v3258 = vmul.f32 %v3212, %v3231
        %v3259 = vmul.f32 %v3215, %v3231
        %v3260 = vmul.f32 %v3217, %v3231
        %v3261 = vmul.f32 %v3220, %v3231
        %v3262 = vmul.f32 %v3222, %v3231
        %v3263 = vmul.f32 %v3225, %v3231
        %v3264 = vmul.f32 %v3227, %v3231
        %v3265 = vld [vmem:[%s9] sm:$0x1]
        %v3267 = vperm.slane %v3265, 0
        %v3269 = vadd.f32 %v3233, %v3267
        %v3270 = vadd.f32 %v3234, %v3267
        %v3271 = vadd.f32 %v3235, %v3267
        %v3272 = vadd.f32 %v3236, %v3267
        %v3273 = vadd.f32 %v3237, %v3267
        %v3274 = vadd.f32 %v3238, %v3267
        %v3275 = vadd.f32 %v3239, %v3267
        %v3276 = vadd.f32 %v3240, %v3267
        %v3277 = vadd.f32 %v3241, %v3267
        %v3278 = vadd.f32 %v3242, %v3267
        %v3279 = vadd.f32 %v3243, %v3267
        %v3280 = vadd.f32 %v3244, %v3267
        %v3281 = vadd.f32 %v3245, %v3267
        %v3282 = vadd.f32 %v3246, %v3267
        %v3283 = vadd.f32 %v3247, %v3267
        %v3284 = vadd.f32 %v3248, %v3267
        %v3285 = vadd.f32 %v3249, %v3267
        %v3286 = vadd.f32 %v3250, %v3267
        %v3287 = vadd.f32 %v3251, %v3267
        %v3288 = vadd.f32 %v3252, %v3267
        %v3289 = vadd.f32 %v3253, %v3267
        %v3290 = vadd.f32 %v3254, %v3267
        %v3291 = vadd.f32 %v3255, %v3267
        %v3292 = vadd.f32 %v3256, %v3267
        %v3293 = vadd.f32 %v3257, %v3267
        %v3294 = vadd.f32 %v3258, %v3267
        %v3295 = vadd.f32 %v3259, %v3267
        %v3296 = vadd.f32 %v3260, %v3267
        %v3297 = vadd.f32 %v3261, %v3267
        %v3298 = vadd.f32 %v3262, %v3267
        %v3299 = vadd.f32 %v3263, %v3267
        %v3300 = vadd.f32 %v3264, %v3267
        %v3301 = vunpack.c.l.bf16 %v572
        %v3302 = vunpack.c.l.bf16 %v573
        %v3303 = vunpack.c.l.bf16 %v574
        %v3304 = vunpack.c.l.bf16 %v575
        %v3305 = vunpack.c.l.bf16 %v576
        %v3306 = vunpack.c.l.bf16 %v577
        %v3307 = vunpack.c.l.bf16 %v578
        %v3308 = vunpack.c.l.bf16 %v579
        %v3309 = vunpack.c.l.bf16 %v580
        %v3310 = vunpack.c.l.bf16 %v581
        %v3311 = vunpack.c.l.bf16 %v582
        %v3312 = vunpack.c.l.bf16 %v583
        %v3313 = vunpack.c.l.bf16 %v584
        %v3314 = vunpack.c.l.bf16 %v585
        %v3315 = vunpack.c.l.bf16 %v586
        %v3316 = vunpack.c.l.bf16 %v587
        %v3317 = vunpack.c.l.bf16 %v588
        %v3318 = vunpack.c.l.bf16 %v589
        %v3319 = vunpack.c.l.bf16 %v590
        %v3320 = vunpack.c.l.bf16 %v591
        %v3321 = vunpack.c.l.bf16 %v592
        %v3322 = vunpack.c.l.bf16 %v593
        %v3323 = vunpack.c.l.bf16 %v594
        %v3324 = vunpack.c.l.bf16 %v595
        %v3325 = vunpack.c.l.bf16 %v596
        %v3326 = vunpack.c.l.bf16 %v597
        %v3327 = vunpack.c.l.bf16 %v598
        %v3328 = vunpack.c.l.bf16 %v599
        %v3329 = vunpack.c.l.bf16 %v600
        %v3330 = vunpack.c.l.bf16 %v601
        %v3331 = vunpack.c.l.bf16 %v602
        %v3332 = vunpack.c.l.bf16 %v603
        %v3333 = vadd.f32 %v3269, %v3301
        %v3334 = vadd.f32 %v3270, %v3302
        %v3335 = vadd.f32 %v3271, %v3303
        %v3336 = vadd.f32 %v3272, %v3304
        %v3337 = vadd.f32 %v3273, %v3305
        %v3338 = vadd.f32 %v3274, %v3306
        %v3339 = vadd.f32 %v3275, %v3307
        %v3340 = vadd.f32 %v3276, %v3308
        %v3341 = vadd.f32 %v3277, %v3309
        %v3342 = vadd.f32 %v3278, %v3310
        %v3343 = vadd.f32 %v3279, %v3311
        %v3344 = vadd.f32 %v3280, %v3312
        %v3345 = vadd.f32 %v3281, %v3313
        %v3346 = vadd.f32 %v3282, %v3314
        %v3347 = vadd.f32 %v3283, %v3315
        %v3348 = vadd.f32 %v3284, %v3316
        %v3349 = vadd.f32 %v3285, %v3317
        %v3350 = vadd.f32 %v3286, %v3318
        %v3351 = vadd.f32 %v3287, %v3319
        %v3352 = vadd.f32 %v3288, %v3320
        %v3353 = vadd.f32 %v3289, %v3321
        %v3354 = vadd.f32 %v3290, %v3322
        %v3355 = vadd.f32 %v3291, %v3323
        %v3356 = vadd.f32 %v3292, %v3324
        %v3357 = vadd.f32 %v3293, %v3325
        %v3358 = vadd.f32 %v3294, %v3326
        %v3359 = vadd.f32 %v3295, %v3327
        %v3360 = vadd.f32 %v3296, %v3328
        %v3361 = vadd.f32 %v3297, %v3329
        %v3362 = vadd.f32 %v3298, %v3330
        %v3363 = vadd.f32 %v3299, %v3331
        %v3364 = vadd.f32 %v3300, %v3332
        %v3365 = vmax.f32 %v3333, 0.0
        %v3366 = vmax.f32 %v3334, 0.0
        %v3367 = vmax.f32 %v3335, 0.0
        %v3368 = vmax.f32 %v3336, 0.0
        %v3369 = vmax.f32 %v3337, 0.0
        %v3370 = vmax.f32 %v3338, 0.0
        %v3371 = vmax.f32 %v3339, 0.0
        %v3372 = vmax.f32 %v3340, 0.0
        %v3373 = vmax.f32 %v3341, 0.0
        %v3374 = vmax.f32 %v3342, 0.0
        %v3375 = vmax.f32 %v3343, 0.0
        %v3376 = vmax.f32 %v3344, 0.0
        %v3377 = vmax.f32 %v3345, 0.0
        %v3378 = vmax.f32 %v3346, 0.0
        %v3379 = vmax.f32 %v3347, 0.0
        %v3380 = vmax.f32 %v3348, 0.0
        %v3381 = vmax.f32 %v3349, 0.0
        %v3382 = vmax.f32 %v3350, 0.0
        %v3383 = vmax.f32 %v3351, 0.0
        %v3384 = vmax.f32 %v3352, 0.0
        %v3385 = vmax.f32 %v3353, 0.0
        %v3386 = vmax.f32 %v3354, 0.0
        %v3387 = vmax.f32 %v3355, 0.0
        %v3388 = vmax.f32 %v3356, 0.0
        %v3389 = vmax.f32 %v3357, 0.0
        %v3390 = vmax.f32 %v3358, 0.0
        %v3391 = vmax.f32 %v3359, 0.0
        %v3392 = vmax.f32 %v3360, 0.0
        %v3393 = vmax.f32 %v3361, 0.0
        %v3394 = vmax.f32 %v3362, 0.0
        %v3395 = vmax.f32 %v3363, 0.0
        %v3396 = vmax.f32 %v3364, 0.0
        %v3397 = vpack.c.bf16 %v3365, %v3365
        %v3398 = vpack.c.bf16 %v3366, %v3366
        %v3399 = vpack.c.bf16 %v3367, %v3367
        %v3400 = vpack.c.bf16 %v3368, %v3368
        %v3401 = vpack.c.bf16 %v3369, %v3369
        %v3402 = vpack.c.bf16 %v3370, %v3370
        %v3403 = vpack.c.bf16 %v3371, %v3371
        %v3404 = vpack.c.bf16 %v3372, %v3372
        %v3405 = vpack.c.bf16 %v3373, %v3373
        %v3406 = vpack.c.bf16 %v3374, %v3374
        %v3407 = vpack.c.bf16 %v3375, %v3375
        %v3408 = vpack.c.bf16 %v3376, %v3376
        %v3409 = vpack.c.bf16 %v3377, %v3377
        %v3410 = vpack.c.bf16 %v3378, %v3378
        %v3411 = vpack.c.bf16 %v3379, %v3379
        %v3412 = vpack.c.bf16 %v3380, %v3380
        %v3413 = vpack.c.bf16 %v3381, %v3381
        %v3414 = vpack.c.bf16 %v3382, %v3382
        %v3415 = vpack.c.bf16 %v3383, %v3383
        %v3416 = vpack.c.bf16 %v3384, %v3384
        %v3417 = vpack.c.bf16 %v3385, %v3385
        %v3418 = vpack.c.bf16 %v3386, %v3386
        %v3419 = vpack.c.bf16 %v3387, %v3387
        %v3420 = vpack.c.bf16 %v3388, %v3388
        %v3421 = vpack.c.bf16 %v3389, %v3389
        %v3422 = vpack.c.bf16 %v3390, %v3390
        %v3423 = vpack.c.bf16 %v3391, %v3391
        %v3424 = vpack.c.bf16 %v3392, %v3392
        %v3425 = vpack.c.bf16 %v3393, %v3393
        %v3426 = vpack.c.bf16 %v3394, %v3394
        %v3427 = vpack.c.bf16 %v3395, %v3395
        %v3428 = vpack.c.bf16 %v3396, %v3396
        %3429 = vst [vmem:[%s443] sm:$0xf] %v3397
        %3430 = vst [vmem:[%s443 + $0x4] sm:$0xf] %v3398
        %3431 = vst [vmem:[%s443 + $0x8] sm:$0xf] %v3399
        %3432 = vst [vmem:[%s443 + $0xc] sm:$0xf] %v3400
        %3433 = vst [vmem:[%s443 + $0x10] sm:$0xf] %v3401
        %3434 = vst [vmem:[%s443 + $0x14] sm:$0xf] %v3402
        %3435 = vst [vmem:[%s443 + $0x18] sm:$0xf] %v3403
        %3436 = vst [vmem:[%s443 + $0x1c] sm:$0xf] %v3404
        %3437 = vst [vmem:[%s443 + $0x20] sm:$0xf] %v3405
        %3438 = vst [vmem:[%s443 + $0x24] sm:$0xf] %v3406
        %3439 = vst [vmem:[%s443 + $0x28] sm:$0xf] %v3407
        %3440 = vst [vmem:[%s443 + $0x2c] sm:$0xf] %v3408
        %3441 = vst [vmem:[%s443 + $0x30] sm:$0xf] %v3409
        %3442 = vst [vmem:[%s443 + $0x34] sm:$0xf] %v3410
        %3443 = vst [vmem:[%s443 + $0x38] sm:$0xf] %v3411
        %3444 = vst [vmem:[%s443 + $0x3c] sm:$0xf] %v3412
        %3445 = vst [vmem:[%s443 + $0x40] sm:$0xf] %v3413
        %3446 = vst [vmem:[%s443 + $0x44] sm:$0xf] %v3414
        %3447 = vst [vmem:[%s443 + $0x48] sm:$0xf] %v3415
        %3448 = vst [vmem:[%s443 + $0x4c] sm:$0xf] %v3416
        %3449 = vst [vmem:[%s443 + $0x50] sm:$0xf] %v3417
        %3450 = vst [vmem:[%s443 + $0x54] sm:$0xf] %v3418
        %3451 = vst [vmem:[%s443 + $0x58] sm:$0xf] %v3419
        %3452 = vst [vmem:[%s443 + $0x5c] sm:$0xf] %v3420
        %3453 = vst [vmem:[%s443 + $0x60] sm:$0xf] %v3421
        %3454 = vst [vmem:[%s443 + $0x64] sm:$0xf] %v3422
        %3455 = vst [vmem:[%s443 + $0x68] sm:$0xf] %v3423
        %3456 = vst [vmem:[%s443 + $0x6c] sm:$0xf] %v3424
        %3457 = vst [vmem:[%s443 + $0x70] sm:$0xf] %v3425
        %3458 = vst [vmem:[%s443 + $0x74] sm:$0xf] %v3426
        %3459 = vst [vmem:[%s443 + $0x78] sm:$0xf] %v3427
        %3460 = vst [vmem:[%s443 + $0x7c] sm:$0xf] %v3428
        %s3461 = sand.u32 %s266, 1
        %s3462 = scalar_lea.sflag [#allocation4], %s3461
        %s3463 = sand.u32 %s266, 1
        %s3464 = smul.addr %s3463, 128
        %s3465 = scalar_lea.vmem [#allocation10], %s3464
        // Predicated region
        $region77: #{tpu_custom_call.1} parent=59 // pred_check
          %p3466 = pneg %p276
        $region78: #{tpu_custom_call.1} parent=59 // pred_check_branch
          %3468 = sbr.rel (%p3466) target = $region80
        $region79: #{tpu_custom_call.1} parent=59 // pred_region
          %s3469 = smul.u32 16, %s34
          %3471 = vsyncadd %s3462, 0
          %s3472 = smul.addr %s3469, 2
          %s3473 = smul.addr %s33, 32
          %s3474 = sadd.s32 %s3472, %s3473
          %s3475 = smul.addr %s3474, 4
          %s3476 = scalar_lea.hbm %s10, %s3475
          %s3477 = sshll.u32 %s3465, 4
          %s3478 = int_to_ptr.vmem [resolvable:$true] %s3477
          %s3479 = sshll.u32 %s3476, 4
          %s3480 = int_to_ptr.hbm [resolvable:$true] %s3479
          %3485 = dma.vmem_to_hbm [thread:$0]  %s3478, 2048, %s3480, %s3462, 64, 64, 4
        $region80: #{tpu_custom_call.1} parent=59 // pred_fallthru
          _
      $region60: #{tpu_custom_call.1} parent=5 // pred_fallthru
        _
      %p3486 = scmp.le.s32.totalorder 2, %s24
      // Predicated region
      $region81: #{tpu_custom_call.1} parent=5 // pred_check
        %p3487 = pneg %p3486
      $region82: #{tpu_custom_call.1} parent=5 // pred_check_branch
        %3489 = sbr.rel (%p3487) target = $region84
      $region83: #{tpu_custom_call.1} parent=5 // pred_region
        %s3490 = ssub.s32 %s24, 2
        // Predicated region
        $region85: #{tpu_custom_call.1} parent=83 // pred_check
          %p3491 = pneg %p282
        $region86: #{tpu_custom_call.1} parent=83 // pred_check_branch
          %3493 = sbr.rel (%p3491) target = $region88
        $region87: #{tpu_custom_call.1} parent=83 // pred_region
          %s3494 = sand.u32 %s267, 1
          %s3495 = scalar_lea.sflag [#allocation4], %s3494
          %s3496 = sand.u32 %s267, 1
          %s3497 = smul.addr %s3496, 128
          %s3498 = scalar_lea.vmem [#allocation10], %s3497
          %3500 = dma.done %s3495, 2048
        $region88: #{tpu_custom_call.1} parent=83 // pred_fallthru
          _
      $region84: #{tpu_custom_call.1} parent=5 // pred_fallthru
        _
    $region6: #{tpu_custom_call.1} parent=1 // loop_footer
      %s28 = sadd.s32 1, %s24
    $region7: #{tpu_custom_call.1} parent=1 // loop_footer_branch
      %23 = sbr.rel target = $region3
    $region8: #{tpu_custom_call.1} parent=1 // loop_exit
      _
    %3501 = vsyncpa [#allocation3], 1
    %s3502 = scalar_lea.sflag [#allocation3], 1
    %3503 = vsyncpa %s3502, 1
    %3504 = vsyncpa [#allocation6], 1
    %3505 = vsyncpa [#allocation9], 1
    %3506 = vsyncpa [#allocation4], 1
    %s3507 = scalar_lea.sflag [#allocation4], 1
    %3508 = vsyncpa %s3507, 1

</llo_original>
